<compile_context>
chip_gen: v7x
topology: tpu7x:2x2x1
jax: 0.10.0
libtpu: 0.0.40
codegen_flags: <defaults>
</compile_context>

<pallas_src>
import jax
import jax.numpy as jnp
from jax.experimental import pallas as pl
from jax.experimental.pallas import tpu as pltpu

TOP_PAD = 128  # lane-dense padded logits width (real logits are columns [:, :2])


# ----------------------------------------------------------------------------------
# Pallas kernel
# ----------------------------------------------------------------------------------
def bilstm_mlp_kernel(xseq_ref, mask_ref, word_ref,
                      wih_ref, b_ref, whh_ref,
                      wpp_ref, wpw_ref, bproj_ref, wtop_ref, btop_ref,
                      out_ref, xg_ref):
    T = xseq_ref.shape[0]
    Bt = xseq_ref.shape[1]
    H2 = whh_ref.shape[0]            # 2 * H  (merged fwd|bwd state width)
    H6 = 3 * H2                      # sigmoid-gate region width: [i | f | o] both dirs
    bf16 = jnp.bfloat16

    # ---- hoisted input-to-hidden matmuls (independent of the recurrence) ----------
    # xseq row-block t is step-aligned [x_t | x_{T-1-t}] and wih is block-diagonal,
    # so xg[t] = combined fwd(t)/bwd(T-1-t) input pre-activations, gate layout
    # [i_f i_b | f_f f_b | o_f o_b | g_f g_b].  bf16 operands, f32 accumulation.
    wih = wih_ref[...]
    bias = b_ref[...]
    for t in range(T):
        xg_ref[t] = jnp.dot(xseq_ref[t], wih,
                            preferred_element_type=jnp.float32) + bias

    whh = whh_ref[...]               # (2H, 8H) bf16 block-diagonal

    hs = jnp.zeros((Bt, H2), jnp.float32)   # [h_fwd | h_bwd]
    cs = jnp.zeros((Bt, H2), jnp.float32)   # [c_fwd | c_bwd]

    # ---- merged fwd/bwd recurrence: ONE bf16 matmul per step, fully unrolled -------
    # Forward updates only while t < len (final state at t = len-1); backward runs
    # t = T-1 ... 0 with mask t < len, so it effectively starts at t = len-1 and its
    # final state is at t = 0 (packed-sequence semantics).
    for s in range(T):
        pre = jnp.dot(hs.astype(bf16), whh,
                      preferred_element_type=jnp.float32) + xg_ref[s]
        sig = jax.nn.sigmoid(pre[:, 0:H6])           # one EUP region: i|f|o, both dirs
        g = jnp.tanh(pre[:, H6:H6 + H2])             # one tanh region: g, both dirs
        i_g = sig[:, 0:H2]
        f_g = sig[:, H2:2 * H2]
        o_g = sig[:, 2 * H2:3 * H2]
        cs_new = f_g * cs + i_g * g
        hs_new = o_g * jnp.tanh(cs_new)
        m = mask_ref[s] > 0.5                        # (Bt, 2H): [fwd valid | bwd valid]
        hs = jnp.where(m, hs_new, hs)
        cs = jnp.where(m, cs_new, cs)

    # ---- MLP head: bf16 MXU operands, f32 accumulation ------------------------------
    # [h_fwd | h_bwd | word] @ Wp == hs @ Wp[:2H] + word @ Wp[2H:]
    hidden = (jnp.dot(hs.astype(bf16), wpp_ref[...],
                      preferred_element_type=jnp.float32)
              + jnp.dot(word_ref[...], wpw_ref[...],
                        preferred_element_type=jnp.float32)
              + bproj_ref[...])
    hidden = jnp.maximum(hidden, 0.0)                # F.relu
    # lane-dense (Bt, 128) store; real logits live in columns [:, :2].
    out_ref[...] = (jnp.dot(hidden.astype(bf16), wtop_ref[...],
                            preferred_element_type=jnp.float32)
                    + btop_ref[...])


# ----------------------------------------------------------------------------------
# One-time weight packing (NOT per forward)
# ----------------------------------------------------------------------------------
def pack_params(params):
    """Gate reorder + fwd/bwd block-diagonal merge + bf16 MXU casts + lane-dense
    padding of the top layer. Call once at parameter-load time."""
    H = params["whh_f"].shape[0]
    E = params["wih_f"].shape[0]
    dim_out = params["wtop"].shape[1]
    bf16 = jnp.bfloat16

    def gates(w):  # columns in PyTorch order i|f|g|o  ->  (i, f, o, g)
        return w[:, 0:H], w[:, H:2 * H], w[:, 3 * H:4 * H], w[:, 2 * H:3 * H]

    # Input-to-hidden, block-diagonal over [x_fwd | x_bwd] rows, gate layout
    # [i_f i_b | f_f f_b | o_f o_b | g_f g_b].
    iF, fF, oF, gF = gates(params["wih_f"])
    iB, fB, oB, gB = gates(params["wih_b"])
    wih_blk = jnp.zeros((2 * E, 8 * H), jnp.float32)
    wih_blk = wih_blk.at[:E, 0 * H:1 * H].set(iF).at[:E, 2 * H:3 * H].set(fF)
    wih_blk = wih_blk.at[:E, 4 * H:5 * H].set(oF).at[:E, 6 * H:7 * H].set(gF)
    wih_blk = wih_blk.at[E:, 1 * H:2 * H].set(iB).at[E:, 3 * H:4 * H].set(fB)
    wih_blk = wih_blk.at[E:, 5 * H:6 * H].set(oB).at[E:, 7 * H:8 * H].set(gB)

    # Hidden-to-hidden, block-diagonal over [h_f | h_b] rows, same gate layout.
    iF, fF, oF, gF = gates(params["whh_f"])
    iB, fB, oB, gB = gates(params["whh_b"])
    whh_blk = jnp.zeros((2 * H, 8 * H), jnp.float32)
    whh_blk = whh_blk.at[:H, 0 * H:1 * H].set(iF).at[:H, 2 * H:3 * H].set(fF)
    whh_blk = whh_blk.at[:H, 4 * H:5 * H].set(oF).at[:H, 6 * H:7 * H].set(gF)
    whh_blk = whh_blk.at[H:, 1 * H:2 * H].set(iB).at[H:, 3 * H:4 * H].set(fB)
    whh_blk = whh_blk.at[H:, 5 * H:6 * H].set(oB).at[H:, 7 * H:8 * H].set(gB)

    biF, bfF, boF, bgF = gates(params["b_f"])
    biB, bfB, boB, bgB = gates(params["b_b"])
    b_comb = jnp.concatenate([biF, biB, bfF, bfB, boF, boB, bgF, bgB], axis=1)  # (1, 8H)

    wtop_pad = jnp.zeros((params["wtop"].shape[0], TOP_PAD), jnp.float32)
    wtop_pad = wtop_pad.at[:, :dim_out].set(params["wtop"])
    btop_pad = jnp.zeros((1, TOP_PAD), jnp.float32).at[:, :dim_out].set(params["btop"])

    return {
        "embedding": params["embedding"],
        "wih_blk": wih_blk.astype(bf16),               # bf16 MXU operand
        "whh_blk": whh_blk.astype(bf16),               # bf16 MXU operand
        "b_comb": b_comb,                              # f32 (added post-MXU)
        "wp_path": params["wproj"][:2 * H, :].astype(bf16),
        "wp_word": params["wproj"][2 * H:, :].astype(bf16),
        "bproj": params["bproj"],
        "wtop_pad": wtop_pad.astype(bf16),
        "btop_pad": btop_pad,
        "dim_out": dim_out,
        "H": H,
        "E": E,
    }


# ----------------------------------------------------------------------------------
# Forward wrapper (per-call glue only: gathers, step-aligned layout, mask, pallas_call)
# ----------------------------------------------------------------------------------
def binary_classifier_forward(path_ids, word_ids, lengths, packed):
    emb = packed["embedding"]
    H, E = packed["H"], packed["E"]
    dim_out = packed["dim_out"]
    B, T = path_ids.shape
    bf16 = jnp.bfloat16

    # Embedding lookups (glue).
    path_emb = jnp.take(emb, path_ids, axis=0)                      # (B, T, E)
    word_emb = jnp.take(emb, word_ids, axis=0).astype(bf16)         # (B, E) bf16

    # Step-aligned, time-major input: row-block s = [x_s | x_{T-1-s}].
    x_tm = jnp.transpose(path_emb, (1, 0, 2))                       # (T, B, E)
    xseq = jnp.concatenate([x_tm, x_tm[::-1]], axis=2).astype(bf16)  # (T, B, 2E)

    # Pre-broadcast per-step validity: fwd block uses t<len, bwd block (T-1-t)<len.
    t_idx = jnp.arange(T)
    m_fwd = (t_idx[:, None] < lengths[None, :]).astype(jnp.float32)            # (T, B)
    m_bwd = ((T - 1 - t_idx)[:, None] < lengths[None, :]).astype(jnp.float32)  # (T, B)
    mask = jnp.concatenate(
        [jnp.broadcast_to(m_fwd[:, :, None], (T, B, H)),
         jnp.broadcast_to(m_bwd[:, :, None], (T, B, H))], axis=2)   # (T, B, 2H)

    # Batch grid: activations batch-tiled; weights VMEM-resident via constant maps.
    Bt = 8 if (B % 8 == 0) else B
    grid = (B // Bt,)

    def btile3(shape):
        return pl.BlockSpec(shape, lambda b: (0, b, 0))

    def const2(arr):
        return pl.BlockSpec(arr.shape, lambda b: (0, 0))

    out_pad = pl.pallas_call(
        bilstm_mlp_kernel,
        out_shape=jax.ShapeDtypeStruct((B, TOP_PAD), jnp.float32),
        grid=grid,
        in_specs=[
            btile3((T, Bt, 2 * E)),                                 # xseq
            btile3((T, Bt, 2 * H)),                                 # mask
            pl.BlockSpec((Bt, E), lambda b: (b, 0)),                # word
            const2(packed["wih_blk"]),
            const2(packed["b_comb"]),
            const2(packed["whh_blk"]),
            const2(packed["wp_path"]),
            const2(packed["wp_word"]),
            const2(packed["bproj"]),
            const2(packed["wtop_pad"]),
            const2(packed["btop_pad"]),
        ],
        out_specs=pl.BlockSpec((Bt, TOP_PAD), lambda b: (b, 0)),
        scratch_shapes=[pltpu.VMEM((T, Bt, 8 * H), jnp.float32)],   # hoisted x@W_ih
        compiler_params=pltpu.CompilerParams(
            dimension_semantics=("parallel",)),
    )(xseq, mask, word_emb,
      packed["wih_blk"], packed["b_comb"], packed["whh_blk"],
      packed["wp_path"], packed["wp_word"], packed["bproj"],
      packed["wtop_pad"], packed["btop_pad"])
    return out_pad[:, :dim_out]


# ----------------------------------------------------------------------------------
# Pure-JAX f32 reference (PyTorch semantics) and parameter construction
# ----------------------------------------------------------------------------------
def reference_forward(path_ids, word_ids, lengths, params):
    emb_table = params["embedding"]
    B, T = path_ids.shape
    H = params["whh_f"].shape[0]
    x = jnp.take(emb_table, path_ids, axis=0)                 # (B, T, E)
    word = jnp.take(emb_table, word_ids, axis=0)              # (B, E)
    mask = (jnp.arange(T)[None, :] < lengths[:, None]).astype(jnp.float32)

    def cell(x_t, h, c, w_ih, w_hh, b):
        gates = x_t @ w_ih + h @ w_hh + b
        i = jax.nn.sigmoid(gates[:, 0 * H:1 * H])
        f = jax.nn.sigmoid(gates[:, 1 * H:2 * H])
        g = jnp.tanh(gates[:, 2 * H:3 * H])
        o = jax.nn.sigmoid(gates[:, 3 * H:4 * H])
        c_new = f * c + i * g
        return o * jnp.tanh(c_new), c_new

    h = c = jnp.zeros((B, H), jnp.float32)
    for t in range(T):
        m = mask[:, t:t + 1]
        hn, cn = cell(x[:, t], h, c, params["wih_f"], params["whh_f"], params["b_f"])
        h, c = m * hn + (1 - m) * h, m * cn + (1 - m) * c
    h_fwd = h

    h = c = jnp.zeros((B, H), jnp.float32)
    for t in range(T - 1, -1, -1):
        m = mask[:, t:t + 1]
        hn, cn = cell(x[:, t], h, c, params["wih_b"], params["whh_b"], params["b_b"])
        h, c = m * hn + (1 - m) * h, m * cn + (1 - m) * c
    h_bwd = h

    feat = jnp.concatenate([h_fwd, h_bwd, word], axis=1)
    hidden = jnp.maximum(feat @ params["wproj"] + params["bproj"], 0.0)
    return hidden @ params["wtop"] + params["btop"]


def make_params(key, num_embedding, dim_embedding, dim_hidden):
    H = dim_hidden // 2
    ks = jax.random.split(key, 12)
    scale = 0.1

    def rnd(k, shape):
        return (scale * jax.random.normal(k, shape)).astype(jnp.float32)

    return {
        # pretrained synset embedding table (weight.data.copy_ of pretrain_embedding)
        "embedding": rnd(ks[0], (num_embedding, dim_embedding)),
        # BiLSTM, gate order i|f|g|o ; stored transposed: (in, 4H)
        "wih_f": rnd(ks[1], (dim_embedding, 4 * H)),
        "whh_f": rnd(ks[2], (H, 4 * H)),
        "b_f":   rnd(ks[3], (1, 4 * H)),   # b_ih + b_hh fused
        "wih_b": rnd(ks[4], (dim_embedding, 4 * H)),
        "whh_b": rnd(ks[5], (H, 4 * H)),
        "b_b":   rnd(ks[6], (1, 4 * H)),
        # project: Linear(dim_hidden + dim_embedding, 1024)
        "wproj": rnd(ks[7], (dim_hidden + dim_embedding, 1024)),
        "bproj": rnd(ks[8], (1, 1024)),
        # top: Linear(1024, 2)
        "wtop":  rnd(ks[9], (1024, 2)),
        "btop":  rnd(ks[10], (1, 2)),
    }


if __name__ == "__main__":
    # Small, module-consistent shapes.
    batch_size = 8
    path_len = 8          # max_len-style padded path length
    num_embedding = 50
    dim_embedding = 32
    dim_hidden = 64       # -> per-direction LSTM hidden = 32

    key = jax.random.PRNGKey(0)
    k_params, k_path, k_word, k_len = jax.random.split(key, 4)

    params = make_params(k_params, num_embedding, dim_embedding, dim_hidden)
    packed = pack_params(params)   # one-time weight packing, NOT in the per-call path

    path = jax.random.randint(k_path, (batch_size, path_len), 1, num_embedding, dtype=jnp.int32)
    word = jax.random.randint(k_word, (batch_size,), 1, num_embedding, dtype=jnp.int32)
    lengths = jax.random.randint(k_len, (batch_size,), 1, path_len + 1, dtype=jnp.int32)

    logits = binary_classifier_forward(path, word, lengths, packed)
    logits = jax.block_until_ready(logits)

    ref = reference_forward(path, word, lengths, params)
    assert logits.shape == (batch_size, 2)
    # bf16 MXU operands on the recurrence + head matmuls (f32 accumulation, f32 state)
    # -> compare at bf16-level tolerance against the pure-f32 reference.
    assert jnp.allclose(logits, ref, rtol=2e-2, atol=2e-2), "Pallas kernel mismatch vs reference"

    print("KERNEL_OK")
</pallas_src>

<mosaic_0001>
module attributes {stable_mosaic.version = 11 : i64} {
  func.func @bilstm_mlp_kernel(%arg0: i32, %arg1: memref<8x8x64xbf16, #tpu.memory_space<vmem>>, %arg2: memref<8x8x64xf32, #tpu.memory_space<vmem>>, %arg3: memref<8x32xbf16, #tpu.memory_space<vmem>>, %arg4: memref<64x256xbf16, #tpu.memory_space<vmem>>, %arg5: memref<1x256xf32, #tpu.memory_space<vmem>>, %arg6: memref<64x256xbf16, #tpu.memory_space<vmem>>, %arg7: memref<64x1024xbf16, #tpu.memory_space<vmem>>, %arg8: memref<32x1024xbf16, #tpu.memory_space<vmem>>, %arg9: memref<1x1024xf32, #tpu.memory_space<vmem>>, %arg10: memref<1024x128xbf16, #tpu.memory_space<vmem>>, %arg11: memref<1x128xf32, #tpu.memory_space<vmem>>, %arg12: memref<8x128xf32, #tpu.memory_space<vmem>>, %arg13: memref<8x8x256xf32, #tpu.memory_space<vmem>>) attributes {dimension_semantics = [#tpu.dimension_semantics<parallel>], iteration_bounds = array<i64: 1>, scalar_prefetch = 0 : i64, scratch_operands = 1 : i64, tpu.core_type = #tpu.core_type<tc>, window_params = [{transform_indices = @transform_0, window_bounds = array<i64: 8, 8, 64>}, {transform_indices = @transform_1, window_bounds = array<i64: 8, 8, 64>}, {transform_indices = @transform_2, window_bounds = array<i64: 8, 32>}, {pipeline_mode = #tpu.pipeline_mode<synchronous>, transform_indices = @transform_3, window_bounds = array<i64: 64, 256>}, {pipeline_mode = #tpu.pipeline_mode<synchronous>, transform_indices = @transform_4, window_bounds = array<i64: 1, 256>}, {pipeline_mode = #tpu.pipeline_mode<synchronous>, transform_indices = @transform_5, window_bounds = array<i64: 64, 256>}, {pipeline_mode = #tpu.pipeline_mode<synchronous>, transform_indices = @transform_6, window_bounds = array<i64: 64, 1024>}, {pipeline_mode = #tpu.pipeline_mode<synchronous>, transform_indices = @transform_7, window_bounds = array<i64: 32, 1024>}, {pipeline_mode = #tpu.pipeline_mode<synchronous>, transform_indices = @transform_8, window_bounds = array<i64: 1, 1024>}, {pipeline_mode = #tpu.pipeline_mode<synchronous>, transform_indices = @transform_9, window_bounds = array<i64: 1024, 128>}, {pipeline_mode = #tpu.pipeline_mode<synchronous>, transform_indices = @transform_10, window_bounds = array<i64: 1, 128>}, {transform_indices = @transform_11, window_bounds = array<i64: 8, 128>}]} {
    %c0 = arith.constant 0 : index
    %c0_0 = arith.constant 0 : index
    %0 = vector.load %arg4[%c0, %c0_0] : memref<64x256xbf16, #tpu.memory_space<vmem>>, vector<64x256xbf16>
    %c0_1 = arith.constant 0 : index
    %c0_2 = arith.constant 0 : index
    %1 = vector.load %arg5[%c0_1, %c0_2] : memref<1x256xf32, #tpu.memory_space<vmem>>, vector<1x256xf32>
    %c0_3 = arith.constant 0 : index
    %c0_4 = arith.constant 0 : index
    %c0_5 = arith.constant 0 : index
    %2 = vector.load %arg1[%c0_3, %c0_4, %c0_5] : memref<8x8x64xbf16, #tpu.memory_space<vmem>>, vector<1x8x64xbf16>
    %3 = vector.shape_cast %2 : vector<1x8x64xbf16> to vector<8x64xbf16>
    %cst = arith.constant dense<0.000000e+00> : vector<8x256xf32>
    %4 = tpu.matmul %3, %0, %cst {dimension_numbers = #tpu.dot_dimension_numbers<[1], [0], [0], [1], [0, 0, 1, 1], [], []>} : vector<8x64xbf16>, vector<64x256xbf16>, vector<8x256xf32> -> vector<8x256xf32>
    %5 = vector.broadcast %1 : vector<1x256xf32> to vector<8x256xf32>
    %6 = arith.addf %4, %5 : vector<8x256xf32>
    %c0_6 = arith.constant 0 : index
    %c0_7 = arith.constant 0 : index
    %c0_8 = arith.constant 0 : index
    %7 = vector.load %arg13[%c0_6, %c0_7, %c0_8] : memref<8x8x256xf32, #tpu.memory_space<vmem>>, vector<1x8x256xf32>
    %8 = vector.shape_cast %7 : vector<1x8x256xf32> to vector<8x256xf32>
    %9 = vector.shape_cast %6 : vector<8x256xf32> to vector<1x8x256xf32>
    tpu.vector_store %arg13[%c0_6, %c0_7, %c0_8], %9 {strides = array<i32>} : memref<8x8x256xf32, #tpu.memory_space<vmem>>, vector<1x8x256xf32>,
    %c1 = arith.constant 1 : index
    %c0_9 = arith.constant 0 : index
    %c0_10 = arith.constant 0 : index
    %10 = vector.load %arg1[%c1, %c0_9, %c0_10] : memref<8x8x64xbf16, #tpu.memory_space<vmem>>, vector<1x8x64xbf16>
    %11 = vector.shape_cast %10 : vector<1x8x64xbf16> to vector<8x64xbf16>
    %cst_11 = arith.constant dense<0.000000e+00> : vector<8x256xf32>
    %12 = tpu.matmul %11, %0, %cst_11 {dimension_numbers = #tpu.dot_dimension_numbers<[1], [0], [0], [1], [0, 0, 1, 1], [], []>} : vector<8x64xbf16>, vector<64x256xbf16>, vector<8x256xf32> -> vector<8x256xf32>
    %13 = vector.broadcast %1 : vector<1x256xf32> to vector<8x256xf32>
    %14 = arith.addf %12, %13 : vector<8x256xf32>
    %c1_12 = arith.constant 1 : index
    %c0_13 = arith.constant 0 : index
    %c0_14 = arith.constant 0 : index
    %15 = vector.load %arg13[%c1_12, %c0_13, %c0_14] : memref<8x8x256xf32, #tpu.memory_space<vmem>>, vector<1x8x256xf32>
    %16 = vector.shape_cast %15 : vector<1x8x256xf32> to vector<8x256xf32>
    %17 = vector.shape_cast %14 : vector<8x256xf32> to vector<1x8x256xf32>
    tpu.vector_store %arg13[%c1_12, %c0_13, %c0_14], %17 {strides = array<i32>} : memref<8x8x256xf32, #tpu.memory_space<vmem>>, vector<1x8x256xf32>,
    %c2 = arith.constant 2 : index
    %c0_15 = arith.constant 0 : index
    %c0_16 = arith.constant 0 : index
    %18 = vector.load %arg1[%c2, %c0_15, %c0_16] : memref<8x8x64xbf16, #tpu.memory_space<vmem>>, vector<1x8x64xbf16>
    %19 = vector.shape_cast %18 : vector<1x8x64xbf16> to vector<8x64xbf16>
    %cst_17 = arith.constant dense<0.000000e+00> : vector<8x256xf32>
    %20 = tpu.matmul %19, %0, %cst_17 {dimension_numbers = #tpu.dot_dimension_numbers<[1], [0], [0], [1], [0, 0, 1, 1], [], []>} : vector<8x64xbf16>, vector<64x256xbf16>, vector<8x256xf32> -> vector<8x256xf32>
    %21 = vector.broadcast %1 : vector<1x256xf32> to vector<8x256xf32>
    %22 = arith.addf %20, %21 : vector<8x256xf32>
    %c2_18 = arith.constant 2 : index
    %c0_19 = arith.constant 0 : index
    %c0_20 = arith.constant 0 : index
    %23 = vector.load %arg13[%c2_18, %c0_19, %c0_20] : memref<8x8x256xf32, #tpu.memory_space<vmem>>, vector<1x8x256xf32>
    %24 = vector.shape_cast %23 : vector<1x8x256xf32> to vector<8x256xf32>
    %25 = vector.shape_cast %22 : vector<8x256xf32> to vector<1x8x256xf32>
    tpu.vector_store %arg13[%c2_18, %c0_19, %c0_20], %25 {strides = array<i32>} : memref<8x8x256xf32, #tpu.memory_space<vmem>>, vector<1x8x256xf32>,
    %c3 = arith.constant 3 : index
    %c0_21 = arith.constant 0 : index
    %c0_22 = arith.constant 0 : index
    %26 = vector.load %arg1[%c3, %c0_21, %c0_22] : memref<8x8x64xbf16, #tpu.memory_space<vmem>>, vector<1x8x64xbf16>
    %27 = vector.shape_cast %26 : vector<1x8x64xbf16> to vector<8x64xbf16>
    %cst_23 = arith.constant dense<0.000000e+00> : vector<8x256xf32>
    %28 = tpu.matmul %27, %0, %cst_23 {dimension_numbers = #tpu.dot_dimension_numbers<[1], [0], [0], [1], [0, 0, 1, 1], [], []>} : vector<8x64xbf16>, vector<64x256xbf16>, vector<8x256xf32> -> vector<8x256xf32>
    %29 = vector.broadcast %1 : vector<1x256xf32> to vector<8x256xf32>
    %30 = arith.addf %28, %29 : vector<8x256xf32>
    %c3_24 = arith.constant 3 : index
    %c0_25 = arith.constant 0 : index
    %c0_26 = arith.constant 0 : index
    %31 = vector.load %arg13[%c3_24, %c0_25, %c0_26] : memref<8x8x256xf32, #tpu.memory_space<vmem>>, vector<1x8x256xf32>
    %32 = vector.shape_cast %31 : vector<1x8x256xf32> to vector<8x256xf32>
    %33 = vector.shape_cast %30 : vector<8x256xf32> to vector<1x8x256xf32>
    tpu.vector_store %arg13[%c3_24, %c0_25, %c0_26], %33 {strides = array<i32>} : memref<8x8x256xf32, #tpu.memory_space<vmem>>, vector<1x8x256xf32>,
    %c4 = arith.constant 4 : index
    %c0_27 = arith.constant 0 : index
    %c0_28 = arith.constant 0 : index
    %34 = vector.load %arg1[%c4, %c0_27, %c0_28] : memref<8x8x64xbf16, #tpu.memory_space<vmem>>, vector<1x8x64xbf16>
    %35 = vector.shape_cast %34 : vector<1x8x64xbf16> to vector<8x64xbf16>
    %cst_29 = arith.constant dense<0.000000e+00> : vector<8x256xf32>
    %36 = tpu.matmul %35, %0, %cst_29 {dimension_numbers = #tpu.dot_dimension_numbers<[1], [0], [0], [1], [0, 0, 1, 1], [], []>} : vector<8x64xbf16>, vector<64x256xbf16>, vector<8x256xf32> -> vector<8x256xf32>
    %37 = vector.broadcast %1 : vector<1x256xf32> to vector<8x256xf32>
    %38 = arith.addf %36, %37 : vector<8x256xf32>
    %c4_30 = arith.constant 4 : index
    %c0_31 = arith.constant 0 : index
    %c0_32 = arith.constant 0 : index
    %39 = vector.load %arg13[%c4_30, %c0_31, %c0_32] : memref<8x8x256xf32, #tpu.memory_space<vmem>>, vector<1x8x256xf32>
    %40 = vector.shape_cast %39 : vector<1x8x256xf32> to vector<8x256xf32>
    %41 = vector.shape_cast %38 : vector<8x256xf32> to vector<1x8x256xf32>
    tpu.vector_store %arg13[%c4_30, %c0_31, %c0_32], %41 {strides = array<i32>} : memref<8x8x256xf32, #tpu.memory_space<vmem>>, vector<1x8x256xf32>,
    %c5 = arith.constant 5 : index
    %c0_33 = arith.constant 0 : index
    %c0_34 = arith.constant 0 : index
    %42 = vector.load %arg1[%c5, %c0_33, %c0_34] : memref<8x8x64xbf16, #tpu.memory_space<vmem>>, vector<1x8x64xbf16>
    %43 = vector.shape_cast %42 : vector<1x8x64xbf16> to vector<8x64xbf16>
    %cst_35 = arith.constant dense<0.000000e+00> : vector<8x256xf32>
    %44 = tpu.matmul %43, %0, %cst_35 {dimension_numbers = #tpu.dot_dimension_numbers<[1], [0], [0], [1], [0, 0, 1, 1], [], []>} : vector<8x64xbf16>, vector<64x256xbf16>, vector<8x256xf32> -> vector<8x256xf32>
    %45 = vector.broadcast %1 : vector<1x256xf32> to vector<8x256xf32>
    %46 = arith.addf %44, %45 : vector<8x256xf32>
    %c5_36 = arith.constant 5 : index
    %c0_37 = arith.constant 0 : index
    %c0_38 = arith.constant 0 : index
    %47 = vector.load %arg13[%c5_36, %c0_37, %c0_38] : memref<8x8x256xf32, #tpu.memory_space<vmem>>, vector<1x8x256xf32>
    %48 = vector.shape_cast %47 : vector<1x8x256xf32> to vector<8x256xf32>
    %49 = vector.shape_cast %46 : vector<8x256xf32> to vector<1x8x256xf32>
    tpu.vector_store %arg13[%c5_36, %c0_37, %c0_38], %49 {strides = array<i32>} : memref<8x8x256xf32, #tpu.memory_space<vmem>>, vector<1x8x256xf32>,
    %c6 = arith.constant 6 : index
    %c0_39 = arith.constant 0 : index
    %c0_40 = arith.constant 0 : index
    %50 = vector.load %arg1[%c6, %c0_39, %c0_40] : memref<8x8x64xbf16, #tpu.memory_space<vmem>>, vector<1x8x64xbf16>
    %51 = vector.shape_cast %50 : vector<1x8x64xbf16> to vector<8x64xbf16>
    %cst_41 = arith.constant dense<0.000000e+00> : vector<8x256xf32>
    %52 = tpu.matmul %51, %0, %cst_41 {dimension_numbers = #tpu.dot_dimension_numbers<[1], [0], [0], [1], [0, 0, 1, 1], [], []>} : vector<8x64xbf16>, vector<64x256xbf16>, vector<8x256xf32> -> vector<8x256xf32>
    %53 = vector.broadcast %1 : vector<1x256xf32> to vector<8x256xf32>
    %54 = arith.addf %52, %53 : vector<8x256xf32>
    %c6_42 = arith.constant 6 : index
    %c0_43 = arith.constant 0 : index
    %c0_44 = arith.constant 0 : index
    %55 = vector.load %arg13[%c6_42, %c0_43, %c0_44] : memref<8x8x256xf32, #tpu.memory_space<vmem>>, vector<1x8x256xf32>
    %56 = vector.shape_cast %55 : vector<1x8x256xf32> to vector<8x256xf32>
    %57 = vector.shape_cast %54 : vector<8x256xf32> to vector<1x8x256xf32>
    tpu.vector_store %arg13[%c6_42, %c0_43, %c0_44], %57 {strides = array<i32>} : memref<8x8x256xf32, #tpu.memory_space<vmem>>, vector<1x8x256xf32>,
    %c7 = arith.constant 7 : index
    %c0_45 = arith.constant 0 : index
    %c0_46 = arith.constant 0 : index
    %58 = vector.load %arg1[%c7, %c0_45, %c0_46] : memref<8x8x64xbf16, #tpu.memory_space<vmem>>, vector<1x8x64xbf16>
    %59 = vector.shape_cast %58 : vector<1x8x64xbf16> to vector<8x64xbf16>
    %cst_47 = arith.constant dense<0.000000e+00> : vector<8x256xf32>
    %60 = tpu.matmul %59, %0, %cst_47 {dimension_numbers = #tpu.dot_dimension_numbers<[1], [0], [0], [1], [0, 0, 1, 1], [], []>} : vector<8x64xbf16>, vector<64x256xbf16>, vector<8x256xf32> -> vector<8x256xf32>
    %61 = vector.broadcast %1 : vector<1x256xf32> to vector<8x256xf32>
    %62 = arith.addf %60, %61 : vector<8x256xf32>
    %c7_48 = arith.constant 7 : index
    %c0_49 = arith.constant 0 : index
    %c0_50 = arith.constant 0 : index
    %63 = vector.load %arg13[%c7_48, %c0_49, %c0_50] : memref<8x8x256xf32, #tpu.memory_space<vmem>>, vector<1x8x256xf32>
    %64 = vector.shape_cast %63 : vector<1x8x256xf32> to vector<8x256xf32>
    %65 = vector.shape_cast %62 : vector<8x256xf32> to vector<1x8x256xf32>
    tpu.vector_store %arg13[%c7_48, %c0_49, %c0_50], %65 {strides = array<i32>} : memref<8x8x256xf32, #tpu.memory_space<vmem>>, vector<1x8x256xf32>,
    %c0_51 = arith.constant 0 : index
    %c0_52 = arith.constant 0 : index
    %66 = vector.load %arg6[%c0_51, %c0_52] : memref<64x256xbf16, #tpu.memory_space<vmem>>, vector<64x256xbf16>
    %cst_53 = arith.constant 0.000000e+00 : f32
    %67 = vector.broadcast %cst_53 : f32 to vector<8x64xf32>
    %cst_54 = arith.constant 0.000000e+00 : f32
    %68 = vector.broadcast %cst_54 : f32 to vector<8x64xf32>
    %69 = arith.truncf %67 : vector<8x64xf32> to vector<8x64xbf16>
    %cst_55 = arith.constant dense<0.000000e+00> : vector<8x256xf32>
    %70 = tpu.matmul %69, %66, %cst_55 {dimension_numbers = #tpu.dot_dimension_numbers<[1], [0], [0], [1], [0, 0, 1, 1], [], []>} : vector<8x64xbf16>, vector<64x256xbf16>, vector<8x256xf32> -> vector<8x256xf32>
    %c0_56 = arith.constant 0 : index
    %c0_57 = arith.constant 0 : index
    %c0_58 = arith.constant 0 : index
    %71 = vector.load %arg13[%c0_56, %c0_57, %c0_58] : memref<8x8x256xf32, #tpu.memory_space<vmem>>, vector<1x8x256xf32>
    %72 = vector.shape_cast %71 : vector<1x8x256xf32> to vector<8x256xf32>
    %73 = arith.addf %70, %72 : vector<8x256xf32>
    %74 = vector.extract_strided_slice %73 {offsets = [0, 0], sizes = [8, 192], strides = [1, 1]} : vector<8x256xf32> to vector<8x192xf32>
    %75 = arith.negf %74 : vector<8x192xf32>
    %76 = math.exp %75 : vector<8x192xf32>
    %cst_59 = arith.constant 1.000000e+00 : f32
    %77 = vector.broadcast %cst_59 : f32 to vector<8x192xf32>
    %78 = arith.addf %77, %76 : vector<8x192xf32>
    %79 = arith.divf %77, %78 : vector<8x192xf32>
    %80 = vector.extract_strided_slice %73 {offsets = [0, 192], sizes = [8, 64], strides = [1, 1]} : vector<8x256xf32> to vector<8x64xf32>
    %81 = math.tanh %80 : vector<8x64xf32>
    %82 = vector.extract_strided_slice %79 {offsets = [0, 0], sizes = [8, 64], strides = [1, 1]} : vector<8x192xf32> to vector<8x64xf32>
    %83 = vector.extract_strided_slice %79 {offsets = [0, 64], sizes = [8, 64], strides = [1, 1]} : vector<8x192xf32> to vector<8x64xf32>
    %84 = vector.extract_strided_slice %79 {offsets = [0, 128], sizes = [8, 64], strides = [1, 1]} : vector<8x192xf32> to vector<8x64xf32>
    %85 = arith.mulf %83, %68 : vector<8x64xf32>
    %86 = arith.mulf %82, %81 : vector<8x64xf32>
    %87 = arith.addf %85, %86 : vector<8x64xf32>
    %88 = math.tanh %87 : vector<8x64xf32>
    %89 = arith.mulf %84, %88 : vector<8x64xf32>
    %c0_60 = arith.constant 0 : index
    %c0_61 = arith.constant 0 : index
    %c0_62 = arith.constant 0 : index
    %90 = vector.load %arg2[%c0_60, %c0_61, %c0_62] : memref<8x8x64xf32, #tpu.memory_space<vmem>>, vector<1x8x64xf32>
    %91 = vector.shape_cast %90 : vector<1x8x64xf32> to vector<8x64xf32>
    %cst_63 = arith.constant 5.000000e-01 : f32
    %92 = vector.broadcast %cst_63 : f32 to vector<8x64xf32>
    %93 = arith.cmpf ogt, %91, %92 : vector<8x64xf32>
    %94 = arith.select %93, %89, %67 : vector<8x64xi1>, vector<8x64xf32>
    %95 = arith.select %93, %87, %68 : vector<8x64xi1>, vector<8x64xf32>
    %96 = arith.truncf %94 : vector<8x64xf32> to vector<8x64xbf16>
    %cst_64 = arith.constant dense<0.000000e+00> : vector<8x256xf32>
    %97 = tpu.matmul %96, %66, %cst_64 {dimension_numbers = #tpu.dot_dimension_numbers<[1], [0], [0], [1], [0, 0, 1, 1], [], []>} : vector<8x64xbf16>, vector<64x256xbf16>, vector<8x256xf32> -> vector<8x256xf32>
    %c1_65 = arith.constant 1 : index
    %c0_66 = arith.constant 0 : index
    %c0_67 = arith.constant 0 : index
    %98 = vector.load %arg13[%c1_65, %c0_66, %c0_67] : memref<8x8x256xf32, #tpu.memory_space<vmem>>, vector<1x8x256xf32>
    %99 = vector.shape_cast %98 : vector<1x8x256xf32> to vector<8x256xf32>
    %100 = arith.addf %97, %99 : vector<8x256xf32>
    %101 = vector.extract_strided_slice %100 {offsets = [0, 0], sizes = [8, 192], strides = [1, 1]} : vector<8x256xf32> to vector<8x192xf32>
    %102 = arith.negf %101 : vector<8x192xf32>
    %103 = math.exp %102 : vector<8x192xf32>
    %cst_68 = arith.constant 1.000000e+00 : f32
    %104 = vector.broadcast %cst_68 : f32 to vector<8x192xf32>
    %105 = arith.addf %104, %103 : vector<8x192xf32>
    %106 = arith.divf %104, %105 : vector<8x192xf32>
    %107 = vector.extract_strided_slice %100 {offsets = [0, 192], sizes = [8, 64], strides = [1, 1]} : vector<8x256xf32> to vector<8x64xf32>
    %108 = math.tanh %107 : vector<8x64xf32>
    %109 = vector.extract_strided_slice %106 {offsets = [0, 0], sizes = [8, 64], strides = [1, 1]} : vector<8x192xf32> to vector<8x64xf32>
    %110 = vector.extract_strided_slice %106 {offsets = [0, 64], sizes = [8, 64], strides = [1, 1]} : vector<8x192xf32> to vector<8x64xf32>
    %111 = vector.extract_strided_slice %106 {offsets = [0, 128], sizes = [8, 64], strides = [1, 1]} : vector<8x192xf32> to vector<8x64xf32>
    %112 = arith.mulf %110, %95 : vector<8x64xf32>
    %113 = arith.mulf %109, %108 : vector<8x64xf32>
    %114 = arith.addf %112, %113 : vector<8x64xf32>
    %115 = math.tanh %114 : vector<8x64xf32>
    %116 = arith.mulf %111, %115 : vector<8x64xf32>
    %c1_69 = arith.constant 1 : index
    %c0_70 = arith.constant 0 : index
    %c0_71 = arith.constant 0 : index
    %117 = vector.load %arg2[%c1_69, %c0_70, %c0_71] : memref<8x8x64xf32, #tpu.memory_space<vmem>>, vector<1x8x64xf32>
    %118 = vector.shape_cast %117 : vector<1x8x64xf32> to vector<8x64xf32>
    %cst_72 = arith.constant 5.000000e-01 : f32
    %119 = vector.broadcast %cst_72 : f32 to vector<8x64xf32>
    %120 = arith.cmpf ogt, %118, %119 : vector<8x64xf32>
    %121 = arith.select %120, %116, %94 : vector<8x64xi1>, vector<8x64xf32>
    %122 = arith.select %120, %114, %95 : vector<8x64xi1>, vector<8x64xf32>
    %123 = arith.truncf %121 : vector<8x64xf32> to vector<8x64xbf16>
    %cst_73 = arith.constant dense<0.000000e+00> : vector<8x256xf32>
    %124 = tpu.matmul %123, %66, %cst_73 {dimension_numbers = #tpu.dot_dimension_numbers<[1], [0], [0], [1], [0, 0, 1, 1], [], []>} : vector<8x64xbf16>, vector<64x256xbf16>, vector<8x256xf32> -> vector<8x256xf32>
    %c2_74 = arith.constant 2 : index
    %c0_75 = arith.constant 0 : index
    %c0_76 = arith.constant 0 : index
    %125 = vector.load %arg13[%c2_74, %c0_75, %c0_76] : memref<8x8x256xf32, #tpu.memory_space<vmem>>, vector<1x8x256xf32>
    %126 = vector.shape_cast %125 : vector<1x8x256xf32> to vector<8x256xf32>
    %127 = arith.addf %124, %126 : vector<8x256xf32>
    %128 = vector.extract_strided_slice %127 {offsets = [0, 0], sizes = [8, 192], strides = [1, 1]} : vector<8x256xf32> to vector<8x192xf32>
    %129 = arith.negf %128 : vector<8x192xf32>
    %130 = math.exp %129 : vector<8x192xf32>
    %cst_77 = arith.constant 1.000000e+00 : f32
    %131 = vector.broadcast %cst_77 : f32 to vector<8x192xf32>
    %132 = arith.addf %131, %130 : vector<8x192xf32>
    %133 = arith.divf %131, %132 : vector<8x192xf32>
    %134 = vector.extract_strided_slice %127 {offsets = [0, 192], sizes = [8, 64], strides = [1, 1]} : vector<8x256xf32> to vector<8x64xf32>
    %135 = math.tanh %134 : vector<8x64xf32>
    %136 = vector.extract_strided_slice %133 {offsets = [0, 0], sizes = [8, 64], strides = [1, 1]} : vector<8x192xf32> to vector<8x64xf32>
    %137 = vector.extract_strided_slice %133 {offsets = [0, 64], sizes = [8, 64], strides = [1, 1]} : vector<8x192xf32> to vector<8x64xf32>
    %138 = vector.extract_strided_slice %133 {offsets = [0, 128], sizes = [8, 64], strides = [1, 1]} : vector<8x192xf32> to vector<8x64xf32>
    %139 = arith.mulf %137, %122 : vector<8x64xf32>
    %140 = arith.mulf %136, %135 : vector<8x64xf32>
    %141 = arith.addf %139, %140 : vector<8x64xf32>
    %142 = math.tanh %141 : vector<8x64xf32>
    %143 = arith.mulf %138, %142 : vector<8x64xf32>
    %c2_78 = arith.constant 2 : index
    %c0_79 = arith.constant 0 : index
    %c0_80 = arith.constant 0 : index
    %144 = vector.load %arg2[%c2_78, %c0_79, %c0_80] : memref<8x8x64xf32, #tpu.memory_space<vmem>>, vector<1x8x64xf32>
    %145 = vector.shape_cast %144 : vector<1x8x64xf32> to vector<8x64xf32>
    %cst_81 = arith.constant 5.000000e-01 : f32
    %146 = vector.broadcast %cst_81 : f32 to vector<8x64xf32>
    %147 = arith.cmpf ogt, %145, %146 : vector<8x64xf32>
    %148 = arith.select %147, %143, %121 : vector<8x64xi1>, vector<8x64xf32>
    %149 = arith.select %147, %141, %122 : vector<8x64xi1>, vector<8x64xf32>
    %150 = arith.truncf %148 : vector<8x64xf32> to vector<8x64xbf16>
    %cst_82 = arith.constant dense<0.000000e+00> : vector<8x256xf32>
    %151 = tpu.matmul %150, %66, %cst_82 {dimension_numbers = #tpu.dot_dimension_numbers<[1], [0], [0], [1], [0, 0, 1, 1], [], []>} : vector<8x64xbf16>, vector<64x256xbf16>, vector<8x256xf32> -> vector<8x256xf32>
    %c3_83 = arith.constant 3 : index
    %c0_84 = arith.constant 0 : index
    %c0_85 = arith.constant 0 : index
    %152 = vector.load %arg13[%c3_83, %c0_84, %c0_85] : memref<8x8x256xf32, #tpu.memory_space<vmem>>, vector<1x8x256xf32>
    %153 = vector.shape_cast %152 : vector<1x8x256xf32> to vector<8x256xf32>
    %154 = arith.addf %151, %153 : vector<8x256xf32>
    %155 = vector.extract_strided_slice %154 {offsets = [0, 0], sizes = [8, 192], strides = [1, 1]} : vector<8x256xf32> to vector<8x192xf32>
    %156 = arith.negf %155 : vector<8x192xf32>
    %157 = math.exp %156 : vector<8x192xf32>
    %cst_86 = arith.constant 1.000000e+00 : f32
    %158 = vector.broadcast %cst_86 : f32 to vector<8x192xf32>
    %159 = arith.addf %158, %157 : vector<8x192xf32>
    %160 = arith.divf %158, %159 : vector<8x192xf32>
    %161 = vector.extract_strided_slice %154 {offsets = [0, 192], sizes = [8, 64], strides = [1, 1]} : vector<8x256xf32> to vector<8x64xf32>
    %162 = math.tanh %161 : vector<8x64xf32>
    %163 = vector.extract_strided_slice %160 {offsets = [0, 0], sizes = [8, 64], strides = [1, 1]} : vector<8x192xf32> to vector<8x64xf32>
    %164 = vector.extract_strided_slice %160 {offsets = [0, 64], sizes = [8, 64], strides = [1, 1]} : vector<8x192xf32> to vector<8x64xf32>
    %165 = vector.extract_strided_slice %160 {offsets = [0, 128], sizes = [8, 64], strides = [1, 1]} : vector<8x192xf32> to vector<8x64xf32>
    %166 = arith.mulf %164, %149 : vector<8x64xf32>
    %167 = arith.mulf %163, %162 : vector<8x64xf32>
    %168 = arith.addf %166, %167 : vector<8x64xf32>
    %169 = math.tanh %168 : vector<8x64xf32>
    %170 = arith.mulf %165, %169 : vector<8x64xf32>
    %c3_87 = arith.constant 3 : index
    %c0_88 = arith.constant 0 : index
    %c0_89 = arith.constant 0 : index
    %171 = vector.load %arg2[%c3_87, %c0_88, %c0_89] : memref<8x8x64xf32, #tpu.memory_space<vmem>>, vector<1x8x64xf32>
    %172 = vector.shape_cast %171 : vector<1x8x64xf32> to vector<8x64xf32>
    %cst_90 = arith.constant 5.000000e-01 : f32
    %173 = vector.broadcast %cst_90 : f32 to vector<8x64xf32>
    %174 = arith.cmpf ogt, %172, %173 : vector<8x64xf32>
    %175 = arith.select %174, %170, %148 : vector<8x64xi1>, vector<8x64xf32>
    %176 = arith.select %174, %168, %149 : vector<8x64xi1>, vector<8x64xf32>
    %177 = arith.truncf %175 : vector<8x64xf32> to vector<8x64xbf16>
    %cst_91 = arith.constant dense<0.000000e+00> : vector<8x256xf32>
    %178 = tpu.matmul %177, %66, %cst_91 {dimension_numbers = #tpu.dot_dimension_numbers<[1], [0], [0], [1], [0, 0, 1, 1], [], []>} : vector<8x64xbf16>, vector<64x256xbf16>, vector<8x256xf32> -> vector<8x256xf32>
    %c4_92 = arith.constant 4 : index
    %c0_93 = arith.constant 0 : index
    %c0_94 = arith.constant 0 : index
    %179 = vector.load %arg13[%c4_92, %c0_93, %c0_94] : memref<8x8x256xf32, #tpu.memory_space<vmem>>, vector<1x8x256xf32>
    %180 = vector.shape_cast %179 : vector<1x8x256xf32> to vector<8x256xf32>
    %181 = arith.addf %178, %180 : vector<8x256xf32>
    %182 = vector.extract_strided_slice %181 {offsets = [0, 0], sizes = [8, 192], strides = [1, 1]} : vector<8x256xf32> to vector<8x192xf32>
    %183 = arith.negf %182 : vector<8x192xf32>
    %184 = math.exp %183 : vector<8x192xf32>
    %cst_95 = arith.constant 1.000000e+00 : f32
    %185 = vector.broadcast %cst_95 : f32 to vector<8x192xf32>
    %186 = arith.addf %185, %184 : vector<8x192xf32>
    %187 = arith.divf %185, %186 : vector<8x192xf32>
    %188 = vector.extract_strided_slice %181 {offsets = [0, 192], sizes = [8, 64], strides = [1, 1]} : vector<8x256xf32> to vector<8x64xf32>
    %189 = math.tanh %188 : vector<8x64xf32>
    %190 = vector.extract_strided_slice %187 {offsets = [0, 0], sizes = [8, 64], strides = [1, 1]} : vector<8x192xf32> to vector<8x64xf32>
    %191 = vector.extract_strided_slice %187 {offsets = [0, 64], sizes = [8, 64], strides = [1, 1]} : vector<8x192xf32> to vector<8x64xf32>
    %192 = vector.extract_strided_slice %187 {offsets = [0, 128], sizes = [8, 64], strides = [1, 1]} : vector<8x192xf32> to vector<8x64xf32>
    %193 = arith.mulf %191, %176 : vector<8x64xf32>
    %194 = arith.mulf %190, %189 : vector<8x64xf32>
    %195 = arith.addf %193, %194 : vector<8x64xf32>
    %196 = math.tanh %195 : vector<8x64xf32>
    %197 = arith.mulf %192, %196 : vector<8x64xf32>
    %c4_96 = arith.constant 4 : index
    %c0_97 = arith.constant 0 : index
    %c0_98 = arith.constant 0 : index
    %198 = vector.load %arg2[%c4_96, %c0_97, %c0_98] : memref<8x8x64xf32, #tpu.memory_space<vmem>>, vector<1x8x64xf32>
    %199 = vector.shape_cast %198 : vector<1x8x64xf32> to vector<8x64xf32>
    %cst_99 = arith.constant 5.000000e-01 : f32
    %200 = vector.broadcast %cst_99 : f32 to vector<8x64xf32>
    %201 = arith.cmpf ogt, %199, %200 : vector<8x64xf32>
    %202 = arith.select %201, %197, %175 : vector<8x64xi1>, vector<8x64xf32>
    %203 = arith.select %201, %195, %176 : vector<8x64xi1>, vector<8x64xf32>
    %204 = arith.truncf %202 : vector<8x64xf32> to vector<8x64xbf16>
    %cst_100 = arith.constant dense<0.000000e+00> : vector<8x256xf32>
    %205 = tpu.matmul %204, %66, %cst_100 {dimension_numbers = #tpu.dot_dimension_numbers<[1], [0], [0], [1], [0, 0, 1, 1], [], []>} : vector<8x64xbf16>, vector<64x256xbf16>, vector<8x256xf32> -> vector<8x256xf32>
    %c5_101 = arith.constant 5 : index
    %c0_102 = arith.constant 0 : index
    %c0_103 = arith.constant 0 : index
    %206 = vector.load %arg13[%c5_101, %c0_102, %c0_103] : memref<8x8x256xf32, #tpu.memory_space<vmem>>, vector<1x8x256xf32>
    %207 = vector.shape_cast %206 : vector<1x8x256xf32> to vector<8x256xf32>
    %208 = arith.addf %205, %207 : vector<8x256xf32>
    %209 = vector.extract_strided_slice %208 {offsets = [0, 0], sizes = [8, 192], strides = [1, 1]} : vector<8x256xf32> to vector<8x192xf32>
    %210 = arith.negf %209 : vector<8x192xf32>
    %211 = math.exp %210 : vector<8x192xf32>
    %cst_104 = arith.constant 1.000000e+00 : f32
    %212 = vector.broadcast %cst_104 : f32 to vector<8x192xf32>
    %213 = arith.addf %212, %211 : vector<8x192xf32>
    %214 = arith.divf %212, %213 : vector<8x192xf32>
    %215 = vector.extract_strided_slice %208 {offsets = [0, 192], sizes = [8, 64], strides = [1, 1]} : vector<8x256xf32> to vector<8x64xf32>
    %216 = math.tanh %215 : vector<8x64xf32>
    %217 = vector.extract_strided_slice %214 {offsets = [0, 0], sizes = [8, 64], strides = [1, 1]} : vector<8x192xf32> to vector<8x64xf32>
    %218 = vector.extract_strided_slice %214 {offsets = [0, 64], sizes = [8, 64], strides = [1, 1]} : vector<8x192xf32> to vector<8x64xf32>
    %219 = vector.extract_strided_slice %214 {offsets = [0, 128], sizes = [8, 64], strides = [1, 1]} : vector<8x192xf32> to vector<8x64xf32>
    %220 = arith.mulf %218, %203 : vector<8x64xf32>
    %221 = arith.mulf %217, %216 : vector<8x64xf32>
    %222 = arith.addf %220, %221 : vector<8x64xf32>
    %223 = math.tanh %222 : vector<8x64xf32>
    %224 = arith.mulf %219, %223 : vector<8x64xf32>
    %c5_105 = arith.constant 5 : index
    %c0_106 = arith.constant 0 : index
    %c0_107 = arith.constant 0 : index
    %225 = vector.load %arg2[%c5_105, %c0_106, %c0_107] : memref<8x8x64xf32, #tpu.memory_space<vmem>>, vector<1x8x64xf32>
    %226 = vector.shape_cast %225 : vector<1x8x64xf32> to vector<8x64xf32>
    %cst_108 = arith.constant 5.000000e-01 : f32
    %227 = vector.broadcast %cst_108 : f32 to vector<8x64xf32>
    %228 = arith.cmpf ogt, %226, %227 : vector<8x64xf32>
    %229 = arith.select %228, %224, %202 : vector<8x64xi1>, vector<8x64xf32>
    %230 = arith.select %228, %222, %203 : vector<8x64xi1>, vector<8x64xf32>
    %231 = arith.truncf %229 : vector<8x64xf32> to vector<8x64xbf16>
    %cst_109 = arith.constant dense<0.000000e+00> : vector<8x256xf32>
    %232 = tpu.matmul %231, %66, %cst_109 {dimension_numbers = #tpu.dot_dimension_numbers<[1], [0], [0], [1], [0, 0, 1, 1], [], []>} : vector<8x64xbf16>, vector<64x256xbf16>, vector<8x256xf32> -> vector<8x256xf32>
    %c6_110 = arith.constant 6 : index
    %c0_111 = arith.constant 0 : index
    %c0_112 = arith.constant 0 : index
    %233 = vector.load %arg13[%c6_110, %c0_111, %c0_112] : memref<8x8x256xf32, #tpu.memory_space<vmem>>, vector<1x8x256xf32>
    %234 = vector.shape_cast %233 : vector<1x8x256xf32> to vector<8x256xf32>
    %235 = arith.addf %232, %234 : vector<8x256xf32>
    %236 = vector.extract_strided_slice %235 {offsets = [0, 0], sizes = [8, 192], strides = [1, 1]} : vector<8x256xf32> to vector<8x192xf32>
    %237 = arith.negf %236 : vector<8x192xf32>
    %238 = math.exp %237 : vector<8x192xf32>
    %cst_113 = arith.constant 1.000000e+00 : f32
    %239 = vector.broadcast %cst_113 : f32 to vector<8x192xf32>
    %240 = arith.addf %239, %238 : vector<8x192xf32>
    %241 = arith.divf %239, %240 : vector<8x192xf32>
    %242 = vector.extract_strided_slice %235 {offsets = [0, 192], sizes = [8, 64], strides = [1, 1]} : vector<8x256xf32> to vector<8x64xf32>
    %243 = math.tanh %242 : vector<8x64xf32>
    %244 = vector.extract_strided_slice %241 {offsets = [0, 0], sizes = [8, 64], strides = [1, 1]} : vector<8x192xf32> to vector<8x64xf32>
    %245 = vector.extract_strided_slice %241 {offsets = [0, 64], sizes = [8, 64], strides = [1, 1]} : vector<8x192xf32> to vector<8x64xf32>
    %246 = vector.extract_strided_slice %241 {offsets = [0, 128], sizes = [8, 64], strides = [1, 1]} : vector<8x192xf32> to vector<8x64xf32>
    %247 = arith.mulf %245, %230 : vector<8x64xf32>
    %248 = arith.mulf %244, %243 : vector<8x64xf32>
    %249 = arith.addf %247, %248 : vector<8x64xf32>
    %250 = math.tanh %249 : vector<8x64xf32>
    %251 = arith.mulf %246, %250 : vector<8x64xf32>
    %c6_114 = arith.constant 6 : index
    %c0_115 = arith.constant 0 : index
    %c0_116 = arith.constant 0 : index
    %252 = vector.load %arg2[%c6_114, %c0_115, %c0_116] : memref<8x8x64xf32, #tpu.memory_space<vmem>>, vector<1x8x64xf32>
    %253 = vector.shape_cast %252 : vector<1x8x64xf32> to vector<8x64xf32>
    %cst_117 = arith.constant 5.000000e-01 : f32
    %254 = vector.broadcast %cst_117 : f32 to vector<8x64xf32>
    %255 = arith.cmpf ogt, %253, %254 : vector<8x64xf32>
    %256 = arith.select %255, %251, %229 : vector<8x64xi1>, vector<8x64xf32>
    %257 = arith.select %255, %249, %230 : vector<8x64xi1>, vector<8x64xf32>
    %258 = arith.truncf %256 : vector<8x64xf32> to vector<8x64xbf16>
    %cst_118 = arith.constant dense<0.000000e+00> : vector<8x256xf32>
    %259 = tpu.matmul %258, %66, %cst_118 {dimension_numbers = #tpu.dot_dimension_numbers<[1], [0], [0], [1], [0, 0, 1, 1], [], []>} : vector<8x64xbf16>, vector<64x256xbf16>, vector<8x256xf32> -> vector<8x256xf32>
    %c7_119 = arith.constant 7 : index
    %c0_120 = arith.constant 0 : index
    %c0_121 = arith.constant 0 : index
    %260 = vector.load %arg13[%c7_119, %c0_120, %c0_121] : memref<8x8x256xf32, #tpu.memory_space<vmem>>, vector<1x8x256xf32>
    %261 = vector.shape_cast %260 : vector<1x8x256xf32> to vector<8x256xf32>
    %262 = arith.addf %259, %261 : vector<8x256xf32>
    %263 = vector.extract_strided_slice %262 {offsets = [0, 0], sizes = [8, 192], strides = [1, 1]} : vector<8x256xf32> to vector<8x192xf32>
    %264 = arith.negf %263 : vector<8x192xf32>
    %265 = math.exp %264 : vector<8x192xf32>
    %cst_122 = arith.constant 1.000000e+00 : f32
    %266 = vector.broadcast %cst_122 : f32 to vector<8x192xf32>
    %267 = arith.addf %266, %265 : vector<8x192xf32>
    %268 = arith.divf %266, %267 : vector<8x192xf32>
    %269 = vector.extract_strided_slice %262 {offsets = [0, 192], sizes = [8, 64], strides = [1, 1]} : vector<8x256xf32> to vector<8x64xf32>
    %270 = math.tanh %269 : vector<8x64xf32>
    %271 = vector.extract_strided_slice %268 {offsets = [0, 0], sizes = [8, 64], strides = [1, 1]} : vector<8x192xf32> to vector<8x64xf32>
    %272 = vector.extract_strided_slice %268 {offsets = [0, 64], sizes = [8, 64], strides = [1, 1]} : vector<8x192xf32> to vector<8x64xf32>
    %273 = vector.extract_strided_slice %268 {offsets = [0, 128], sizes = [8, 64], strides = [1, 1]} : vector<8x192xf32> to vector<8x64xf32>
    %274 = arith.mulf %272, %257 : vector<8x64xf32>
    %275 = arith.mulf %271, %270 : vector<8x64xf32>
    %276 = arith.addf %274, %275 : vector<8x64xf32>
    %277 = math.tanh %276 : vector<8x64xf32>
    %278 = arith.mulf %273, %277 : vector<8x64xf32>
    %c7_123 = arith.constant 7 : index
    %c0_124 = arith.constant 0 : index
    %c0_125 = arith.constant 0 : index
    %279 = vector.load %arg2[%c7_123, %c0_124, %c0_125] : memref<8x8x64xf32, #tpu.memory_space<vmem>>, vector<1x8x64xf32>
    %280 = vector.shape_cast %279 : vector<1x8x64xf32> to vector<8x64xf32>
    %cst_126 = arith.constant 5.000000e-01 : f32
    %281 = vector.broadcast %cst_126 : f32 to vector<8x64xf32>
    %282 = arith.cmpf ogt, %280, %281 : vector<8x64xf32>
    %283 = arith.select %282, %278, %256 : vector<8x64xi1>, vector<8x64xf32>
    %284 = arith.truncf %283 : vector<8x64xf32> to vector<8x64xbf16>
    %c0_127 = arith.constant 0 : index
    %c0_128 = arith.constant 0 : index
    %285 = vector.load %arg7[%c0_127, %c0_128] : memref<64x1024xbf16, #tpu.memory_space<vmem>>, vector<64x1024xbf16>
    %cst_129 = arith.constant dense<0.000000e+00> : vector<8x1024xf32>
    %286 = tpu.matmul %284, %285, %cst_129 {dimension_numbers = #tpu.dot_dimension_numbers<[1], [0], [0], [1], [0, 0, 1, 1], [], []>} : vector<8x64xbf16>, vector<64x1024xbf16>, vector<8x1024xf32> -> vector<8x1024xf32>
    %c0_130 = arith.constant 0 : index
    %c0_131 = arith.constant 0 : index
    %287 = vector.load %arg3[%c0_130, %c0_131] : memref<8x32xbf16, #tpu.memory_space<vmem>>, vector<8x32xbf16>
    %c0_132 = arith.constant 0 : index
    %c0_133 = arith.constant 0 : index
    %288 = vector.load %arg8[%c0_132, %c0_133] : memref<32x1024xbf16, #tpu.memory_space<vmem>>, vector<32x1024xbf16>
    %cst_134 = arith.constant dense<0.000000e+00> : vector<8x1024xf32>
    %289 = tpu.matmul %287, %288, %cst_134 {dimension_numbers = #tpu.dot_dimension_numbers<[1], [0], [0], [1], [0, 0, 1, 1], [], []>} : vector<8x32xbf16>, vector<32x1024xbf16>, vector<8x1024xf32> -> vector<8x1024xf32>
    %290 = arith.addf %286, %289 : vector<8x1024xf32>
    %c0_135 = arith.constant 0 : index
    %c0_136 = arith.constant 0 : index
    %291 = vector.load %arg9[%c0_135, %c0_136] : memref<1x1024xf32, #tpu.memory_space<vmem>>, vector<1x1024xf32>
    %292 = vector.broadcast %291 : vector<1x1024xf32> to vector<8x1024xf32>
    %293 = arith.addf %290, %292 : vector<8x1024xf32>
    %cst_137 = arith.constant 0.000000e+00 : f32
    %294 = vector.broadcast %cst_137 : f32 to vector<8x1024xf32>
    %295 = arith.maximumf %293, %294 : vector<8x1024xf32>
    %296 = arith.truncf %295 : vector<8x1024xf32> to vector<8x1024xbf16>
    %c0_138 = arith.constant 0 : index
    %c0_139 = arith.constant 0 : index
    %297 = vector.load %arg10[%c0_138, %c0_139] : memref<1024x128xbf16, #tpu.memory_space<vmem>>, vector<1024x128xbf16>
    %cst_140 = arith.constant dense<0.000000e+00> : vector<8x128xf32>
    %298 = tpu.matmul %296, %297, %cst_140 {dimension_numbers = #tpu.dot_dimension_numbers<[1], [0], [0], [1], [0, 0, 1, 1], [], []>} : vector<8x1024xbf16>, vector<1024x128xbf16>, vector<8x128xf32> -> vector<8x128xf32>
    %c0_141 = arith.constant 0 : index
    %c0_142 = arith.constant 0 : index
    %299 = vector.load %arg11[%c0_141, %c0_142] : memref<1x128xf32, #tpu.memory_space<vmem>>, vector<1x128xf32>
    %300 = vector.broadcast %299 : vector<1x128xf32> to vector<8x128xf32>
    %301 = arith.addf %298, %300 : vector<8x128xf32>
    %c0_143 = arith.constant 0 : index
    %c0_144 = arith.constant 0 : index
    %302 = vector.load %arg12[%c0_143, %c0_144] : memref<8x128xf32, #tpu.memory_space<vmem>>, vector<8x128xf32>
    tpu.vector_store %arg12[%c0_143, %c0_144], %301 {strides = array<i32>} : memref<8x128xf32, #tpu.memory_space<vmem>>, vector<8x128xf32>,
    return
  }
  func.func @transform_0(%arg0: i32) -> (i32, i32, i32) {
    %c0_i32 = arith.constant 0 : i32
    %c0_i32_0 = arith.constant 0 : i32
    %c0_i32_1 = arith.constant 0 : i32
    return %c0_i32, %arg0, %c0_i32_0 : i32, i32, i32
  }
  func.func @transform_1(%arg0: i32) -> (i32, i32, i32) {
    %c0_i32 = arith.constant 0 : i32
    %c0_i32_0 = arith.constant 0 : i32
    %c0_i32_1 = arith.constant 0 : i32
    return %c0_i32, %arg0, %c0_i32_0 : i32, i32, i32
  }
  func.func @transform_2(%arg0: i32) -> (i32, i32) {
    %c0_i32 = arith.constant 0 : i32
    %c0_i32_0 = arith.constant 0 : i32
    return %arg0, %c0_i32 : i32, i32
  }
  func.func @transform_3(%arg0: i32) -> (i32, i32) {
    %c0_i32 = arith.constant 0 : i32
    %c0_i32_0 = arith.constant 0 : i32
    %c0_i32_1 = arith.constant 0 : i32
    return %c0_i32, %c0_i32_0 : i32, i32
  }
  func.func @transform_4(%arg0: i32) -> (i32, i32) {
    %c0_i32 = arith.constant 0 : i32
    %c0_i32_0 = arith.constant 0 : i32
    %c0_i32_1 = arith.constant 0 : i32
    return %c0_i32, %c0_i32_0 : i32, i32
  }
  func.func @transform_5(%arg0: i32) -> (i32, i32) {
    %c0_i32 = arith.constant 0 : i32
    %c0_i32_0 = arith.constant 0 : i32
    %c0_i32_1 = arith.constant 0 : i32
    return %c0_i32, %c0_i32_0 : i32, i32
  }
  func.func @transform_6(%arg0: i32) -> (i32, i32) {
    %c0_i32 = arith.constant 0 : i32
    %c0_i32_0 = arith.constant 0 : i32
    %c0_i32_1 = arith.constant 0 : i32
    return %c0_i32, %c0_i32_0 : i32, i32
  }
  func.func @transform_7(%arg0: i32) -> (i32, i32) {
    %c0_i32 = arith.constant 0 : i32
    %c0_i32_0 = arith.constant 0 : i32
    %c0_i32_1 = arith.constant 0 : i32
    return %c0_i32, %c0_i32_0 : i32, i32
  }
  func.func @transform_8(%arg0: i32) -> (i32, i32) {
    %c0_i32 = arith.constant 0 : i32
    %c0_i32_0 = arith.constant 0 : i32
    %c0_i32_1 = arith.constant 0 : i32
    return %c0_i32, %c0_i32_0 : i32, i32
  }
  func.func @transform_9(%arg0: i32) -> (i32, i32) {
    %c0_i32 = arith.constant 0 : i32
    %c0_i32_0 = arith.constant 0 : i32
    %c0_i32_1 = arith.constant 0 : i32
    return %c0_i32, %c0_i32_0 : i32, i32
  }
  func.func @transform_10(%arg0: i32) -> (i32, i32) {
    %c0_i32 = arith.constant 0 : i32
    %c0_i32_0 = arith.constant 0 : i32
    %c0_i32_1 = arith.constant 0 : i32
    return %c0_i32, %c0_i32_0 : i32, i32
  }
  func.func @transform_11(%arg0: i32) -> (i32, i32) {
    %c0_i32 = arith.constant 0 : i32
    %c0_i32_0 = arith.constant 0 : i32
    return %arg0, %c0_i32 : i32, i32
  }
}

</mosaic_0001>

<llo_original>
// kernel: tpu_custom_call.1
$region0: #{tpu_custom_call.1}
  #allocation0 [shape = 'u32[]', space=smem, size = 0x4, offset = 0x4, fixed_abs, tag = 'smem constant byte address 0x4 - core index']
  #allocation1 [shape = 'u32[144,128]{1,0:T(1,128)}', space=vmem, size = 0x12000, scoped, tag = 'internal scratch']
  #allocation2 [shape = 'f32[8,8,256]{2,1,0:T(8,128)}', space=vmem, size = 0x10000, scoped, tag = 'scratch operand']
  %s0 = inlined_call_operand.hbm [shape: bf16[8,8,64], index: 0, kind: input, shape index: {}]
  %s1 = inlined_call_operand.hbm [shape: f32[8,8,64], index: 1, kind: input, shape index: {}]
  %s2 = inlined_call_operand.vmem [shape: bf16[8,32], index: 2, kind: input, shape index: {}]
  %s3 = inlined_call_operand.hbm [shape: bf16[64,256], index: 3, kind: input, shape index: {}]
  %s4 = inlined_call_operand.vmem [shape: f32[1,256], index: 4, kind: input, shape index: {}]
  %s5 = inlined_call_operand.hbm [shape: bf16[64,256], index: 5, kind: input, shape index: {}]
  %s6 = inlined_call_operand.hbm [shape: bf16[64,1024], index: 6, kind: input, shape index: {}]
  %s7 = inlined_call_operand.hbm [shape: bf16[32,1024], index: 7, kind: input, shape index: {}]
  %s8 = inlined_call_operand.vmem [shape: f32[1,1024], index: 8, kind: input, shape index: {}]
  %s9 = inlined_call_operand.hbm [shape: bf16[1024,128], index: 9, kind: input, shape index: {}]
  %s10 = inlined_call_operand.vmem [shape: f32[1,128], index: 10, kind: input, shape index: {}]
  %s11 = inlined_call_operand.hbm [shape: f32[8,128], index: 11, kind: output, shape index: {}]
  %s12 = sld [smem:[#allocation0]]
  $region82: #{tpu_custom_call.1} parent=0
    _
  %s14 = ssub.s32 1, %s12
  %s15 = scalar_select 0, %s14, %s12
  $region1: #{tpu_custom_call.1} parent=0
    #allocation3 [shape = 'u8[16384]{0}', space=vmem, size = 0x4000, scoped, tag = 'input window, operand 0, single buffered']
    #allocation4 [shape = 's32[1]{0}', space=sflag, size = 0x4, scoped, tag = 'scoped memory for tpu_custom_call.1']
    #allocation5 [shape = 's32[1]{0}', space=sflag, size = 0x4, scoped, tag = 'scoped memory for tpu_custom_call.1']
    #allocation6 [shape = 'u8[32768]{0}', space=vmem, size = 0x8000, scoped, tag = 'input window, operand 1, single buffered']
    #allocation7 [shape = 's32[1]{0}', space=sflag, size = 0x4, scoped, tag = 'scoped memory for tpu_custom_call.1']
    #allocation8 [shape = 'u8[32768]{0}', space=vmem, size = 0x8000, scoped, tag = 'input window, operand 3, single buffered']
    #allocation9 [shape = 'u8[32768]{0}', space=vmem, size = 0x8000, scoped, tag = 'input window, operand 5, single buffered']
    #allocation10 [shape = 's32[1]{0}', space=sflag, size = 0x4, scoped, tag = 'scoped memory for tpu_custom_call.1']
    #allocation11 [shape = 'u8[131072]{0}', space=vmem, size = 0x20000, scoped, tag = 'input window, operand 6, single buffered']
    #allocation12 [shape = 'u8[65536]{0}', space=vmem, size = 0x10000, scoped, tag = 'input window, operand 7, single buffered']
    #allocation13 [shape = 's32[1]{0}', space=sflag, size = 0x4, scoped, tag = 'scoped memory for tpu_custom_call.1']
    #allocation14 [shape = 'u8[262144]{0}', space=vmem, size = 0x40000, scoped, tag = 'input window, operand 9, single buffered']
    #allocation15 [shape = 'u8[4096]{0}', space=vmem, size = 0x1000, scoped, tag = 'output window, operand 0, single buffered']
    %16 = vsyncpa [#allocation4], 0
    %17 = vsyncpa [#allocation7], 0
    %18 = vsyncpa [#allocation10], 0
    %19 = vsyncpa [#allocation13], 0
    %20 = vsyncpa [#allocation5], 0
    // Predicated region
    $region2: #{tpu_custom_call.1} parent=1 // pred_check
      _
    $region3: #{tpu_custom_call.1} parent=1 // pred_check_branch
      %22 = sbr.rel (0) target = $region5
    $region4: #{tpu_custom_call.1} parent=1 // pred_region
      %s24 = ssub.s32 512, 512
      %25 = vsyncadd [#allocation4], %s24
      %s26 = sshll.u32 [#allocation3], 4
      %s27 = int_to_ptr.vmem [resolvable:$true] %s26
      %32 = dma.hbm_to_vmem [thread:$0]  %s0, 512, %s27, [#allocation4], 64, 64, 4
    $region5: #{tpu_custom_call.1} parent=1 // pred_fallthru
      _
    // Predicated region
    $region6: #{tpu_custom_call.1} parent=1 // pred_check
      _
    $region7: #{tpu_custom_call.1} parent=1 // pred_check_branch
      %34 = sbr.rel (0) target = $region9
    $region8: #{tpu_custom_call.1} parent=1 // pred_region
      %s36 = ssub.s32 1024, 1024
      %37 = vsyncadd [#allocation7], %s36
      %s38 = sshll.u32 [#allocation6], 4
      %s39 = int_to_ptr.vmem [resolvable:$true] %s38
      %44 = dma.hbm_to_vmem [thread:$0]  %s1, 1024, %s39, [#allocation7], 128, 128, 8
    $region9: #{tpu_custom_call.1} parent=1 // pred_fallthru
      _
    // Predicated region
    $region10: #{tpu_custom_call.1} parent=1 // pred_check
      _
    $region11: #{tpu_custom_call.1} parent=1 // pred_check_branch
      %46 = sbr.rel (0) target = $region13
    $region12: #{tpu_custom_call.1} parent=1 // pred_region
      _
    $region13: #{tpu_custom_call.1} parent=1 // pred_fallthru
      _
    // Predicated region
    $region14: #{tpu_custom_call.1} parent=1 // pred_check
      _
    $region15: #{tpu_custom_call.1} parent=1 // pred_check_branch
      %48 = sbr.rel (0) target = $region17
    $region16: #{tpu_custom_call.1} parent=1 // pred_region
      %s50 = ssub.s32 1024, 1024
      %51 = vsyncadd [#allocation7], %s50
      %s52 = sshll.u32 [#allocation8], 4
      %s53 = int_to_ptr.vmem [resolvable:$true] %s52
      %58 = dma.hbm_to_vmem [thread:$0]  %s3, 1024, %s53, [#allocation7], 128, 128, 8
    $region17: #{tpu_custom_call.1} parent=1 // pred_fallthru
      _
    // Predicated region
    $region18: #{tpu_custom_call.1} parent=1 // pred_check
      _
    $region19: #{tpu_custom_call.1} parent=1 // pred_check_branch
      %60 = sbr.rel (0) target = $region21
    $region20: #{tpu_custom_call.1} parent=1 // pred_region
      _
    $region21: #{tpu_custom_call.1} parent=1 // pred_fallthru
      _
    // Predicated region
    $region22: #{tpu_custom_call.1} parent=1 // pred_check
      _
    $region23: #{tpu_custom_call.1} parent=1 // pred_check_branch
      %62 = sbr.rel (0) target = $region25
    $region24: #{tpu_custom_call.1} parent=1 // pred_region
      %s64 = ssub.s32 1024, 1024
      %65 = vsyncadd [#allocation10], %s64
      %s66 = sshll.u32 [#allocation9], 4
      %s67 = int_to_ptr.vmem [resolvable:$true] %s66
      %72 = dma.hbm_to_vmem [thread:$0]  %s5, 1024, %s67, [#allocation10], 128, 128, 8
    $region25: #{tpu_custom_call.1} parent=1 // pred_fallthru
      _
    // Predicated region
    $region26: #{tpu_custom_call.1} parent=1 // pred_check
      _
    $region27: #{tpu_custom_call.1} parent=1 // pred_check_branch
      %74 = sbr.rel (0) target = $region29
    $region28: #{tpu_custom_call.1} parent=1 // pred_region
      %s76 = ssub.s32 4096, 4096
      %77 = vsyncadd [#allocation10], %s76
      %s78 = sshll.u32 [#allocation11], 4
      %s79 = int_to_ptr.vmem [resolvable:$true] %s78
      %84 = dma.hbm_to_vmem [thread:$0]  %s6, 4096, %s79, [#allocation10], 512, 512, 32
    $region29: #{tpu_custom_call.1} parent=1 // pred_fallthru
      _
    // Predicated region
    $region30: #{tpu_custom_call.1} parent=1 // pred_check
      _
    $region31: #{tpu_custom_call.1} parent=1 // pred_check_branch
      %86 = sbr.rel (0) target = $region33
    $region32: #{tpu_custom_call.1} parent=1 // pred_region
      %s88 = ssub.s32 2048, 2048
      %89 = vsyncadd [#allocation13], %s88
      %s90 = sshll.u32 [#allocation12], 4
      %s91 = int_to_ptr.vmem [resolvable:$true] %s90
      %96 = dma.hbm_to_vmem [thread:$0]  %s7, 2048, %s91, [#allocation13], 512, 512, 32
    $region33: #{tpu_custom_call.1} parent=1 // pred_fallthru
      _
    // Predicated region
    $region34: #{tpu_custom_call.1} parent=1 // pred_check
      _
    $region35: #{tpu_custom_call.1} parent=1 // pred_check_branch
      %98 = sbr.rel (0) target = $region37
    $region36: #{tpu_custom_call.1} parent=1 // pred_region
      _
    $region37: #{tpu_custom_call.1} parent=1 // pred_fallthru
      _
    // Predicated region
    $region38: #{tpu_custom_call.1} parent=1 // pred_check
      _
    $region39: #{tpu_custom_call.1} parent=1 // pred_check_branch
      %100 = sbr.rel (0) target = $region41
    $region40: #{tpu_custom_call.1} parent=1 // pred_region
      %s102 = ssub.s32 8192, 8192
      %103 = vsyncadd [#allocation13], %s102
      %s104 = sshll.u32 [#allocation14], 4
      %s105 = int_to_ptr.vmem [resolvable:$true] %s104
      %110 = dma.hbm_to_vmem [thread:$0]  %s9, 8192, %s105, [#allocation13], 64, 64, 4
    $region41: #{tpu_custom_call.1} parent=1 // pred_fallthru
      _
    // Predicated region
    $region42: #{tpu_custom_call.1} parent=1 // pred_check
      _
    $region43: #{tpu_custom_call.1} parent=1 // pred_check_branch
      %112 = sbr.rel (0) target = $region45
    $region44: #{tpu_custom_call.1} parent=1 // pred_region
      _
    $region45: #{tpu_custom_call.1} parent=1 // pred_fallthru
      _
    // Predicated region
    $region46: #{tpu_custom_call.1} parent=1 // pred_check
      _
    $region47: #{tpu_custom_call.1} parent=1 // pred_check_branch
      %114 = sbr.rel (0) target = $region49
    $region48: #{tpu_custom_call.1} parent=1 // pred_region
      %115 = dma.done [#allocation4], 512
    $region49: #{tpu_custom_call.1} parent=1 // pred_fallthru
      _
    // Predicated region
    $region50: #{tpu_custom_call.1} parent=1 // pred_check
      _
    $region51: #{tpu_custom_call.1} parent=1 // pred_check_branch
      %117 = sbr.rel (0) target = $region53
    $region52: #{tpu_custom_call.1} parent=1 // pred_region
      %118 = dma.done [#allocation7], 1024
    $region53: #{tpu_custom_call.1} parent=1 // pred_fallthru
      _
    // Predicated region
    $region54: #{tpu_custom_call.1} parent=1 // pred_check
      _
    $region55: #{tpu_custom_call.1} parent=1 // pred_check_branch
      %120 = sbr.rel (0) target = $region57
    $region56: #{tpu_custom_call.1} parent=1 // pred_region
      %121 = dma.done [#allocation7], 1024
    $region57: #{tpu_custom_call.1} parent=1 // pred_fallthru
      _
    // Predicated region
    $region58: #{tpu_custom_call.1} parent=1 // pred_check
      _
    $region59: #{tpu_custom_call.1} parent=1 // pred_check_branch
      %123 = sbr.rel (0) target = $region61
    $region60: #{tpu_custom_call.1} parent=1 // pred_region
      %124 = dma.done [#allocation10], 1024
    $region61: #{tpu_custom_call.1} parent=1 // pred_fallthru
      _
    // Predicated region
    $region62: #{tpu_custom_call.1} parent=1 // pred_check
      _
    $region63: #{tpu_custom_call.1} parent=1 // pred_check_branch
      %126 = sbr.rel (0) target = $region65
    $region64: #{tpu_custom_call.1} parent=1 // pred_region
      %127 = dma.done [#allocation10], 4096
    $region65: #{tpu_custom_call.1} parent=1 // pred_fallthru
      _
    // Predicated region
    $region66: #{tpu_custom_call.1} parent=1 // pred_check
      _
    $region67: #{tpu_custom_call.1} parent=1 // pred_check_branch
      %129 = sbr.rel (0) target = $region69
    $region68: #{tpu_custom_call.1} parent=1 // pred_region
      %130 = dma.done [#allocation13], 2048
    $region69: #{tpu_custom_call.1} parent=1 // pred_fallthru
      _
    // Predicated region
    $region70: #{tpu_custom_call.1} parent=1 // pred_check
      _
    $region71: #{tpu_custom_call.1} parent=1 // pred_check_branch
      %132 = sbr.rel (0) target = $region73
    $region72: #{tpu_custom_call.1} parent=1 // pred_region
      %133 = dma.done [#allocation13], 8192
    $region73: #{tpu_custom_call.1} parent=1 // pred_fallthru
      _
    %v135 = vld [vmem:[#allocation8] sm:$0xff]
    %v136 = vld [vmem:[#allocation8 + $0x8] sm:$0xff]
    %v137 = vld [vmem:[#allocation8 + $0x10] sm:$0xff]
    %v138 = vld [vmem:[#allocation8 + $0x18] sm:$0xff]
    %v139 = vld [vmem:[#allocation8 + $0x20] sm:$0xff]
    %v140 = vld [vmem:[#allocation8 + $0x28] sm:$0xff]
    %v141 = vld [vmem:[#allocation8 + $0x30] sm:$0xff]
    %v142 = vld [vmem:[#allocation8 + $0x38] sm:$0xff]
    %v143 = vld [vmem:[%s4] sm:$0x3]
    %v144 = vld [vmem:[#allocation3] sm:$0xf]
    %v146 = vlaneseq
    %v147 = vshrl.u32 %v146, 7
    %v148 = vsub.s32 0, %v147
    %v149 = vrot.slane %v143, %v148
    %v150 = vlaneseq
    %v151 = vshrl.u32 %v150, 7
    %v152 = vsub.s32 1, %v151
    %v153 = vrot.slane %v143, %v152
    %v164 = vunpack.c.l.b16 %v135
    %v165 = vunpack.c.h.b16 %v135
    %v166 = vunpack.c.l.b16 %v136
    %v167 = vunpack.c.h.b16 %v136
    %v168 = vunpack.c.l.b16 %v137
    %v169 = vunpack.c.h.b16 %v137
    %v170 = vunpack.c.l.b16 %v138
    %v171 = vunpack.c.h.b16 %v138
    %v172 = vunpack.c.l.b16 %v139
    %v173 = vunpack.c.h.b16 %v139
    %v174 = vunpack.c.l.b16 %v140
    %v175 = vunpack.c.h.b16 %v140
    %v176 = vunpack.c.l.b16 %v141
    %v177 = vunpack.c.h.b16 %v141
    %v178 = vunpack.c.l.b16 %v142
    %v179 = vunpack.c.h.b16 %v142
    %v180 = vpack.c.b16 %v166, %v164
    %v181 = vpack.c.b16 %v167, %v165
    %v182 = vpack.c.b16 %v170, %v168
    %v183 = vpack.c.b16 %v171, %v169
    %v184 = vpack.c.b16 %v174, %v172
    %v185 = vpack.c.b16 %v175, %v173
    %v186 = vpack.c.b16 %v178, %v176
    %v187 = vpack.c.b16 %v179, %v177
    %vm196 = vcmask 523264
    %v198 = vsel %vm196, %v144, 0
    %200 = vmatprep.subr.bf16.mxu0 %v181
    %201 = vmatpush1.bf16.msra.mxu0 %v180
    %202 = vmatprep.subr.bf16.mxu0 %v183
    %203 = vmatpush1.bf16.msra.mxu0 %v182
    %204 = vmatprep.subr.bf16.mxu0 %v185
    %205 = vmatpush1.bf16.msra.mxu0 %v184
    %206 = vmatprep.subr.bf16.mxu0 %v187
    %207 = vmatpush1.bf16.msra.mxu0 %v186
    %208 = vmatprep.subr.bf16.mxu0 0
    %209 = vmatpush1.bf16.msra.mxu0 0
    %210 = vmatprep.subr.bf16.mxu0 0
    %211 = vmatpush1.bf16.msra.mxu0 0
    %212 = vmatprep.subr.bf16.mxu0 0
    %213 = vmatpush1.bf16.msra.mxu0 0
    %214 = vmatprep.subr.bf16.mxu0 0
    %215 = vmatpush1.bf16.msra.mxu0 0
    %216 = vmatprep.subr.bf16.mxu0 0
    %217 = vmatpush1.bf16.msra.mxu0 0
    %218 = vmatprep.subr.bf16.mxu0 0
    %219 = vmatpush1.bf16.msra.mxu0 0
    %220 = vmatprep.subr.bf16.mxu0 0
    %221 = vmatpush1.bf16.msra.mxu0 0
    %222 = vmatprep.subr.bf16.mxu0 0
    %223 = vmatpush1.bf16.msra.mxu0 0
    %224 = vmatprep.subr.bf16.mxu0 0
    %225 = vmatpush1.bf16.msra.mxu0 0
    %226 = vmatprep.subr.bf16.mxu0 0
    %227 = vmatpush1.bf16.msra.mxu0 0
    %228 = vmatprep.subr.bf16.mxu0 0
    %229 = vmatpush1.bf16.msra.mxu0 0
    %230 = vmatprep.subr.bf16.mxu0 0
    %231 = vmatpush1.bf16.msra.mxu0 0
    %232 = vmatprep.mubr.bf16.mxu0 0
    %233 = vmatmul.mubr.bf16.gmra.mrb[0].mxu0 %v198
    %v234 = vpop.f32.mrb[0].mxu0
    %v235 = vadd.f32 %v149, %v234
    %v236 = vpop.f32.mrb[0].mxu0
    %v237 = vadd.f32 %v153, %v236
    %v238 = vpop.f32.mrb[0].mxu0
    %v239 = vpop.f32.mrb[0].mxu0
    %240 = vdwg.mxu0
    %241 = vst [vmem:[#allocation2] sm:$0xff] %v235
    %242 = vst [vmem:[#allocation2 + $0x8] sm:$0xff] %v237
    %s243 = scalar_lea.vmem [#allocation3], 4
    %v244 = vld [vmem:[%s243] sm:$0xf]
    %v246 = vsel %vm196, %v244, 0
    %248 = vmatprep.subr.bf16.mxu0 %v181
    %249 = vmatpush1.bf16.msra.mxu0 %v180
    %250 = vmatprep.subr.bf16.mxu0 %v183
    %251 = vmatpush1.bf16.msra.mxu0 %v182
    %252 = vmatprep.subr.bf16.mxu0 %v185
    %253 = vmatpush1.bf16.msra.mxu0 %v184
    %254 = vmatprep.subr.bf16.mxu0 %v187
    %255 = vmatpush1.bf16.msra.mxu0 %v186
    %256 = vmatprep.subr.bf16.mxu0 0
    %257 = vmatpush1.bf16.msra.mxu0 0
    %258 = vmatprep.subr.bf16.mxu0 0
    %259 = vmatpush1.bf16.msra.mxu0 0
    %260 = vmatprep.subr.bf16.mxu0 0
    %261 = vmatpush1.bf16.msra.mxu0 0
    %262 = vmatprep.subr.bf16.mxu0 0
    %263 = vmatpush1.bf16.msra.mxu0 0
    %264 = vmatprep.subr.bf16.mxu0 0
    %265 = vmatpush1.bf16.msra.mxu0 0
    %266 = vmatprep.subr.bf16.mxu0 0
    %267 = vmatpush1.bf16.msra.mxu0 0
    %268 = vmatprep.subr.bf16.mxu0 0
    %269 = vmatpush1.bf16.msra.mxu0 0
    %270 = vmatprep.subr.bf16.mxu0 0
    %271 = vmatpush1.bf16.msra.mxu0 0
    %272 = vmatprep.subr.bf16.mxu0 0
    %273 = vmatpush1.bf16.msra.mxu0 0
    %274 = vmatprep.subr.bf16.mxu0 0
    %275 = vmatpush1.bf16.msra.mxu0 0
    %276 = vmatprep.subr.bf16.mxu0 0
    %277 = vmatpush1.bf16.msra.mxu0 0
    %278 = vmatprep.subr.bf16.mxu0 0
    %279 = vmatpush1.bf16.msra.mxu0 0
    %280 = vmatprep.mubr.bf16.mxu0 0
    %281 = vmatmul.mubr.bf16.gmra.mrb[0].mxu0 %v246
    %v282 = vpop.f32.mrb[0].mxu0
    %v283 = vadd.f32 %v149, %v282
    %v284 = vpop.f32.mrb[0].mxu0
    %v285 = vadd.f32 %v153, %v284
    %v286 = vpop.f32.mrb[0].mxu0
    %v287 = vpop.f32.mrb[0].mxu0
    %288 = vdwg.mxu0
    %s289 = scalar_lea.vmem [#allocation2], 16
    %290 = vst [vmem:[%s289] sm:$0xff] %v283
    %291 = vst [vmem:[%s289 + $0x8] sm:$0xff] %v285
    %s292 = scalar_lea.vmem [#allocation3], 8
    %v293 = vld [vmem:[%s292] sm:$0xf]
    %v295 = vsel %vm196, %v293, 0
    %297 = vmatprep.subr.bf16.mxu0 %v181
    %298 = vmatpush1.bf16.msra.mxu0 %v180
    %299 = vmatprep.subr.bf16.mxu0 %v183
    %300 = vmatpush1.bf16.msra.mxu0 %v182
    %301 = vmatprep.subr.bf16.mxu0 %v185
    %302 = vmatpush1.bf16.msra.mxu0 %v184
    %303 = vmatprep.subr.bf16.mxu0 %v187
    %304 = vmatpush1.bf16.msra.mxu0 %v186
    %305 = vmatprep.subr.bf16.mxu0 0
    %306 = vmatpush1.bf16.msra.mxu0 0
    %307 = vmatprep.subr.bf16.mxu0 0
    %308 = vmatpush1.bf16.msra.mxu0 0
    %309 = vmatprep.subr.bf16.mxu0 0
    %310 = vmatpush1.bf16.msra.mxu0 0
    %311 = vmatprep.subr.bf16.mxu0 0
    %312 = vmatpush1.bf16.msra.mxu0 0
    %313 = vmatprep.subr.bf16.mxu0 0
    %314 = vmatpush1.bf16.msra.mxu0 0
    %315 = vmatprep.subr.bf16.mxu0 0
    %316 = vmatpush1.bf16.msra.mxu0 0
    %317 = vmatprep.subr.bf16.mxu0 0
    %318 = vmatpush1.bf16.msra.mxu0 0
    %319 = vmatprep.subr.bf16.mxu0 0
    %320 = vmatpush1.bf16.msra.mxu0 0
    %321 = vmatprep.subr.bf16.mxu0 0
    %322 = vmatpush1.bf16.msra.mxu0 0
    %323 = vmatprep.subr.bf16.mxu0 0
    %324 = vmatpush1.bf16.msra.mxu0 0
    %325 = vmatprep.subr.bf16.mxu0 0
    %326 = vmatpush1.bf16.msra.mxu0 0
    %327 = vmatprep.subr.bf16.mxu0 0
    %328 = vmatpush1.bf16.msra.mxu0 0
    %329 = vmatprep.mubr.bf16.mxu0 0
    %330 = vmatmul.mubr.bf16.gmra.mrb[0].mxu0 %v295
    %v331 = vpop.f32.mrb[0].mxu0
    %v332 = vadd.f32 %v149, %v331
    %v333 = vpop.f32.mrb[0].mxu0
    %v334 = vadd.f32 %v153, %v333
    %v335 = vpop.f32.mrb[0].mxu0
    %v336 = vpop.f32.mrb[0].mxu0
    %337 = vdwg.mxu0
    %s338 = scalar_lea.vmem [#allocation2], 32
    %339 = vst [vmem:[%s338] sm:$0xff] %v332
    %340 = vst [vmem:[%s338 + $0x8] sm:$0xff] %v334
    %s341 = scalar_lea.vmem [#allocation3], 12
    %v342 = vld [vmem:[%s341] sm:$0xf]
    %v344 = vsel %vm196, %v342, 0
    %346 = vmatprep.subr.bf16.mxu0 %v181
    %347 = vmatpush1.bf16.msra.mxu0 %v180
    %348 = vmatprep.subr.bf16.mxu0 %v183
    %349 = vmatpush1.bf16.msra.mxu0 %v182
    %350 = vmatprep.subr.bf16.mxu0 %v185
    %351 = vmatpush1.bf16.msra.mxu0 %v184
    %352 = vmatprep.subr.bf16.mxu0 %v187
    %353 = vmatpush1.bf16.msra.mxu0 %v186
    %354 = vmatprep.subr.bf16.mxu0 0
    %355 = vmatpush1.bf16.msra.mxu0 0
    %356 = vmatprep.subr.bf16.mxu0 0
    %357 = vmatpush1.bf16.msra.mxu0 0
    %358 = vmatprep.subr.bf16.mxu0 0
    %359 = vmatpush1.bf16.msra.mxu0 0
    %360 = vmatprep.subr.bf16.mxu0 0
    %361 = vmatpush1.bf16.msra.mxu0 0
    %362 = vmatprep.subr.bf16.mxu0 0
    %363 = vmatpush1.bf16.msra.mxu0 0
    %364 = vmatprep.subr.bf16.mxu0 0
    %365 = vmatpush1.bf16.msra.mxu0 0
    %366 = vmatprep.subr.bf16.mxu0 0
    %367 = vmatpush1.bf16.msra.mxu0 0
    %368 = vmatprep.subr.bf16.mxu0 0
    %369 = vmatpush1.bf16.msra.mxu0 0
    %370 = vmatprep.subr.bf16.mxu0 0
    %371 = vmatpush1.bf16.msra.mxu0 0
    %372 = vmatprep.subr.bf16.mxu0 0
    %373 = vmatpush1.bf16.msra.mxu0 0
    %374 = vmatprep.subr.bf16.mxu0 0
    %375 = vmatpush1.bf16.msra.mxu0 0
    %376 = vmatprep.subr.bf16.mxu0 0
    %377 = vmatpush1.bf16.msra.mxu0 0
    %378 = vmatprep.mubr.bf16.mxu0 0
    %379 = vmatmul.mubr.bf16.gmra.mrb[0].mxu0 %v344
    %v380 = vpop.f32.mrb[0].mxu0
    %v381 = vadd.f32 %v149, %v380
    %v382 = vpop.f32.mrb[0].mxu0
    %v383 = vadd.f32 %v153, %v382
    %v384 = vpop.f32.mrb[0].mxu0
    %v385 = vpop.f32.mrb[0].mxu0
    %386 = vdwg.mxu0
    %s387 = scalar_lea.vmem [#allocation2], 48
    %388 = vst [vmem:[%s387] sm:$0xff] %v381
    %389 = vst [vmem:[%s387 + $0x8] sm:$0xff] %v383
    %s390 = scalar_lea.vmem [#allocation3], 16
    %v391 = vld [vmem:[%s390] sm:$0xf]
    %v393 = vsel %vm196, %v391, 0
    %395 = vmatprep.subr.bf16.mxu0 %v181
    %396 = vmatpush1.bf16.msra.mxu0 %v180
    %397 = vmatprep.subr.bf16.mxu0 %v183
    %398 = vmatpush1.bf16.msra.mxu0 %v182
    %399 = vmatprep.subr.bf16.mxu0 %v185
    %400 = vmatpush1.bf16.msra.mxu0 %v184
    %401 = vmatprep.subr.bf16.mxu0 %v187
    %402 = vmatpush1.bf16.msra.mxu0 %v186
    %403 = vmatprep.subr.bf16.mxu0 0
    %404 = vmatpush1.bf16.msra.mxu0 0
    %405 = vmatprep.subr.bf16.mxu0 0
    %406 = vmatpush1.bf16.msra.mxu0 0
    %407 = vmatprep.subr.bf16.mxu0 0
    %408 = vmatpush1.bf16.msra.mxu0 0
    %409 = vmatprep.subr.bf16.mxu0 0
    %410 = vmatpush1.bf16.msra.mxu0 0
    %411 = vmatprep.subr.bf16.mxu0 0
    %412 = vmatpush1.bf16.msra.mxu0 0
    %413 = vmatprep.subr.bf16.mxu0 0
    %414 = vmatpush1.bf16.msra.mxu0 0
    %415 = vmatprep.subr.bf16.mxu0 0
    %416 = vmatpush1.bf16.msra.mxu0 0
    %417 = vmatprep.subr.bf16.mxu0 0
    %418 = vmatpush1.bf16.msra.mxu0 0
    %419 = vmatprep.subr.bf16.mxu0 0
    %420 = vmatpush1.bf16.msra.mxu0 0
    %421 = vmatprep.subr.bf16.mxu0 0
    %422 = vmatpush1.bf16.msra.mxu0 0
    %423 = vmatprep.subr.bf16.mxu0 0
    %424 = vmatpush1.bf16.msra.mxu0 0
    %425 = vmatprep.subr.bf16.mxu0 0
    %426 = vmatpush1.bf16.msra.mxu0 0
    %427 = vmatprep.mubr.bf16.mxu0 0
    %428 = vmatmul.mubr.bf16.gmra.mrb[0].mxu0 %v393
    %v429 = vpop.f32.mrb[0].mxu0
    %v430 = vadd.f32 %v149, %v429
    %v431 = vpop.f32.mrb[0].mxu0
    %v432 = vadd.f32 %v153, %v431
    %v433 = vpop.f32.mrb[0].mxu0
    %v434 = vpop.f32.mrb[0].mxu0
    %435 = vdwg.mxu0
    %s436 = scalar_lea.vmem [#allocation2], 64
    %437 = vst [vmem:[%s436] sm:$0xff] %v430
    %438 = vst [vmem:[%s436 + $0x8] sm:$0xff] %v432
    %s439 = scalar_lea.vmem [#allocation3], 20
    %v440 = vld [vmem:[%s439] sm:$0xf]
    %v442 = vsel %vm196, %v440, 0
    %444 = vmatprep.subr.bf16.mxu0 %v181
    %445 = vmatpush1.bf16.msra.mxu0 %v180
    %446 = vmatprep.subr.bf16.mxu0 %v183
    %447 = vmatpush1.bf16.msra.mxu0 %v182
    %448 = vmatprep.subr.bf16.mxu0 %v185
    %449 = vmatpush1.bf16.msra.mxu0 %v184
    %450 = vmatprep.subr.bf16.mxu0 %v187
    %451 = vmatpush1.bf16.msra.mxu0 %v186
    %452 = vmatprep.subr.bf16.mxu0 0
    %453 = vmatpush1.bf16.msra.mxu0 0
    %454 = vmatprep.subr.bf16.mxu0 0
    %455 = vmatpush1.bf16.msra.mxu0 0
    %456 = vmatprep.subr.bf16.mxu0 0
    %457 = vmatpush1.bf16.msra.mxu0 0
    %458 = vmatprep.subr.bf16.mxu0 0
    %459 = vmatpush1.bf16.msra.mxu0 0
    %460 = vmatprep.subr.bf16.mxu0 0
    %461 = vmatpush1.bf16.msra.mxu0 0
    %462 = vmatprep.subr.bf16.mxu0 0
    %463 = vmatpush1.bf16.msra.mxu0 0
    %464 = vmatprep.subr.bf16.mxu0 0
    %465 = vmatpush1.bf16.msra.mxu0 0
    %466 = vmatprep.subr.bf16.mxu0 0
    %467 = vmatpush1.bf16.msra.mxu0 0
    %468 = vmatprep.subr.bf16.mxu0 0
    %469 = vmatpush1.bf16.msra.mxu0 0
    %470 = vmatprep.subr.bf16.mxu0 0
    %471 = vmatpush1.bf16.msra.mxu0 0
    %472 = vmatprep.subr.bf16.mxu0 0
    %473 = vmatpush1.bf16.msra.mxu0 0
    %474 = vmatprep.subr.bf16.mxu0 0
    %475 = vmatpush1.bf16.msra.mxu0 0
    %476 = vmatprep.mubr.bf16.mxu0 0
    %477 = vmatmul.mubr.bf16.gmra.mrb[0].mxu0 %v442
    %v478 = vpop.f32.mrb[0].mxu0
    %v479 = vadd.f32 %v149, %v478
    %v480 = vpop.f32.mrb[0].mxu0
    %v481 = vadd.f32 %v153, %v480
    %v482 = vpop.f32.mrb[0].mxu0
    %v483 = vpop.f32.mrb[0].mxu0
    %484 = vdwg.mxu0
    %s485 = scalar_lea.vmem [#allocation2], 80
    %486 = vst [vmem:[%s485] sm:$0xff] %v479
    %487 = vst [vmem:[%s485 + $0x8] sm:$0xff] %v481
    %s488 = scalar_lea.vmem [#allocation3], 24
    %v489 = vld [vmem:[%s488] sm:$0xf]
    %v491 = vsel %vm196, %v489, 0
    %493 = vmatprep.subr.bf16.mxu0 %v181
    %494 = vmatpush1.bf16.msra.mxu0 %v180
    %495 = vmatprep.subr.bf16.mxu0 %v183
    %496 = vmatpush1.bf16.msra.mxu0 %v182
    %497 = vmatprep.subr.bf16.mxu0 %v185
    %498 = vmatpush1.bf16.msra.mxu0 %v184
    %499 = vmatprep.subr.bf16.mxu0 %v187
    %500 = vmatpush1.bf16.msra.mxu0 %v186
    %501 = vmatprep.subr.bf16.mxu0 0
    %502 = vmatpush1.bf16.msra.mxu0 0
    %503 = vmatprep.subr.bf16.mxu0 0
    %504 = vmatpush1.bf16.msra.mxu0 0
    %505 = vmatprep.subr.bf16.mxu0 0
    %506 = vmatpush1.bf16.msra.mxu0 0
    %507 = vmatprep.subr.bf16.mxu0 0
    %508 = vmatpush1.bf16.msra.mxu0 0
    %509 = vmatprep.subr.bf16.mxu0 0
    %510 = vmatpush1.bf16.msra.mxu0 0
    %511 = vmatprep.subr.bf16.mxu0 0
    %512 = vmatpush1.bf16.msra.mxu0 0
    %513 = vmatprep.subr.bf16.mxu0 0
    %514 = vmatpush1.bf16.msra.mxu0 0
    %515 = vmatprep.subr.bf16.mxu0 0
    %516 = vmatpush1.bf16.msra.mxu0 0
    %517 = vmatprep.subr.bf16.mxu0 0
    %518 = vmatpush1.bf16.msra.mxu0 0
    %519 = vmatprep.subr.bf16.mxu0 0
    %520 = vmatpush1.bf16.msra.mxu0 0
    %521 = vmatprep.subr.bf16.mxu0 0
    %522 = vmatpush1.bf16.msra.mxu0 0
    %523 = vmatprep.subr.bf16.mxu0 0
    %524 = vmatpush1.bf16.msra.mxu0 0
    %525 = vmatprep.mubr.bf16.mxu0 0
    %526 = vmatmul.mubr.bf16.gmra.mrb[0].mxu0 %v491
    %v527 = vpop.f32.mrb[0].mxu0
    %v528 = vadd.f32 %v149, %v527
    %v529 = vpop.f32.mrb[0].mxu0
    %v530 = vadd.f32 %v153, %v529
    %v531 = vpop.f32.mrb[0].mxu0
    %v532 = vpop.f32.mrb[0].mxu0
    %533 = vdwg.mxu0
    %s534 = scalar_lea.vmem [#allocation2], 96
    %535 = vst [vmem:[%s534] sm:$0xff] %v528
    %536 = vst [vmem:[%s534 + $0x8] sm:$0xff] %v530
    %s537 = scalar_lea.vmem [#allocation3], 28
    %v538 = vld [vmem:[%s537] sm:$0xf]
    %v540 = vsel %vm196, %v538, 0
    %542 = vmatprep.subr.bf16.mxu0 %v181
    %543 = vmatpush1.bf16.msra.mxu0 %v180
    %544 = vmatprep.subr.bf16.mxu0 %v183
    %545 = vmatpush1.bf16.msra.mxu0 %v182
    %546 = vmatprep.subr.bf16.mxu0 %v185
    %547 = vmatpush1.bf16.msra.mxu0 %v184
    %548 = vmatprep.subr.bf16.mxu0 %v187
    %549 = vmatpush1.bf16.msra.mxu0 %v186
    %550 = vmatprep.subr.bf16.mxu0 0
    %551 = vmatpush1.bf16.msra.mxu0 0
    %552 = vmatprep.subr.bf16.mxu0 0
    %553 = vmatpush1.bf16.msra.mxu0 0
    %554 = vmatprep.subr.bf16.mxu0 0
    %555 = vmatpush1.bf16.msra.mxu0 0
    %556 = vmatprep.subr.bf16.mxu0 0
    %557 = vmatpush1.bf16.msra.mxu0 0
    %558 = vmatprep.subr.bf16.mxu0 0
    %559 = vmatpush1.bf16.msra.mxu0 0
    %560 = vmatprep.subr.bf16.mxu0 0
    %561 = vmatpush1.bf16.msra.mxu0 0
    %562 = vmatprep.subr.bf16.mxu0 0
    %563 = vmatpush1.bf16.msra.mxu0 0
    %564 = vmatprep.subr.bf16.mxu0 0
    %565 = vmatpush1.bf16.msra.mxu0 0
    %566 = vmatprep.subr.bf16.mxu0 0
    %567 = vmatpush1.bf16.msra.mxu0 0
    %568 = vmatprep.subr.bf16.mxu0 0
    %569 = vmatpush1.bf16.msra.mxu0 0
    %570 = vmatprep.subr.bf16.mxu0 0
    %571 = vmatpush1.bf16.msra.mxu0 0
    %572 = vmatprep.subr.bf16.mxu0 0
    %573 = vmatpush1.bf16.msra.mxu0 0
    %574 = vmatprep.mubr.bf16.mxu0 0
    %575 = vmatmul.mubr.bf16.gmra.mrb[0].mxu0 %v540
    %v576 = vpop.f32.mrb[0].mxu0
    %v577 = vadd.f32 %v149, %v576
    %v578 = vpop.f32.mrb[0].mxu0
    %v579 = vadd.f32 %v153, %v578
    %v580 = vpop.f32.mrb[0].mxu0
    %v581 = vpop.f32.mrb[0].mxu0
    %582 = vdwg.mxu0
    %s583 = scalar_lea.vmem [#allocation2], 112
    %584 = vst [vmem:[%s583] sm:$0xff] %v577
    %585 = vst [vmem:[%s583 + $0x8] sm:$0xff] %v579
    %v586 = vld [vmem:[#allocation9] sm:$0xff]
    %v587 = vld [vmem:[#allocation9 + $0x8] sm:$0xff]
    %v588 = vld [vmem:[#allocation9 + $0x10] sm:$0xff]
    %v589 = vld [vmem:[#allocation9 + $0x18] sm:$0xff]
    %v590 = vld [vmem:[#allocation9 + $0x20] sm:$0xff]
    %v591 = vld [vmem:[#allocation9 + $0x28] sm:$0xff]
    %v592 = vld [vmem:[#allocation9 + $0x30] sm:$0xff]
    %v593 = vld [vmem:[#allocation9 + $0x38] sm:$0xff]
    %v594 = vld [vmem:[#allocation2] sm:$0xff]
    %v595 = vld [vmem:[#allocation2 + $0x8] sm:$0xff]
    %v604 = vunpack.c.l.b16 %v586
    %v605 = vunpack.c.h.b16 %v586
    %v606 = vunpack.c.l.b16 %v587
    %v607 = vunpack.c.h.b16 %v587
    %v608 = vunpack.c.l.b16 %v588
    %v609 = vunpack.c.h.b16 %v588
    %v610 = vunpack.c.l.b16 %v589
    %v611 = vunpack.c.h.b16 %v589
    %v612 = vunpack.c.l.b16 %v590
    %v613 = vunpack.c.h.b16 %v590
    %v614 = vunpack.c.l.b16 %v591
    %v615 = vunpack.c.h.b16 %v591
    %v616 = vunpack.c.l.b16 %v592
    %v617 = vunpack.c.h.b16 %v592
    %v618 = vunpack.c.l.b16 %v593
    %v619 = vunpack.c.h.b16 %v593
    %v620 = vpack.c.b16 %v606, %v604
    %v621 = vpack.c.b16 %v607, %v605
    %v622 = vpack.c.b16 %v610, %v608
    %v623 = vpack.c.b16 %v611, %v609
    %v624 = vpack.c.b16 %v614, %v612
    %v625 = vpack.c.b16 %v615, %v613
    %v626 = vpack.c.b16 %v618, %v616
    %v627 = vpack.c.b16 %v619, %v617
    %v637 = vsel %vm196, 0, 0
    %639 = vmatprep.subr.bf16.mxu0 %v621
    %640 = vmatpush1.bf16.msra.mxu0 %v620
    %641 = vmatprep.subr.bf16.mxu0 %v623
    %642 = vmatpush1.bf16.msra.mxu0 %v622
    %643 = vmatprep.subr.bf16.mxu0 %v625
    %644 = vmatpush1.bf16.msra.mxu0 %v624
    %645 = vmatprep.subr.bf16.mxu0 %v627
    %646 = vmatpush1.bf16.msra.mxu0 %v626
    %647 = vmatprep.subr.bf16.mxu0 0
    %648 = vmatpush1.bf16.msra.mxu0 0
    %649 = vmatprep.subr.bf16.mxu0 0
    %650 = vmatpush1.bf16.msra.mxu0 0
    %651 = vmatprep.subr.bf16.mxu0 0
    %652 = vmatpush1.bf16.msra.mxu0 0
    %653 = vmatprep.subr.bf16.mxu0 0
    %654 = vmatpush1.bf16.msra.mxu0 0
    %655 = vmatprep.subr.bf16.mxu0 0
    %656 = vmatpush1.bf16.msra.mxu0 0
    %657 = vmatprep.subr.bf16.mxu0 0
    %658 = vmatpush1.bf16.msra.mxu0 0
    %659 = vmatprep.subr.bf16.mxu0 0
    %660 = vmatpush1.bf16.msra.mxu0 0
    %661 = vmatprep.subr.bf16.mxu0 0
    %662 = vmatpush1.bf16.msra.mxu0 0
    %663 = vmatprep.subr.bf16.mxu0 0
    %664 = vmatpush1.bf16.msra.mxu0 0
    %665 = vmatprep.subr.bf16.mxu0 0
    %666 = vmatpush1.bf16.msra.mxu0 0
    %667 = vmatprep.subr.bf16.mxu0 0
    %668 = vmatpush1.bf16.msra.mxu0 0
    %669 = vmatprep.subr.bf16.mxu0 0
    %670 = vmatpush1.bf16.msra.mxu0 0
    %671 = vmatprep.mubr.bf16.mxu0 0
    %672 = vmatmul.mubr.bf16.gmra.mrb[0].mxu0 %v637
    %v673 = vpop.f32.mrb[0].mxu0
    %v674 = vadd.f32 %v594, %v673
    %v675 = vpop.f32.mrb[0].mxu0
    %v676 = vadd.f32 %v595, %v675
    %v677 = vpop.f32.mrb[0].mxu0
    %v678 = vpop.f32.mrb[0].mxu0
    %679 = vdwg.mxu0
    %v680 = vxor.u32 %v674, 2147483648
    %v681 = vxor.u32 %v676, 2147483648
    %v682 = vmul.f32 %v680, 1.442695
    %v683 = vpow.pop %v682
    %v684 = vmul.f32 %v681, 1.442695
    %v685 = vpow.pop %v684
    %v686 = vadd.f32 %v683, 1.0
    %v687 = vadd.f32 %v685, 1.0
    %v688 = vrcp.pop %v686
    %v689 = vmul.f32 1.0, %v688
    %v690 = vrcp.pop %v687
    %v691 = vmul.f32 1.0, %v690
    %v692 = vtanh.pop %v676
    %v693 = vmul.f32 %v689, 0.0
    %695 = vrot.lane.b32.xlu0 %v692, 64
    %v696 = vpop.permute.xlu0 %695
    %v698 = vmul.f32 %v689, %v696
    %700 = vrot.lane.b32.xlu0 %v698, 64
    %v701 = vpop.permute.xlu0 %700
    %v703 = vadd.f32 %v693, %v701
    %v704 = vtanh.pop %v703
    %706 = vrot.lane.b32.xlu0 %v704, 64
    %v707 = vpop.permute.xlu0 %706
    %v709 = vmul.f32 %v691, %v707
    %v710 = vld [vmem:[#allocation6] sm:$0xff]
    %vm711 = vcmp.gt.f32.partialorder %v710, 0.5
    %v712 = vsel %vm711, %v709, 0.0
    %714 = vrot.lane.b32.xlu0 %v703, 64
    %v715 = vpop.permute.xlu0 %714
    %v717 = vsel %vm711, %v715, 0.0
    %v718 = vpack.c.bf16 %v712, %v712
    %v719 = vld [vmem:[%s289] sm:$0xff]
    %v720 = vld [vmem:[%s289 + $0x8] sm:$0xff]
    %v722 = vsel %vm196, %v718, 0
    %724 = vmatprep.subr.bf16.mxu0 %v621
    %725 = vmatpush1.bf16.msra.mxu0 %v620
    %726 = vmatprep.subr.bf16.mxu0 %v623
    %727 = vmatpush1.bf16.msra.mxu0 %v622
    %728 = vmatprep.subr.bf16.mxu0 %v625
    %729 = vmatpush1.bf16.msra.mxu0 %v624
    %730 = vmatprep.subr.bf16.mxu0 %v627
    %731 = vmatpush1.bf16.msra.mxu0 %v626
    %732 = vmatprep.subr.bf16.mxu0 0
    %733 = vmatpush1.bf16.msra.mxu0 0
    %734 = vmatprep.subr.bf16.mxu0 0
    %735 = vmatpush1.bf16.msra.mxu0 0
    %736 = vmatprep.subr.bf16.mxu0 0
    %737 = vmatpush1.bf16.msra.mxu0 0
    %738 = vmatprep.subr.bf16.mxu0 0
    %739 = vmatpush1.bf16.msra.mxu0 0
    %740 = vmatprep.subr.bf16.mxu0 0
    %741 = vmatpush1.bf16.msra.mxu0 0
    %742 = vmatprep.subr.bf16.mxu0 0
    %743 = vmatpush1.bf16.msra.mxu0 0
    %744 = vmatprep.subr.bf16.mxu0 0
    %745 = vmatpush1.bf16.msra.mxu0 0
    %746 = vmatprep.subr.bf16.mxu0 0
    %747 = vmatpush1.bf16.msra.mxu0 0
    %748 = vmatprep.subr.bf16.mxu0 0
    %749 = vmatpush1.bf16.msra.mxu0 0
    %750 = vmatprep.subr.bf16.mxu0 0
    %751 = vmatpush1.bf16.msra.mxu0 0
    %752 = vmatprep.subr.bf16.mxu0 0
    %753 = vmatpush1.bf16.msra.mxu0 0
    %754 = vmatprep.subr.bf16.mxu0 0
    %755 = vmatpush1.bf16.msra.mxu0 0
    %756 = vmatprep.mubr.bf16.mxu0 0
    %757 = vmatmul.mubr.bf16.gmra.mrb[0].mxu0 %v722
    %v758 = vpop.f32.mrb[0].mxu0
    %v759 = vadd.f32 %v719, %v758
    %v760 = vpop.f32.mrb[0].mxu0
    %v761 = vadd.f32 %v720, %v760
    %v762 = vpop.f32.mrb[0].mxu0
    %v763 = vpop.f32.mrb[0].mxu0
    %764 = vdwg.mxu0
    %v765 = vxor.u32 %v759, 2147483648
    %v766 = vxor.u32 %v761, 2147483648
    %v767 = vmul.f32 %v765, 1.442695
    %v768 = vpow.pop %v767
    %v769 = vmul.f32 %v766, 1.442695
    %v770 = vpow.pop %v769
    %v771 = vadd.f32 %v768, 1.0
    %v772 = vadd.f32 %v770, 1.0
    %v773 = vrcp.pop %v771
    %v774 = vmul.f32 1.0, %v773
    %v775 = vrcp.pop %v772
    %v776 = vmul.f32 1.0, %v775
    %v777 = vtanh.pop %v761
    %779 = vrot.lane.b32.xlu0 %v717, 64
    %v780 = vpop.permute.xlu0 %779
    %v782 = vmul.f32 %v774, %v780
    %784 = vrot.lane.b32.xlu0 %v777, 64
    %v785 = vpop.permute.xlu0 %784
    %v787 = vmul.f32 %v774, %v785
    %789 = vrot.lane.b32.xlu0 %v787, 64
    %v790 = vpop.permute.xlu0 %789
    %v792 = vadd.f32 %v782, %v790
    %v793 = vtanh.pop %v792
    %795 = vrot.lane.b32.xlu0 %v793, 64
    %v796 = vpop.permute.xlu0 %795
    %v798 = vmul.f32 %v776, %v796
    %s799 = scalar_lea.vmem [#allocation6], 8
    %v800 = vld [vmem:[%s799] sm:$0xff]
    %vm801 = vcmp.gt.f32.partialorder %v800, 0.5
    %v802 = vsel %vm801, %v798, %v712
    %804 = vrot.lane.b32.xlu0 %v792, 64
    %v805 = vpop.permute.xlu0 %804
    %v807 = vsel %vm801, %v805, %v717
    %v808 = vpack.c.bf16 %v802, %v802
    %v809 = vld [vmem:[%s338] sm:$0xff]
    %v810 = vld [vmem:[%s338 + $0x8] sm:$0xff]
    %v812 = vsel %vm196, %v808, 0
    %814 = vmatprep.subr.bf16.mxu0 %v621
    %815 = vmatpush1.bf16.msra.mxu0 %v620
    %816 = vmatprep.subr.bf16.mxu0 %v623
    %817 = vmatpush1.bf16.msra.mxu0 %v622
    %818 = vmatprep.subr.bf16.mxu0 %v625
    %819 = vmatpush1.bf16.msra.mxu0 %v624
    %820 = vmatprep.subr.bf16.mxu0 %v627
    %821 = vmatpush1.bf16.msra.mxu0 %v626
    %822 = vmatprep.subr.bf16.mxu0 0
    %823 = vmatpush1.bf16.msra.mxu0 0
    %824 = vmatprep.subr.bf16.mxu0 0
    %825 = vmatpush1.bf16.msra.mxu0 0
    %826 = vmatprep.subr.bf16.mxu0 0
    %827 = vmatpush1.bf16.msra.mxu0 0
    %828 = vmatprep.subr.bf16.mxu0 0
    %829 = vmatpush1.bf16.msra.mxu0 0
    %830 = vmatprep.subr.bf16.mxu0 0
    %831 = vmatpush1.bf16.msra.mxu0 0
    %832 = vmatprep.subr.bf16.mxu0 0
    %833 = vmatpush1.bf16.msra.mxu0 0
    %834 = vmatprep.subr.bf16.mxu0 0
    %835 = vmatpush1.bf16.msra.mxu0 0
    %836 = vmatprep.subr.bf16.mxu0 0
    %837 = vmatpush1.bf16.msra.mxu0 0
    %838 = vmatprep.subr.bf16.mxu0 0
    %839 = vmatpush1.bf16.msra.mxu0 0
    %840 = vmatprep.subr.bf16.mxu0 0
    %841 = vmatpush1.bf16.msra.mxu0 0
    %842 = vmatprep.subr.bf16.mxu0 0
    %843 = vmatpush1.bf16.msra.mxu0 0
    %844 = vmatprep.subr.bf16.mxu0 0
    %845 = vmatpush1.bf16.msra.mxu0 0
    %846 = vmatprep.mubr.bf16.mxu0 0
    %847 = vmatmul.mubr.bf16.gmra.mrb[0].mxu0 %v812
    %v848 = vpop.f32.mrb[0].mxu0
    %v849 = vadd.f32 %v809, %v848
    %v850 = vpop.f32.mrb[0].mxu0
    %v851 = vadd.f32 %v810, %v850
    %v852 = vpop.f32.mrb[0].mxu0
    %v853 = vpop.f32.mrb[0].mxu0
    %854 = vdwg.mxu0
    %v855 = vxor.u32 %v849, 2147483648
    %v856 = vxor.u32 %v851, 2147483648
    %v857 = vmul.f32 %v855, 1.442695
    %v858 = vpow.pop %v857
    %v859 = vmul.f32 %v856, 1.442695
    %v860 = vpow.pop %v859
    %v861 = vadd.f32 %v858, 1.0
    %v862 = vadd.f32 %v860, 1.0
    %v863 = vrcp.pop %v861
    %v864 = vmul.f32 1.0, %v863
    %v865 = vrcp.pop %v862
    %v866 = vmul.f32 1.0, %v865
    %v867 = vtanh.pop %v851
    %869 = vrot.lane.b32.xlu0 %v807, 64
    %v870 = vpop.permute.xlu0 %869
    %v872 = vmul.f32 %v864, %v870
    %874 = vrot.lane.b32.xlu0 %v867, 64
    %v875 = vpop.permute.xlu0 %874
    %v877 = vmul.f32 %v864, %v875
    %879 = vrot.lane.b32.xlu0 %v877, 64
    %v880 = vpop.permute.xlu0 %879
    %v882 = vadd.f32 %v872, %v880
    %v883 = vtanh.pop %v882
    %885 = vrot.lane.b32.xlu0 %v883, 64
    %v886 = vpop.permute.xlu0 %885
    %v888 = vmul.f32 %v866, %v886
    %s889 = scalar_lea.vmem [#allocation6], 16
    %v890 = vld [vmem:[%s889] sm:$0xff]
    %vm891 = vcmp.gt.f32.partialorder %v890, 0.5
    %v892 = vsel %vm891, %v888, %v802
    %894 = vrot.lane.b32.xlu0 %v882, 64
    %v895 = vpop.permute.xlu0 %894
    %v897 = vsel %vm891, %v895, %v807
    %v898 = vpack.c.bf16 %v892, %v892
    %v899 = vld [vmem:[%s387] sm:$0xff]
    %v900 = vld [vmem:[%s387 + $0x8] sm:$0xff]
    %v902 = vsel %vm196, %v898, 0
    %904 = vmatprep.subr.bf16.mxu0 %v621
    %905 = vmatpush1.bf16.msra.mxu0 %v620
    %906 = vmatprep.subr.bf16.mxu0 %v623
    %907 = vmatpush1.bf16.msra.mxu0 %v622
    %908 = vmatprep.subr.bf16.mxu0 %v625
    %909 = vmatpush1.bf16.msra.mxu0 %v624
    %910 = vmatprep.subr.bf16.mxu0 %v627
    %911 = vmatpush1.bf16.msra.mxu0 %v626
    %912 = vmatprep.subr.bf16.mxu0 0
    %913 = vmatpush1.bf16.msra.mxu0 0
    %914 = vmatprep.subr.bf16.mxu0 0
    %915 = vmatpush1.bf16.msra.mxu0 0
    %916 = vmatprep.subr.bf16.mxu0 0
    %917 = vmatpush1.bf16.msra.mxu0 0
    %918 = vmatprep.subr.bf16.mxu0 0
    %919 = vmatpush1.bf16.msra.mxu0 0
    %920 = vmatprep.subr.bf16.mxu0 0
    %921 = vmatpush1.bf16.msra.mxu0 0
    %922 = vmatprep.subr.bf16.mxu0 0
    %923 = vmatpush1.bf16.msra.mxu0 0
    %924 = vmatprep.subr.bf16.mxu0 0
    %925 = vmatpush1.bf16.msra.mxu0 0
    %926 = vmatprep.subr.bf16.mxu0 0
    %927 = vmatpush1.bf16.msra.mxu0 0
    %928 = vmatprep.subr.bf16.mxu0 0
    %929 = vmatpush1.bf16.msra.mxu0 0
    %930 = vmatprep.subr.bf16.mxu0 0
    %931 = vmatpush1.bf16.msra.mxu0 0
    %932 = vmatprep.subr.bf16.mxu0 0
    %933 = vmatpush1.bf16.msra.mxu0 0
    %934 = vmatprep.subr.bf16.mxu0 0
    %935 = vmatpush1.bf16.msra.mxu0 0
    %936 = vmatprep.mubr.bf16.mxu0 0
    %937 = vmatmul.mubr.bf16.gmra.mrb[0].mxu0 %v902
    %v938 = vpop.f32.mrb[0].mxu0
    %v939 = vadd.f32 %v899, %v938
    %v940 = vpop.f32.mrb[0].mxu0
    %v941 = vadd.f32 %v900, %v940
    %v942 = vpop.f32.mrb[0].mxu0
    %v943 = vpop.f32.mrb[0].mxu0
    %944 = vdwg.mxu0
    %v945 = vxor.u32 %v939, 2147483648
    %v946 = vxor.u32 %v941, 2147483648
    %v947 = vmul.f32 %v945, 1.442695
    %v948 = vpow.pop %v947
    %v949 = vmul.f32 %v946, 1.442695
    %v950 = vpow.pop %v949
    %v951 = vadd.f32 %v948, 1.0
    %v952 = vadd.f32 %v950, 1.0
    %v953 = vrcp.pop %v951
    %v954 = vmul.f32 1.0, %v953
    %v955 = vrcp.pop %v952
    %v956 = vmul.f32 1.0, %v955
    %v957 = vtanh.pop %v941
    %959 = vrot.lane.b32.xlu0 %v897, 64
    %v960 = vpop.permute.xlu0 %959
    %v962 = vmul.f32 %v954, %v960
    %964 = vrot.lane.b32.xlu0 %v957, 64
    %v965 = vpop.permute.xlu0 %964
    %v967 = vmul.f32 %v954, %v965
    %969 = vrot.lane.b32.xlu0 %v967, 64
    %v970 = vpop.permute.xlu0 %969
    %v972 = vadd.f32 %v962, %v970
    %v973 = vtanh.pop %v972
    %975 = vrot.lane.b32.xlu0 %v973, 64
    %v976 = vpop.permute.xlu0 %975
    %v978 = vmul.f32 %v956, %v976
    %s979 = scalar_lea.vmem [#allocation6], 24
    %v980 = vld [vmem:[%s979] sm:$0xff]
    %vm981 = vcmp.gt.f32.partialorder %v980, 0.5
    %v982 = vsel %vm981, %v978, %v892
    %984 = vrot.lane.b32.xlu0 %v972, 64
    %v985 = vpop.permute.xlu0 %984
    %v987 = vsel %vm981, %v985, %v897
    %v988 = vpack.c.bf16 %v982, %v982
    %v989 = vld [vmem:[%s436] sm:$0xff]
    %v990 = vld [vmem:[%s436 + $0x8] sm:$0xff]
    %v992 = vsel %vm196, %v988, 0
    %994 = vmatprep.subr.bf16.mxu0 %v621
    %995 = vmatpush1.bf16.msra.mxu0 %v620
    %996 = vmatprep.subr.bf16.mxu0 %v623
    %997 = vmatpush1.bf16.msra.mxu0 %v622
    %998 = vmatprep.subr.bf16.mxu0 %v625
    %999 = vmatpush1.bf16.msra.mxu0 %v624
    %1000 = vmatprep.subr.bf16.mxu0 %v627
    %1001 = vmatpush1.bf16.msra.mxu0 %v626
    %1002 = vmatprep.subr.bf16.mxu0 0
    %1003 = vmatpush1.bf16.msra.mxu0 0
    %1004 = vmatprep.subr.bf16.mxu0 0
    %1005 = vmatpush1.bf16.msra.mxu0 0
    %1006 = vmatprep.subr.bf16.mxu0 0
    %1007 = vmatpush1.bf16.msra.mxu0 0
    %1008 = vmatprep.subr.bf16.mxu0 0
    %1009 = vmatpush1.bf16.msra.mxu0 0
    %1010 = vmatprep.subr.bf16.mxu0 0
    %1011 = vmatpush1.bf16.msra.mxu0 0
    %1012 = vmatprep.subr.bf16.mxu0 0
    %1013 = vmatpush1.bf16.msra.mxu0 0
    %1014 = vmatprep.subr.bf16.mxu0 0
    %1015 = vmatpush1.bf16.msra.mxu0 0
    %1016 = vmatprep.subr.bf16.mxu0 0
    %1017 = vmatpush1.bf16.msra.mxu0 0
    %1018 = vmatprep.subr.bf16.mxu0 0
    %1019 = vmatpush1.bf16.msra.mxu0 0
    %1020 = vmatprep.subr.bf16.mxu0 0
    %1021 = vmatpush1.bf16.msra.mxu0 0
    %1022 = vmatprep.subr.bf16.mxu0 0
    %1023 = vmatpush1.bf16.msra.mxu0 0
    %1024 = vmatprep.subr.bf16.mxu0 0
    %1025 = vmatpush1.bf16.msra.mxu0 0
    %1026 = vmatprep.mubr.bf16.mxu0 0
    %1027 = vmatmul.mubr.bf16.gmra.mrb[0].mxu0 %v992
    %v1028 = vpop.f32.mrb[0].mxu0
    %v1029 = vadd.f32 %v989, %v1028
    %v1030 = vpop.f32.mrb[0].mxu0
    %v1031 = vadd.f32 %v990, %v1030
    %v1032 = vpop.f32.mrb[0].mxu0
    %v1033 = vpop.f32.mrb[0].mxu0
    %1034 = vdwg.mxu0
    %v1035 = vxor.u32 %v1029, 2147483648
    %v1036 = vxor.u32 %v1031, 2147483648
    %v1037 = vmul.f32 %v1035, 1.442695
    %v1038 = vpow.pop %v1037
    %v1039 = vmul.f32 %v1036, 1.442695
    %v1040 = vpow.pop %v1039
    %v1041 = vadd.f32 %v1038, 1.0
    %v1042 = vadd.f32 %v1040, 1.0
    %v1043 = vrcp.pop %v1041
    %v1044 = vmul.f32 1.0, %v1043
    %v1045 = vrcp.pop %v1042
    %v1046 = vmul.f32 1.0, %v1045
    %v1047 = vtanh.pop %v1031
    %1049 = vrot.lane.b32.xlu0 %v987, 64
    %v1050 = vpop.permute.xlu0 %1049
    %v1052 = vmul.f32 %v1044, %v1050
    %1054 = vrot.lane.b32.xlu0 %v1047, 64
    %v1055 = vpop.permute.xlu0 %1054
    %v1057 = vmul.f32 %v1044, %v1055
    %1059 = vrot.lane.b32.xlu0 %v1057, 64
    %v1060 = vpop.permute.xlu0 %1059
    %v1062 = vadd.f32 %v1052, %v1060
    %v1063 = vtanh.pop %v1062
    %1065 = vrot.lane.b32.xlu0 %v1063, 64
    %v1066 = vpop.permute.xlu0 %1065
    %v1068 = vmul.f32 %v1046, %v1066
    %s1069 = scalar_lea.vmem [#allocation6], 32
    %v1070 = vld [vmem:[%s1069] sm:$0xff]
    %vm1071 = vcmp.gt.f32.partialorder %v1070, 0.5
    %v1072 = vsel %vm1071, %v1068, %v982
    %1074 = vrot.lane.b32.xlu0 %v1062, 64
    %v1075 = vpop.permute.xlu0 %1074
    %v1077 = vsel %vm1071, %v1075, %v987
    %v1078 = vpack.c.bf16 %v1072, %v1072
    %v1079 = vld [vmem:[%s485] sm:$0xff]
    %v1080 = vld [vmem:[%s485 + $0x8] sm:$0xff]
    %v1082 = vsel %vm196, %v1078, 0
    %1084 = vmatprep.subr.bf16.mxu0 %v621
    %1085 = vmatpush1.bf16.msra.mxu0 %v620
    %1086 = vmatprep.subr.bf16.mxu0 %v623
    %1087 = vmatpush1.bf16.msra.mxu0 %v622
    %1088 = vmatprep.subr.bf16.mxu0 %v625
    %1089 = vmatpush1.bf16.msra.mxu0 %v624
    %1090 = vmatprep.subr.bf16.mxu0 %v627
    %1091 = vmatpush1.bf16.msra.mxu0 %v626
    %1092 = vmatprep.subr.bf16.mxu0 0
    %1093 = vmatpush1.bf16.msra.mxu0 0
    %1094 = vmatprep.subr.bf16.mxu0 0
    %1095 = vmatpush1.bf16.msra.mxu0 0
    %1096 = vmatprep.subr.bf16.mxu0 0
    %1097 = vmatpush1.bf16.msra.mxu0 0
    %1098 = vmatprep.subr.bf16.mxu0 0
    %1099 = vmatpush1.bf16.msra.mxu0 0
    %1100 = vmatprep.subr.bf16.mxu0 0
    %1101 = vmatpush1.bf16.msra.mxu0 0
    %1102 = vmatprep.subr.bf16.mxu0 0
    %1103 = vmatpush1.bf16.msra.mxu0 0
    %1104 = vmatprep.subr.bf16.mxu0 0
    %1105 = vmatpush1.bf16.msra.mxu0 0
    %1106 = vmatprep.subr.bf16.mxu0 0
    %1107 = vmatpush1.bf16.msra.mxu0 0
    %1108 = vmatprep.subr.bf16.mxu0 0
    %1109 = vmatpush1.bf16.msra.mxu0 0
    %1110 = vmatprep.subr.bf16.mxu0 0
    %1111 = vmatpush1.bf16.msra.mxu0 0
    %1112 = vmatprep.subr.bf16.mxu0 0
    %1113 = vmatpush1.bf16.msra.mxu0 0
    %1114 = vmatprep.subr.bf16.mxu0 0
    %1115 = vmatpush1.bf16.msra.mxu0 0
    %1116 = vmatprep.mubr.bf16.mxu0 0
    %1117 = vmatmul.mubr.bf16.gmra.mrb[0].mxu0 %v1082
    %v1118 = vpop.f32.mrb[0].mxu0
    %v1119 = vadd.f32 %v1079, %v1118
    %v1120 = vpop.f32.mrb[0].mxu0
    %v1121 = vadd.f32 %v1080, %v1120
    %v1122 = vpop.f32.mrb[0].mxu0
    %v1123 = vpop.f32.mrb[0].mxu0
    %1124 = vdwg.mxu0
    %v1125 = vxor.u32 %v1119, 2147483648
    %v1126 = vxor.u32 %v1121, 2147483648
    %v1127 = vmul.f32 %v1125, 1.442695
    %v1128 = vpow.pop %v1127
    %v1129 = vmul.f32 %v1126, 1.442695
    %v1130 = vpow.pop %v1129
    %v1131 = vadd.f32 %v1128, 1.0
    %v1132 = vadd.f32 %v1130, 1.0
    %v1133 = vrcp.pop %v1131
    %v1134 = vmul.f32 1.0, %v1133
    %v1135 = vrcp.pop %v1132
    %v1136 = vmul.f32 1.0, %v1135
    %v1137 = vtanh.pop %v1121
    %1139 = vrot.lane.b32.xlu0 %v1077, 64
    %v1140 = vpop.permute.xlu0 %1139
    %v1142 = vmul.f32 %v1134, %v1140
    %1144 = vrot.lane.b32.xlu0 %v1137, 64
    %v1145 = vpop.permute.xlu0 %1144
    %v1147 = vmul.f32 %v1134, %v1145
    %1149 = vrot.lane.b32.xlu0 %v1147, 64
    %v1150 = vpop.permute.xlu0 %1149
    %v1152 = vadd.f32 %v1142, %v1150
    %v1153 = vtanh.pop %v1152
    %1155 = vrot.lane.b32.xlu0 %v1153, 64
    %v1156 = vpop.permute.xlu0 %1155
    %v1158 = vmul.f32 %v1136, %v1156
    %s1159 = scalar_lea.vmem [#allocation6], 40
    %v1160 = vld [vmem:[%s1159] sm:$0xff]
    %vm1161 = vcmp.gt.f32.partialorder %v1160, 0.5
    %v1162 = vsel %vm1161, %v1158, %v1072
    %1164 = vrot.lane.b32.xlu0 %v1152, 64
    %v1165 = vpop.permute.xlu0 %1164
    %v1167 = vsel %vm1161, %v1165, %v1077
    %v1168 = vpack.c.bf16 %v1162, %v1162
    %v1169 = vld [vmem:[%s534] sm:$0xff]
    %v1170 = vld [vmem:[%s534 + $0x8] sm:$0xff]
    %v1172 = vsel %vm196, %v1168, 0
    %1174 = vmatprep.subr.bf16.mxu0 %v621
    %1175 = vmatpush1.bf16.msra.mxu0 %v620
    %1176 = vmatprep.subr.bf16.mxu0 %v623
    %1177 = vmatpush1.bf16.msra.mxu0 %v622
    %1178 = vmatprep.subr.bf16.mxu0 %v625
    %1179 = vmatpush1.bf16.msra.mxu0 %v624
    %1180 = vmatprep.subr.bf16.mxu0 %v627
    %1181 = vmatpush1.bf16.msra.mxu0 %v626
    %1182 = vmatprep.subr.bf16.mxu0 0
    %1183 = vmatpush1.bf16.msra.mxu0 0
    %1184 = vmatprep.subr.bf16.mxu0 0
    %1185 = vmatpush1.bf16.msra.mxu0 0
    %1186 = vmatprep.subr.bf16.mxu0 0
    %1187 = vmatpush1.bf16.msra.mxu0 0
    %1188 = vmatprep.subr.bf16.mxu0 0
    %1189 = vmatpush1.bf16.msra.mxu0 0
    %1190 = vmatprep.subr.bf16.mxu0 0
    %1191 = vmatpush1.bf16.msra.mxu0 0
    %1192 = vmatprep.subr.bf16.mxu0 0
    %1193 = vmatpush1.bf16.msra.mxu0 0
    %1194 = vmatprep.subr.bf16.mxu0 0
    %1195 = vmatpush1.bf16.msra.mxu0 0
    %1196 = vmatprep.subr.bf16.mxu0 0
    %1197 = vmatpush1.bf16.msra.mxu0 0
    %1198 = vmatprep.subr.bf16.mxu0 0
    %1199 = vmatpush1.bf16.msra.mxu0 0
    %1200 = vmatprep.subr.bf16.mxu0 0
    %1201 = vmatpush1.bf16.msra.mxu0 0
    %1202 = vmatprep.subr.bf16.mxu0 0
    %1203 = vmatpush1.bf16.msra.mxu0 0
    %1204 = vmatprep.subr.bf16.mxu0 0
    %1205 = vmatpush1.bf16.msra.mxu0 0
    %1206 = vmatprep.mubr.bf16.mxu0 0
    %1207 = vmatmul.mubr.bf16.gmra.mrb[0].mxu0 %v1172
    %v1208 = vpop.f32.mrb[0].mxu0
    %v1209 = vadd.f32 %v1169, %v1208
    %v1210 = vpop.f32.mrb[0].mxu0
    %v1211 = vadd.f32 %v1170, %v1210
    %v1212 = vpop.f32.mrb[0].mxu0
    %v1213 = vpop.f32.mrb[0].mxu0
    %1214 = vdwg.mxu0
    %v1215 = vxor.u32 %v1209, 2147483648
    %v1216 = vxor.u32 %v1211, 2147483648
    %v1217 = vmul.f32 %v1215, 1.442695
    %v1218 = vpow.pop %v1217
    %v1219 = vmul.f32 %v1216, 1.442695
    %v1220 = vpow.pop %v1219
    %v1221 = vadd.f32 %v1218, 1.0
    %v1222 = vadd.f32 %v1220, 1.0
    %v1223 = vrcp.pop %v1221
    %v1224 = vmul.f32 1.0, %v1223
    %v1225 = vrcp.pop %v1222
    %v1226 = vmul.f32 1.0, %v1225
    %v1227 = vtanh.pop %v1211
    %1229 = vrot.lane.b32.xlu0 %v1167, 64
    %v1230 = vpop.permute.xlu0 %1229
    %v1232 = vmul.f32 %v1224, %v1230
    %1234 = vrot.lane.b32.xlu0 %v1227, 64
    %v1235 = vpop.permute.xlu0 %1234
    %v1237 = vmul.f32 %v1224, %v1235
    %1239 = vrot.lane.b32.xlu0 %v1237, 64
    %v1240 = vpop.permute.xlu0 %1239
    %v1242 = vadd.f32 %v1232, %v1240
    %v1243 = vtanh.pop %v1242
    %1245 = vrot.lane.b32.xlu0 %v1243, 64
    %v1246 = vpop.permute.xlu0 %1245
    %v1248 = vmul.f32 %v1226, %v1246
    %s1249 = scalar_lea.vmem [#allocation6], 48
    %v1250 = vld [vmem:[%s1249] sm:$0xff]
    %vm1251 = vcmp.gt.f32.partialorder %v1250, 0.5
    %v1252 = vsel %vm1251, %v1248, %v1162
    %1254 = vrot.lane.b32.xlu0 %v1242, 64
    %v1255 = vpop.permute.xlu0 %1254
    %v1257 = vsel %vm1251, %v1255, %v1167
    %v1258 = vpack.c.bf16 %v1252, %v1252
    %v1259 = vld [vmem:[%s583] sm:$0xff]
    %v1260 = vld [vmem:[%s583 + $0x8] sm:$0xff]
    %v1262 = vsel %vm196, %v1258, 0
    %1264 = vmatprep.subr.bf16.mxu0 %v621
    %1265 = vmatpush1.bf16.msra.mxu0 %v620
    %1266 = vmatprep.subr.bf16.mxu0 %v623
    %1267 = vmatpush1.bf16.msra.mxu0 %v622
    %1268 = vmatprep.subr.bf16.mxu0 %v625
    %1269 = vmatpush1.bf16.msra.mxu0 %v624
    %1270 = vmatprep.subr.bf16.mxu0 %v627
    %1271 = vmatpush1.bf16.msra.mxu0 %v626
    %1272 = vmatprep.subr.bf16.mxu0 0
    %1273 = vmatpush1.bf16.msra.mxu0 0
    %1274 = vmatprep.subr.bf16.mxu0 0
    %1275 = vmatpush1.bf16.msra.mxu0 0
    %1276 = vmatprep.subr.bf16.mxu0 0
    %1277 = vmatpush1.bf16.msra.mxu0 0
    %1278 = vmatprep.subr.bf16.mxu0 0
    %1279 = vmatpush1.bf16.msra.mxu0 0
    %1280 = vmatprep.subr.bf16.mxu0 0
    %1281 = vmatpush1.bf16.msra.mxu0 0
    %1282 = vmatprep.subr.bf16.mxu0 0
    %1283 = vmatpush1.bf16.msra.mxu0 0
    %1284 = vmatprep.subr.bf16.mxu0 0
    %1285 = vmatpush1.bf16.msra.mxu0 0
    %1286 = vmatprep.subr.bf16.mxu0 0
    %1287 = vmatpush1.bf16.msra.mxu0 0
    %1288 = vmatprep.subr.bf16.mxu0 0
    %1289 = vmatpush1.bf16.msra.mxu0 0
    %1290 = vmatprep.subr.bf16.mxu0 0
    %1291 = vmatpush1.bf16.msra.mxu0 0
    %1292 = vmatprep.subr.bf16.mxu0 0
    %1293 = vmatpush1.bf16.msra.mxu0 0
    %1294 = vmatprep.subr.bf16.mxu0 0
    %1295 = vmatpush1.bf16.msra.mxu0 0
    %1296 = vmatprep.mubr.bf16.mxu0 0
    %1297 = vmatmul.mubr.bf16.gmra.mrb[0].mxu0 %v1262
    %v1298 = vpop.f32.mrb[0].mxu0
    %v1299 = vadd.f32 %v1259, %v1298
    %v1300 = vpop.f32.mrb[0].mxu0
    %v1301 = vadd.f32 %v1260, %v1300
    %v1302 = vpop.f32.mrb[0].mxu0
    %v1303 = vpop.f32.mrb[0].mxu0
    %1304 = vdwg.mxu0
    %v1305 = vxor.u32 %v1299, 2147483648
    %v1306 = vxor.u32 %v1301, 2147483648
    %v1307 = vmul.f32 %v1305, 1.442695
    %v1308 = vpow.pop %v1307
    %v1309 = vmul.f32 %v1306, 1.442695
    %v1310 = vpow.pop %v1309
    %v1311 = vadd.f32 %v1308, 1.0
    %v1312 = vadd.f32 %v1310, 1.0
    %v1313 = vrcp.pop %v1311
    %v1314 = vmul.f32 1.0, %v1313
    %v1315 = vrcp.pop %v1312
    %v1316 = vmul.f32 1.0, %v1315
    %v1317 = vtanh.pop %v1301
    %1319 = vrot.lane.b32.xlu0 %v1257, 64
    %v1320 = vpop.permute.xlu0 %1319
    %v1322 = vmul.f32 %v1314, %v1320
    %1324 = vrot.lane.b32.xlu0 %v1317, 64
    %v1325 = vpop.permute.xlu0 %1324
    %v1327 = vmul.f32 %v1314, %v1325
    %1329 = vrot.lane.b32.xlu0 %v1327, 64
    %v1330 = vpop.permute.xlu0 %1329
    %v1332 = vadd.f32 %v1322, %v1330
    %v1333 = vtanh.pop %v1332
    %1335 = vrot.lane.b32.xlu0 %v1333, 64
    %v1336 = vpop.permute.xlu0 %1335
    %v1338 = vmul.f32 %v1316, %v1336
    %s1339 = scalar_lea.vmem [#allocation6], 56
    %v1340 = vld [vmem:[%s1339] sm:$0xff]
    %vm1341 = vcmp.gt.f32.partialorder %v1340, 0.5
    %v1342 = vsel %vm1341, %v1338, %v1252
    %v1343 = vpack.c.bf16 %v1342, %v1342
    %v1344 = vld [vmem:[#allocation11] sm:$0xff]
    %v1345 = vld [vmem:[#allocation11 + $0x8] sm:$0xff]
    %v1346 = vld [vmem:[#allocation11 + $0x10] sm:$0xff]
    %v1347 = vld [vmem:[#allocation11 + $0x18] sm:$0xff]
    %v1348 = vld [vmem:[#allocation11 + $0x20] sm:$0xff]
    %v1349 = vld [vmem:[#allocation11 + $0x28] sm:$0xff]
    %v1350 = vld [vmem:[#allocation11 + $0x30] sm:$0xff]
    %v1351 = vld [vmem:[#allocation11 + $0x38] sm:$0xff]
    %v1352 = vld [vmem:[#allocation11 + $0x40] sm:$0xff]
    %v1353 = vld [vmem:[#allocation11 + $0x48] sm:$0xff]
    %v1354 = vld [vmem:[#allocation11 + $0x50] sm:$0xff]
    %v1355 = vld [vmem:[#allocation11 + $0x58] sm:$0xff]
    %v1356 = vld [vmem:[#allocation11 + $0x60] sm:$0xff]
    %v1357 = vld [vmem:[#allocation11 + $0x68] sm:$0xff]
    %v1358 = vld [vmem:[#allocation11 + $0x70] sm:$0xff]
    %v1359 = vld [vmem:[#allocation11 + $0x78] sm:$0xff]
    %v1360 = vld [vmem:[#allocation11 + $0x80] sm:$0xff]
    %v1361 = vld [vmem:[#allocation11 + $0x88] sm:$0xff]
    %v1362 = vld [vmem:[#allocation11 + $0x90] sm:$0xff]
    %v1363 = vld [vmem:[#allocation11 + $0x98] sm:$0xff]
    %v1364 = vld [vmem:[#allocation11 + $0xa0] sm:$0xff]
    %v1365 = vld [vmem:[#allocation11 + $0xa8] sm:$0xff]
    %v1366 = vld [vmem:[#allocation11 + $0xb0] sm:$0xff]
    %v1367 = vld [vmem:[#allocation11 + $0xb8] sm:$0xff]
    %v1368 = vld [vmem:[#allocation11 + $0xc0] sm:$0xff]
    %v1369 = vld [vmem:[#allocation11 + $0xc8] sm:$0xff]
    %v1370 = vld [vmem:[#allocation11 + $0xd0] sm:$0xff]
    %v1371 = vld [vmem:[#allocation11 + $0xd8] sm:$0xff]
    %v1372 = vld [vmem:[#allocation11 + $0xe0] sm:$0xff]
    %v1373 = vld [vmem:[#allocation11 + $0xe8] sm:$0xff]
    %v1374 = vld [vmem:[#allocation11 + $0xf0] sm:$0xff]
    %v1375 = vld [vmem:[#allocation11 + $0xf8] sm:$0xff]
    %v1376 = vld [vmem:[%s2] sm:$0xf]
    %v1377 = vld [vmem:[#allocation12] sm:$0xff]
    %v1378 = vld [vmem:[#allocation12 + $0x8] sm:$0xff]
    %v1379 = vld [vmem:[#allocation12 + $0x10] sm:$0xff]
    %v1380 = vld [vmem:[#allocation12 + $0x18] sm:$0xff]
    %v1381 = vld [vmem:[#allocation12 + $0x20] sm:$0xff]
    %v1382 = vld [vmem:[#allocation12 + $0x28] sm:$0xff]
    %v1383 = vld [vmem:[#allocation12 + $0x30] sm:$0xff]
    %v1384 = vld [vmem:[#allocation12 + $0x38] sm:$0xff]
    %v1385 = vld [vmem:[#allocation12 + $0x40] sm:$0xff]
    %v1386 = vld [vmem:[#allocation12 + $0x48] sm:$0xff]
    %v1387 = vld [vmem:[#allocation12 + $0x50] sm:$0xff]
    %v1388 = vld [vmem:[#allocation12 + $0x58] sm:$0xff]
    %v1389 = vld [vmem:[#allocation12 + $0x60] sm:$0xff]
    %v1390 = vld [vmem:[#allocation12 + $0x68] sm:$0xff]
    %v1391 = vld [vmem:[#allocation12 + $0x70] sm:$0xff]
    %v1392 = vld [vmem:[#allocation12 + $0x78] sm:$0xff]
    %v1409 = vunpack.c.l.b16 %v1377
    %v1410 = vunpack.c.h.b16 %v1377
    %v1411 = vunpack.c.l.b16 %v1378
    %v1412 = vunpack.c.h.b16 %v1378
    %v1413 = vunpack.c.l.b16 %v1379
    %v1414 = vunpack.c.h.b16 %v1379
    %v1415 = vunpack.c.l.b16 %v1380
    %v1416 = vunpack.c.h.b16 %v1380
    %v1417 = vunpack.c.l.b16 %v1381
    %v1418 = vunpack.c.h.b16 %v1381
    %v1419 = vunpack.c.l.b16 %v1382
    %v1420 = vunpack.c.h.b16 %v1382
    %v1421 = vunpack.c.l.b16 %v1383
    %v1422 = vunpack.c.h.b16 %v1383
    %v1423 = vunpack.c.l.b16 %v1384
    %v1424 = vunpack.c.h.b16 %v1384
    %v1425 = vunpack.c.l.b16 %v1385
    %v1426 = vunpack.c.h.b16 %v1385
    %v1427 = vunpack.c.l.b16 %v1386
    %v1428 = vunpack.c.h.b16 %v1386
    %v1429 = vunpack.c.l.b16 %v1387
    %v1430 = vunpack.c.h.b16 %v1387
    %v1431 = vunpack.c.l.b16 %v1388
    %v1432 = vunpack.c.h.b16 %v1388
    %v1433 = vunpack.c.l.b16 %v1389
    %v1434 = vunpack.c.h.b16 %v1389
    %v1435 = vunpack.c.l.b16 %v1390
    %v1436 = vunpack.c.h.b16 %v1390
    %v1437 = vunpack.c.l.b16 %v1391
    %v1438 = vunpack.c.h.b16 %v1391
    %v1439 = vunpack.c.l.b16 %v1392
    %v1440 = vunpack.c.h.b16 %v1392
    %v1441 = vpack.c.b16 %v1417, %v1409
    %v1442 = vpack.c.b16 %v1418, %v1410
    %v1443 = vpack.c.b16 %v1419, %v1411
    %v1444 = vpack.c.b16 %v1420, %v1412
    %v1445 = vpack.c.b16 %v1421, %v1413
    %v1446 = vpack.c.b16 %v1422, %v1414
    %v1447 = vpack.c.b16 %v1423, %v1415
    %v1448 = vpack.c.b16 %v1424, %v1416
    %v1449 = vpack.c.b16 %v1433, %v1425
    %v1450 = vpack.c.b16 %v1434, %v1426
    %v1451 = vpack.c.b16 %v1435, %v1427
    %v1452 = vpack.c.b16 %v1436, %v1428
    %v1453 = vpack.c.b16 %v1437, %v1429
    %v1454 = vpack.c.b16 %v1438, %v1430
    %v1455 = vpack.c.b16 %v1439, %v1431
    %v1456 = vpack.c.b16 %v1440, %v1432
    %vm1473 = vcmask 261120
    %v1475 = vsel %vm1473, %v1376, 0
    %1477 = vmatprep.subr.bf16.mxu0 %v1442
    %1478 = vmatpush1.bf16.msra.mxu0 %v1441
    %1479 = vmatprep.subr.bf16.mxu0 %v1450
    %1480 = vmatpush1.bf16.msra.mxu0 %v1449
    %1481 = vmatprep.subr.bf16.mxu0 0
    %1482 = vmatpush1.bf16.msra.mxu0 0
    %1483 = vmatprep.subr.bf16.mxu0 0
    %1484 = vmatpush1.bf16.msra.mxu0 0
    %1485 = vmatprep.subr.bf16.mxu0 0
    %1486 = vmatpush1.bf16.msra.mxu0 0
    %1487 = vmatprep.subr.bf16.mxu0 0
    %1488 = vmatpush1.bf16.msra.mxu0 0
    %1489 = vmatprep.subr.bf16.mxu0 0
    %1490 = vmatpush1.bf16.msra.mxu0 0
    %1491 = vmatprep.subr.bf16.mxu0 0
    %1492 = vmatpush1.bf16.msra.mxu0 0
    %1493 = vmatprep.subr.bf16.mxu0 0
    %1494 = vmatpush1.bf16.msra.mxu0 0
    %1495 = vmatprep.subr.bf16.mxu0 0
    %1496 = vmatpush1.bf16.msra.mxu0 0
    %1497 = vmatprep.subr.bf16.mxu0 0
    %1498 = vmatpush1.bf16.msra.mxu0 0
    %1499 = vmatprep.subr.bf16.mxu0 0
    %1500 = vmatpush1.bf16.msra.mxu0 0
    %1501 = vmatprep.subr.bf16.mxu0 0
    %1502 = vmatpush1.bf16.msra.mxu0 0
    %1503 = vmatprep.subr.bf16.mxu0 0
    %1504 = vmatpush1.bf16.msra.mxu0 0
    %1505 = vmatprep.subr.bf16.mxu0 0
    %1506 = vmatpush1.bf16.msra.mxu0 0
    %1507 = vmatprep.subr.bf16.mxu0 0
    %1508 = vmatpush1.bf16.msra.mxu0 0
    %1509 = vmatprep.mubr.bf16.mxu0 0
    %1510 = vmatmul.mubr.bf16.gmra.mrb[0].mxu0 %v1475
    %v1511 = vpop.f32.mrb[0].mxu0
    %v1512 = vadd.f32 0.0, %v1511
    %v1513 = vpop.f32.mrb[0].mxu0
    %v1514 = vadd.f32 0.0, %v1513
    %v1515 = vpop.f32.mrb[0].mxu0
    %v1516 = vpop.f32.mrb[0].mxu0
    %1517 = vdwg.mxu0
    %1518 = vmatprep.subr.bf16.mxu0 %v1444
    %1519 = vmatpush1.bf16.msra.mxu0 %v1443
    %1520 = vmatprep.subr.bf16.mxu0 %v1452
    %1521 = vmatpush1.bf16.msra.mxu0 %v1451
    %1522 = vmatprep.subr.bf16.mxu0 0
    %1523 = vmatpush1.bf16.msra.mxu0 0
    %1524 = vmatprep.subr.bf16.mxu0 0
    %1525 = vmatpush1.bf16.msra.mxu0 0
    %1526 = vmatprep.subr.bf16.mxu0 0
    %1527 = vmatpush1.bf16.msra.mxu0 0
    %1528 = vmatprep.subr.bf16.mxu0 0
    %1529 = vmatpush1.bf16.msra.mxu0 0
    %1530 = vmatprep.subr.bf16.mxu0 0
    %1531 = vmatpush1.bf16.msra.mxu0 0
    %1532 = vmatprep.subr.bf16.mxu0 0
    %1533 = vmatpush1.bf16.msra.mxu0 0
    %1534 = vmatprep.subr.bf16.mxu0 0
    %1535 = vmatpush1.bf16.msra.mxu0 0
    %1536 = vmatprep.subr.bf16.mxu0 0
    %1537 = vmatpush1.bf16.msra.mxu0 0
    %1538 = vmatprep.subr.bf16.mxu0 0
    %1539 = vmatpush1.bf16.msra.mxu0 0
    %1540 = vmatprep.subr.bf16.mxu0 0
    %1541 = vmatpush1.bf16.msra.mxu0 0
    %1542 = vmatprep.subr.bf16.mxu0 0
    %1543 = vmatpush1.bf16.msra.mxu0 0
    %1544 = vmatprep.subr.bf16.mxu0 0
    %1545 = vmatpush1.bf16.msra.mxu0 0
    %1546 = vmatprep.subr.bf16.mxu0 0
    %1547 = vmatpush1.bf16.msra.mxu0 0
    %1548 = vmatprep.subr.bf16.mxu0 0
    %1549 = vmatpush1.bf16.msra.mxu0 0
    %1550 = vmatprep.mubr.bf16.mxu0 0
    %1551 = vmatmul.mubr.bf16.gmra.mrb[0].mxu0 %v1475
    %v1552 = vpop.f32.mrb[0].mxu0
    %v1553 = vadd.f32 0.0, %v1552
    %v1554 = vpop.f32.mrb[0].mxu0
    %v1555 = vadd.f32 0.0, %v1554
    %v1556 = vpop.f32.mrb[0].mxu0
    %v1557 = vpop.f32.mrb[0].mxu0
    %1558 = vdwg.mxu0
    %1559 = vmatprep.subr.bf16.mxu0 %v1446
    %1560 = vmatpush1.bf16.msra.mxu0 %v1445
    %1561 = vmatprep.subr.bf16.mxu0 %v1454
    %1562 = vmatpush1.bf16.msra.mxu0 %v1453
    %1563 = vmatprep.subr.bf16.mxu0 0
    %1564 = vmatpush1.bf16.msra.mxu0 0
    %1565 = vmatprep.subr.bf16.mxu0 0
    %1566 = vmatpush1.bf16.msra.mxu0 0
    %1567 = vmatprep.subr.bf16.mxu0 0
    %1568 = vmatpush1.bf16.msra.mxu0 0
    %1569 = vmatprep.subr.bf16.mxu0 0
    %1570 = vmatpush1.bf16.msra.mxu0 0
    %1571 = vmatprep.subr.bf16.mxu0 0
    %1572 = vmatpush1.bf16.msra.mxu0 0
    %1573 = vmatprep.subr.bf16.mxu0 0
    %1574 = vmatpush1.bf16.msra.mxu0 0
    %1575 = vmatprep.subr.bf16.mxu0 0
    %1576 = vmatpush1.bf16.msra.mxu0 0
    %1577 = vmatprep.subr.bf16.mxu0 0
    %1578 = vmatpush1.bf16.msra.mxu0 0
    %1579 = vmatprep.subr.bf16.mxu0 0
    %1580 = vmatpush1.bf16.msra.mxu0 0
    %1581 = vmatprep.subr.bf16.mxu0 0
    %1582 = vmatpush1.bf16.msra.mxu0 0
    %1583 = vmatprep.subr.bf16.mxu0 0
    %1584 = vmatpush1.bf16.msra.mxu0 0
    %1585 = vmatprep.subr.bf16.mxu0 0
    %1586 = vmatpush1.bf16.msra.mxu0 0
    %1587 = vmatprep.subr.bf16.mxu0 0
    %1588 = vmatpush1.bf16.msra.mxu0 0
    %1589 = vmatprep.subr.bf16.mxu0 0
    %1590 = vmatpush1.bf16.msra.mxu0 0
    %1591 = vmatprep.mubr.bf16.mxu0 0
    %1592 = vmatmul.mubr.bf16.gmra.mrb[0].mxu0 %v1475
    %v1593 = vpop.f32.mrb[0].mxu0
    %v1594 = vadd.f32 0.0, %v1593
    %v1595 = vpop.f32.mrb[0].mxu0
    %v1596 = vadd.f32 0.0, %v1595
    %v1597 = vpop.f32.mrb[0].mxu0
    %v1598 = vpop.f32.mrb[0].mxu0
    %1599 = vdwg.mxu0
    %1600 = vmatprep.subr.bf16.mxu0 %v1448
    %1601 = vmatpush1.bf16.msra.mxu0 %v1447
    %1602 = vmatprep.subr.bf16.mxu0 %v1456
    %1603 = vmatpush1.bf16.msra.mxu0 %v1455
    %1604 = vmatprep.subr.bf16.mxu0 0
    %1605 = vmatpush1.bf16.msra.mxu0 0
    %1606 = vmatprep.subr.bf16.mxu0 0
    %1607 = vmatpush1.bf16.msra.mxu0 0
    %1608 = vmatprep.subr.bf16.mxu0 0
    %1609 = vmatpush1.bf16.msra.mxu0 0
    %1610 = vmatprep.subr.bf16.mxu0 0
    %1611 = vmatpush1.bf16.msra.mxu0 0
    %1612 = vmatprep.subr.bf16.mxu0 0
    %1613 = vmatpush1.bf16.msra.mxu0 0
    %1614 = vmatprep.subr.bf16.mxu0 0
    %1615 = vmatpush1.bf16.msra.mxu0 0
    %1616 = vmatprep.subr.bf16.mxu0 0
    %1617 = vmatpush1.bf16.msra.mxu0 0
    %1618 = vmatprep.subr.bf16.mxu0 0
    %1619 = vmatpush1.bf16.msra.mxu0 0
    %1620 = vmatprep.subr.bf16.mxu0 0
    %1621 = vmatpush1.bf16.msra.mxu0 0
    %1622 = vmatprep.subr.bf16.mxu0 0
    %1623 = vmatpush1.bf16.msra.mxu0 0
    %1624 = vmatprep.subr.bf16.mxu0 0
    %1625 = vmatpush1.bf16.msra.mxu0 0
    %1626 = vmatprep.subr.bf16.mxu0 0
    %1627 = vmatpush1.bf16.msra.mxu0 0
    %1628 = vmatprep.subr.bf16.mxu0 0
    %1629 = vmatpush1.bf16.msra.mxu0 0
    %1630 = vmatprep.subr.bf16.mxu0 0
    %1631 = vmatpush1.bf16.msra.mxu0 0
    %1632 = vmatprep.mubr.bf16.mxu0 0
    %1633 = vmatmul.mubr.bf16.gmra.mrb[0].mxu0 %v1475
    %v1634 = vpop.f32.mrb[0].mxu0
    %v1635 = vadd.f32 0.0, %v1634
    %v1636 = vpop.f32.mrb[0].mxu0
    %v1637 = vadd.f32 0.0, %v1636
    %v1638 = vpop.f32.mrb[0].mxu0
    %v1639 = vpop.f32.mrb[0].mxu0
    %1640 = vdwg.mxu0
    %v1673 = vunpack.c.l.b16 %v1344
    %v1674 = vunpack.c.h.b16 %v1344
    %v1675 = vunpack.c.l.b16 %v1345
    %v1676 = vunpack.c.h.b16 %v1345
    %v1677 = vunpack.c.l.b16 %v1346
    %v1678 = vunpack.c.h.b16 %v1346
    %v1679 = vunpack.c.l.b16 %v1347
    %v1680 = vunpack.c.h.b16 %v1347
    %v1681 = vunpack.c.l.b16 %v1348
    %v1682 = vunpack.c.h.b16 %v1348
    %v1683 = vunpack.c.l.b16 %v1349
    %v1684 = vunpack.c.h.b16 %v1349
    %v1685 = vunpack.c.l.b16 %v1350
    %v1686 = vunpack.c.h.b16 %v1350
    %v1687 = vunpack.c.l.b16 %v1351
    %v1688 = vunpack.c.h.b16 %v1351
    %v1689 = vunpack.c.l.b16 %v1352
    %v1690 = vunpack.c.h.b16 %v1352
    %v1691 = vunpack.c.l.b16 %v1353
    %v1692 = vunpack.c.h.b16 %v1353
    %v1693 = vunpack.c.l.b16 %v1354
    %v1694 = vunpack.c.h.b16 %v1354
    %v1695 = vunpack.c.l.b16 %v1355
    %v1696 = vunpack.c.h.b16 %v1355
    %v1697 = vunpack.c.l.b16 %v1356
    %v1698 = vunpack.c.h.b16 %v1356
    %v1699 = vunpack.c.l.b16 %v1357
    %v1700 = vunpack.c.h.b16 %v1357
    %v1701 = vunpack.c.l.b16 %v1358
    %v1702 = vunpack.c.h.b16 %v1358
    %v1703 = vunpack.c.l.b16 %v1359
    %v1704 = vunpack.c.h.b16 %v1359
    %v1705 = vunpack.c.l.b16 %v1360
    %v1706 = vunpack.c.h.b16 %v1360
    %v1707 = vunpack.c.l.b16 %v1361
    %v1708 = vunpack.c.h.b16 %v1361
    %v1709 = vunpack.c.l.b16 %v1362
    %v1710 = vunpack.c.h.b16 %v1362
    %v1711 = vunpack.c.l.b16 %v1363
    %v1712 = vunpack.c.h.b16 %v1363
    %v1713 = vunpack.c.l.b16 %v1364
    %v1714 = vunpack.c.h.b16 %v1364
    %v1715 = vunpack.c.l.b16 %v1365
    %v1716 = vunpack.c.h.b16 %v1365
    %v1717 = vunpack.c.l.b16 %v1366
    %v1718 = vunpack.c.h.b16 %v1366
    %v1719 = vunpack.c.l.b16 %v1367
    %v1720 = vunpack.c.h.b16 %v1367
    %v1721 = vunpack.c.l.b16 %v1368
    %v1722 = vunpack.c.h.b16 %v1368
    %v1723 = vunpack.c.l.b16 %v1369
    %v1724 = vunpack.c.h.b16 %v1369
    %v1725 = vunpack.c.l.b16 %v1370
    %v1726 = vunpack.c.h.b16 %v1370
    %v1727 = vunpack.c.l.b16 %v1371
    %v1728 = vunpack.c.h.b16 %v1371
    %v1729 = vunpack.c.l.b16 %v1372
    %v1730 = vunpack.c.h.b16 %v1372
    %v1731 = vunpack.c.l.b16 %v1373
    %v1732 = vunpack.c.h.b16 %v1373
    %v1733 = vunpack.c.l.b16 %v1374
    %v1734 = vunpack.c.h.b16 %v1374
    %v1735 = vunpack.c.l.b16 %v1375
    %v1736 = vunpack.c.h.b16 %v1375
    %v1737 = vpack.c.b16 %v1681, %v1673
    %v1738 = vpack.c.b16 %v1682, %v1674
    %v1739 = vpack.c.b16 %v1683, %v1675
    %v1740 = vpack.c.b16 %v1684, %v1676
    %v1741 = vpack.c.b16 %v1685, %v1677
    %v1742 = vpack.c.b16 %v1686, %v1678
    %v1743 = vpack.c.b16 %v1687, %v1679
    %v1744 = vpack.c.b16 %v1688, %v1680
    %v1745 = vpack.c.b16 %v1697, %v1689
    %v1746 = vpack.c.b16 %v1698, %v1690
    %v1747 = vpack.c.b16 %v1699, %v1691
    %v1748 = vpack.c.b16 %v1700, %v1692
    %v1749 = vpack.c.b16 %v1701, %v1693
    %v1750 = vpack.c.b16 %v1702, %v1694
    %v1751 = vpack.c.b16 %v1703, %v1695
    %v1752 = vpack.c.b16 %v1704, %v1696
    %v1753 = vpack.c.b16 %v1713, %v1705
    %v1754 = vpack.c.b16 %v1714, %v1706
    %v1755 = vpack.c.b16 %v1715, %v1707
    %v1756 = vpack.c.b16 %v1716, %v1708
    %v1757 = vpack.c.b16 %v1717, %v1709
    %v1758 = vpack.c.b16 %v1718, %v1710
    %v1759 = vpack.c.b16 %v1719, %v1711
    %v1760 = vpack.c.b16 %v1720, %v1712
    %v1761 = vpack.c.b16 %v1729, %v1721
    %v1762 = vpack.c.b16 %v1730, %v1722
    %v1763 = vpack.c.b16 %v1731, %v1723
    %v1764 = vpack.c.b16 %v1732, %v1724
    %v1765 = vpack.c.b16 %v1733, %v1725
    %v1766 = vpack.c.b16 %v1734, %v1726
    %v1767 = vpack.c.b16 %v1735, %v1727
    %v1768 = vpack.c.b16 %v1736, %v1728
    %v1802 = vsel %vm196, %v1343, 0
    %1804 = vmatprep.subr.bf16.mxu0 %v1738
    %1805 = vmatpush1.bf16.msra.mxu0 %v1737
    %1806 = vmatprep.subr.bf16.mxu0 %v1746
    %1807 = vmatpush1.bf16.msra.mxu0 %v1745
    %1808 = vmatprep.subr.bf16.mxu0 %v1754
    %1809 = vmatpush1.bf16.msra.mxu0 %v1753
    %1810 = vmatprep.subr.bf16.mxu0 %v1762
    %1811 = vmatpush1.bf16.msra.mxu0 %v1761
    %1812 = vmatprep.subr.bf16.mxu0 0
    %1813 = vmatpush1.bf16.msra.mxu0 0
    %1814 = vmatprep.subr.bf16.mxu0 0
    %1815 = vmatpush1.bf16.msra.mxu0 0
    %1816 = vmatprep.subr.bf16.mxu0 0
    %1817 = vmatpush1.bf16.msra.mxu0 0
    %1818 = vmatprep.subr.bf16.mxu0 0
    %1819 = vmatpush1.bf16.msra.mxu0 0
    %1820 = vmatprep.subr.bf16.mxu0 0
    %1821 = vmatpush1.bf16.msra.mxu0 0
    %1822 = vmatprep.subr.bf16.mxu0 0
    %1823 = vmatpush1.bf16.msra.mxu0 0
    %1824 = vmatprep.subr.bf16.mxu0 0
    %1825 = vmatpush1.bf16.msra.mxu0 0
    %1826 = vmatprep.subr.bf16.mxu0 0
    %1827 = vmatpush1.bf16.msra.mxu0 0
    %1828 = vmatprep.subr.bf16.mxu0 0
    %1829 = vmatpush1.bf16.msra.mxu0 0
    %1830 = vmatprep.subr.bf16.mxu0 0
    %1831 = vmatpush1.bf16.msra.mxu0 0
    %1832 = vmatprep.subr.bf16.mxu0 0
    %1833 = vmatpush1.bf16.msra.mxu0 0
    %1834 = vmatprep.subr.bf16.mxu0 0
    %1835 = vmatpush1.bf16.msra.mxu0 0
    %1836 = vmatprep.mubr.bf16.mxu0 0
    %1837 = vmatmul.mubr.bf16.gmra.mrb[0].mxu0 %v1802
    %v1838 = vpop.f32.mrb[0].mxu0
    %v1839 = vadd.f32 %v1512, %v1838
    %v1840 = vpop.f32.mrb[0].mxu0
    %v1841 = vadd.f32 %v1514, %v1840
    %v1842 = vpop.f32.mrb[0].mxu0
    %v1843 = vpop.f32.mrb[0].mxu0
    %1844 = vdwg.mxu0
    %1845 = vmatprep.subr.bf16.mxu0 %v1740
    %1846 = vmatpush1.bf16.msra.mxu0 %v1739
    %1847 = vmatprep.subr.bf16.mxu0 %v1748
    %1848 = vmatpush1.bf16.msra.mxu0 %v1747
    %1849 = vmatprep.subr.bf16.mxu0 %v1756
    %1850 = vmatpush1.bf16.msra.mxu0 %v1755
    %1851 = vmatprep.subr.bf16.mxu0 %v1764
    %1852 = vmatpush1.bf16.msra.mxu0 %v1763
    %1853 = vmatprep.subr.bf16.mxu0 0
    %1854 = vmatpush1.bf16.msra.mxu0 0
    %1855 = vmatprep.subr.bf16.mxu0 0
    %1856 = vmatpush1.bf16.msra.mxu0 0
    %1857 = vmatprep.subr.bf16.mxu0 0
    %1858 = vmatpush1.bf16.msra.mxu0 0
    %1859 = vmatprep.subr.bf16.mxu0 0
    %1860 = vmatpush1.bf16.msra.mxu0 0
    %1861 = vmatprep.subr.bf16.mxu0 0
    %1862 = vmatpush1.bf16.msra.mxu0 0
    %1863 = vmatprep.subr.bf16.mxu0 0
    %1864 = vmatpush1.bf16.msra.mxu0 0
    %1865 = vmatprep.subr.bf16.mxu0 0
    %1866 = vmatpush1.bf16.msra.mxu0 0
    %1867 = vmatprep.subr.bf16.mxu0 0
    %1868 = vmatpush1.bf16.msra.mxu0 0
    %1869 = vmatprep.subr.bf16.mxu0 0
    %1870 = vmatpush1.bf16.msra.mxu0 0
    %1871 = vmatprep.subr.bf16.mxu0 0
    %1872 = vmatpush1.bf16.msra.mxu0 0
    %1873 = vmatprep.subr.bf16.mxu0 0
    %1874 = vmatpush1.bf16.msra.mxu0 0
    %1875 = vmatprep.subr.bf16.mxu0 0
    %1876 = vmatpush1.bf16.msra.mxu0 0
    %1877 = vmatprep.mubr.bf16.mxu0 0
    %1878 = vmatmul.mubr.bf16.gmra.mrb[0].mxu0 %v1802
    %v1879 = vpop.f32.mrb[0].mxu0
    %v1880 = vadd.f32 %v1553, %v1879
    %v1881 = vpop.f32.mrb[0].mxu0
    %v1882 = vadd.f32 %v1555, %v1881
    %v1883 = vpop.f32.mrb[0].mxu0
    %v1884 = vpop.f32.mrb[0].mxu0
    %1885 = vdwg.mxu0
    %1886 = vmatprep.subr.bf16.mxu0 %v1742
    %1887 = vmatpush1.bf16.msra.mxu0 %v1741
    %1888 = vmatprep.subr.bf16.mxu0 %v1750
    %1889 = vmatpush1.bf16.msra.mxu0 %v1749
    %1890 = vmatprep.subr.bf16.mxu0 %v1758
    %1891 = vmatpush1.bf16.msra.mxu0 %v1757
    %1892 = vmatprep.subr.bf16.mxu0 %v1766
    %1893 = vmatpush1.bf16.msra.mxu0 %v1765
    %1894 = vmatprep.subr.bf16.mxu0 0
    %1895 = vmatpush1.bf16.msra.mxu0 0
    %1896 = vmatprep.subr.bf16.mxu0 0
    %1897 = vmatpush1.bf16.msra.mxu0 0
    %1898 = vmatprep.subr.bf16.mxu0 0
    %1899 = vmatpush1.bf16.msra.mxu0 0
    %1900 = vmatprep.subr.bf16.mxu0 0
    %1901 = vmatpush1.bf16.msra.mxu0 0
    %1902 = vmatprep.subr.bf16.mxu0 0
    %1903 = vmatpush1.bf16.msra.mxu0 0
    %1904 = vmatprep.subr.bf16.mxu0 0
    %1905 = vmatpush1.bf16.msra.mxu0 0
    %1906 = vmatprep.subr.bf16.mxu0 0
    %1907 = vmatpush1.bf16.msra.mxu0 0
    %1908 = vmatprep.subr.bf16.mxu0 0
    %1909 = vmatpush1.bf16.msra.mxu0 0
    %1910 = vmatprep.subr.bf16.mxu0 0
    %1911 = vmatpush1.bf16.msra.mxu0 0
    %1912 = vmatprep.subr.bf16.mxu0 0
    %1913 = vmatpush1.bf16.msra.mxu0 0
    %1914 = vmatprep.subr.bf16.mxu0 0
    %1915 = vmatpush1.bf16.msra.mxu0 0
    %1916 = vmatprep.subr.bf16.mxu0 0
    %1917 = vmatpush1.bf16.msra.mxu0 0
    %1918 = vmatprep.mubr.bf16.mxu0 0
    %1919 = vmatmul.mubr.bf16.gmra.mrb[0].mxu0 %v1802
    %v1920 = vpop.f32.mrb[0].mxu0
    %v1921 = vadd.f32 %v1594, %v1920
    %v1922 = vpop.f32.mrb[0].mxu0
    %v1923 = vadd.f32 %v1596, %v1922
    %v1924 = vpop.f32.mrb[0].mxu0
    %v1925 = vpop.f32.mrb[0].mxu0
    %1926 = vdwg.mxu0
    %1927 = vmatprep.subr.bf16.mxu0 %v1744
    %1928 = vmatpush1.bf16.msra.mxu0 %v1743
    %1929 = vmatprep.subr.bf16.mxu0 %v1752
    %1930 = vmatpush1.bf16.msra.mxu0 %v1751
    %1931 = vmatprep.subr.bf16.mxu0 %v1760
    %1932 = vmatpush1.bf16.msra.mxu0 %v1759
    %1933 = vmatprep.subr.bf16.mxu0 %v1768
    %1934 = vmatpush1.bf16.msra.mxu0 %v1767
    %1935 = vmatprep.subr.bf16.mxu0 0
    %1936 = vmatpush1.bf16.msra.mxu0 0
    %1937 = vmatprep.subr.bf16.mxu0 0
    %1938 = vmatpush1.bf16.msra.mxu0 0
    %1939 = vmatprep.subr.bf16.mxu0 0
    %1940 = vmatpush1.bf16.msra.mxu0 0
    %1941 = vmatprep.subr.bf16.mxu0 0
    %1942 = vmatpush1.bf16.msra.mxu0 0
    %1943 = vmatprep.subr.bf16.mxu0 0
    %1944 = vmatpush1.bf16.msra.mxu0 0
    %1945 = vmatprep.subr.bf16.mxu0 0
    %1946 = vmatpush1.bf16.msra.mxu0 0
    %1947 = vmatprep.subr.bf16.mxu0 0
    %1948 = vmatpush1.bf16.msra.mxu0 0
    %1949 = vmatprep.subr.bf16.mxu0 0
    %1950 = vmatpush1.bf16.msra.mxu0 0
    %1951 = vmatprep.subr.bf16.mxu0 0
    %1952 = vmatpush1.bf16.msra.mxu0 0
    %1953 = vmatprep.subr.bf16.mxu0 0
    %1954 = vmatpush1.bf16.msra.mxu0 0
    %1955 = vmatprep.subr.bf16.mxu0 0
    %1956 = vmatpush1.bf16.msra.mxu0 0
    %1957 = vmatprep.subr.bf16.mxu0 0
    %1958 = vmatpush1.bf16.msra.mxu0 0
    %1959 = vmatprep.mubr.bf16.mxu0 0
    %1960 = vmatmul.mubr.bf16.gmra.mrb[0].mxu0 %v1802
    %v1961 = vpop.f32.mrb[0].mxu0
    %v1962 = vadd.f32 %v1635, %v1961
    %v1963 = vpop.f32.mrb[0].mxu0
    %v1964 = vadd.f32 %v1637, %v1963
    %v1965 = vpop.f32.mrb[0].mxu0
    %v1966 = vpop.f32.mrb[0].mxu0
    %1967 = vdwg.mxu0
    %v1968 = vld [vmem:[%s8] sm:$0xff]
    %v1970 = vlaneseq
    %v1971 = vshrl.u32 %v1970, 7
    %v1972 = vsub.s32 0, %v1971
    %v1973 = vrot.slane %v1968, %v1972
    %v1974 = vlaneseq
    %v1975 = vshrl.u32 %v1974, 7
    %v1976 = vsub.s32 1, %v1975
    %v1977 = vrot.slane %v1968, %v1976
    %v1978 = vlaneseq
    %v1979 = vshrl.u32 %v1978, 7
    %v1980 = vsub.s32 2, %v1979
    %v1981 = vrot.slane %v1968, %v1980
    %v1982 = vlaneseq
    %v1983 = vshrl.u32 %v1982, 7
    %v1984 = vsub.s32 3, %v1983
    %v1985 = vrot.slane %v1968, %v1984
    %v1986 = vlaneseq
    %v1987 = vshrl.u32 %v1986, 7
    %v1988 = vsub.s32 4, %v1987
    %v1989 = vrot.slane %v1968, %v1988
    %v1990 = vlaneseq
    %v1991 = vshrl.u32 %v1990, 7
    %v1992 = vsub.s32 5, %v1991
    %v1993 = vrot.slane %v1968, %v1992
    %v1994 = vlaneseq
    %v1995 = vshrl.u32 %v1994, 7
    %v1996 = vsub.s32 6, %v1995
    %v1997 = vrot.slane %v1968, %v1996
    %v1998 = vlaneseq
    %v1999 = vshrl.u32 %v1998, 7
    %v2000 = vsub.s32 7, %v1999
    %v2001 = vrot.slane %v1968, %v2000
    %v2010 = vadd.f32 %v1839, %v1973
    %v2011 = vadd.f32 %v1841, %v1977
    %v2012 = vadd.f32 %v1880, %v1981
    %v2013 = vadd.f32 %v1882, %v1985
    %v2014 = vadd.f32 %v1921, %v1989
    %v2015 = vadd.f32 %v1923, %v1993
    %v2016 = vadd.f32 %v1962, %v1997
    %v2017 = vadd.f32 %v1964, %v2001
    %v2018 = vmax.f32 %v2010, 0.0
    %v2019 = vmax.f32 %v2011, 0.0
    %v2020 = vmax.f32 %v2012, 0.0
    %v2021 = vmax.f32 %v2013, 0.0
    %v2022 = vmax.f32 %v2014, 0.0
    %v2023 = vmax.f32 %v2015, 0.0
    %v2024 = vmax.f32 %v2016, 0.0
    %v2025 = vmax.f32 %v2017, 0.0
    %v2026 = vpack.c.bf16 %v2018, %v2018
    %v2027 = vpack.c.bf16 %v2019, %v2019
    %v2028 = vpack.c.bf16 %v2020, %v2020
    %v2029 = vpack.c.bf16 %v2021, %v2021
    %v2030 = vpack.c.bf16 %v2022, %v2022
    %v2031 = vpack.c.bf16 %v2023, %v2023
    %v2032 = vpack.c.bf16 %v2024, %v2024
    %v2033 = vpack.c.bf16 %v2025, %v2025
    %v2034 = vld [vmem:[#allocation14] sm:$0xf]
    %v2035 = vld [vmem:[#allocation14 + $0x4] sm:$0xf]
    %v2036 = vld [vmem:[#allocation14 + $0x8] sm:$0xf]
    %v2037 = vld [vmem:[#allocation14 + $0xc] sm:$0xf]
    %v2038 = vld [vmem:[#allocation14 + $0x10] sm:$0xf]
    %v2039 = vld [vmem:[#allocation14 + $0x14] sm:$0xf]
    %v2040 = vld [vmem:[#allocation14 + $0x18] sm:$0xf]
    %v2041 = vld [vmem:[#allocation14 + $0x1c] sm:$0xf]
    %v2042 = vld [vmem:[#allocation14 + $0x20] sm:$0xf]
    %v2043 = vld [vmem:[#allocation14 + $0x24] sm:$0xf]
    %v2044 = vld [vmem:[#allocation14 + $0x28] sm:$0xf]
    %v2045 = vld [vmem:[#allocation14 + $0x2c] sm:$0xf]
    %v2046 = vld [vmem:[#allocation14 + $0x30] sm:$0xf]
    %v2047 = vld [vmem:[#allocation14 + $0x34] sm:$0xf]
    %v2048 = vld [vmem:[#allocation14 + $0x38] sm:$0xf]
    %v2049 = vld [vmem:[#allocation14 + $0x3c] sm:$0xf]
    %v2050 = vld [vmem:[#allocation14 + $0x40] sm:$0xf]
    %v2051 = vld [vmem:[#allocation14 + $0x44] sm:$0xf]
    %v2052 = vld [vmem:[#allocation14 + $0x48] sm:$0xf]
    %v2053 = vld [vmem:[#allocation14 + $0x4c] sm:$0xf]
    %v2054 = vld [vmem:[#allocation14 + $0x50] sm:$0xf]
    %v2055 = vld [vmem:[#allocation14 + $0x54] sm:$0xf]
    %v2056 = vld [vmem:[#allocation14 + $0x58] sm:$0xf]
    %v2057 = vld [vmem:[#allocation14 + $0x5c] sm:$0xf]
    %v2058 = vld [vmem:[#allocation14 + $0x60] sm:$0xf]
    %v2059 = vld [vmem:[#allocation14 + $0x64] sm:$0xf]
    %v2060 = vld [vmem:[#allocation14 + $0x68] sm:$0xf]
    %v2061 = vld [vmem:[#allocation14 + $0x6c] sm:$0xf]
    %v2062 = vld [vmem:[#allocation14 + $0x70] sm:$0xf]
    %v2063 = vld [vmem:[#allocation14 + $0x74] sm:$0xf]
    %v2064 = vld [vmem:[#allocation14 + $0x78] sm:$0xf]
    %v2065 = vld [vmem:[#allocation14 + $0x7c] sm:$0xf]
    %v2066 = vld [vmem:[#allocation14 + $0x80] sm:$0xf]
    %v2067 = vld [vmem:[#allocation14 + $0x84] sm:$0xf]
    %v2068 = vld [vmem:[#allocation14 + $0x88] sm:$0xf]
    %v2069 = vld [vmem:[#allocation14 + $0x8c] sm:$0xf]
    %v2070 = vld [vmem:[#allocation14 + $0x90] sm:$0xf]
    %v2071 = vld [vmem:[#allocation14 + $0x94] sm:$0xf]
    %v2072 = vld [vmem:[#allocation14 + $0x98] sm:$0xf]
    %v2073 = vld [vmem:[#allocation14 + $0x9c] sm:$0xf]
    %v2074 = vld [vmem:[#allocation14 + $0xa0] sm:$0xf]
    %v2075 = vld [vmem:[#allocation14 + $0xa4] sm:$0xf]
    %v2076 = vld [vmem:[#allocation14 + $0xa8] sm:$0xf]
    %v2077 = vld [vmem:[#allocation14 + $0xac] sm:$0xf]
    %v2078 = vld [vmem:[#allocation14 + $0xb0] sm:$0xf]
    %v2079 = vld [vmem:[#allocation14 + $0xb4] sm:$0xf]
    %v2080 = vld [vmem:[#allocation14 + $0xb8] sm:$0xf]
    %v2081 = vld [vmem:[#allocation14 + $0xbc] sm:$0xf]
    %v2082 = vld [vmem:[#allocation14 + $0xc0] sm:$0xf]
    %v2083 = vld [vmem:[#allocation14 + $0xc4] sm:$0xf]
    %v2084 = vld [vmem:[#allocation14 + $0xc8] sm:$0xf]
    %v2085 = vld [vmem:[#allocation14 + $0xcc] sm:$0xf]
    %v2086 = vld [vmem:[#allocation14 + $0xd0] sm:$0xf]
    %v2087 = vld [vmem:[#allocation14 + $0xd4] sm:$0xf]
    %v2088 = vld [vmem:[#allocation14 + $0xd8] sm:$0xf]
    %v2089 = vld [vmem:[#allocation14 + $0xdc] sm:$0xf]
    %v2090 = vld [vmem:[#allocation14 + $0xe0] sm:$0xf]
    %v2091 = vld [vmem:[#allocation14 + $0xe4] sm:$0xf]
    %v2092 = vld [vmem:[#allocation14 + $0xe8] sm:$0xf]
    %v2093 = vld [vmem:[#allocation14 + $0xec] sm:$0xf]
    %v2094 = vld [vmem:[#allocation14 + $0xf0] sm:$0xf]
    %v2095 = vld [vmem:[#allocation14 + $0xf4] sm:$0xf]
    %v2096 = vld [vmem:[#allocation14 + $0xf8] sm:$0xf]
    %v2097 = vld [vmem:[#allocation14 + $0xfc] sm:$0xf]
    %v2098 = vld [vmem:[#allocation14 + $0x100] sm:$0xf]
    %v2099 = vld [vmem:[#allocation14 + $0x104] sm:$0xf]
    %v2100 = vld [vmem:[#allocation14 + $0x108] sm:$0xf]
    %v2101 = vld [vmem:[#allocation14 + $0x10c] sm:$0xf]
    %v2102 = vld [vmem:[#allocation14 + $0x110] sm:$0xf]
    %v2103 = vld [vmem:[#allocation14 + $0x114] sm:$0xf]
    %v2104 = vld [vmem:[#allocation14 + $0x118] sm:$0xf]
    %v2105 = vld [vmem:[#allocation14 + $0x11c] sm:$0xf]
    %v2106 = vld [vmem:[#allocation14 + $0x120] sm:$0xf]
    %v2107 = vld [vmem:[#allocation14 + $0x124] sm:$0xf]
    %v2108 = vld [vmem:[#allocation14 + $0x128] sm:$0xf]
    %v2109 = vld [vmem:[#allocation14 + $0x12c] sm:$0xf]
    %v2110 = vld [vmem:[#allocation14 + $0x130] sm:$0xf]
    %v2111 = vld [vmem:[#allocation14 + $0x134] sm:$0xf]
    %v2112 = vld [vmem:[#allocation14 + $0x138] sm:$0xf]
    %v2113 = vld [vmem:[#allocation14 + $0x13c] sm:$0xf]
    %v2114 = vld [vmem:[#allocation14 + $0x140] sm:$0xf]
    %v2115 = vld [vmem:[#allocation14 + $0x144] sm:$0xf]
    %v2116 = vld [vmem:[#allocation14 + $0x148] sm:$0xf]
    %v2117 = vld [vmem:[#allocation14 + $0x14c] sm:$0xf]
    %v2118 = vld [vmem:[#allocation14 + $0x150] sm:$0xf]
    %v2119 = vld [vmem:[#allocation14 + $0x154] sm:$0xf]
    %v2120 = vld [vmem:[#allocation14 + $0x158] sm:$0xf]
    %v2121 = vld [vmem:[#allocation14 + $0x15c] sm:$0xf]
    %v2122 = vld [vmem:[#allocation14 + $0x160] sm:$0xf]
    %v2123 = vld [vmem:[#allocation14 + $0x164] sm:$0xf]
    %v2124 = vld [vmem:[#allocation14 + $0x168] sm:$0xf]
    %v2125 = vld [vmem:[#allocation14 + $0x16c] sm:$0xf]
    %v2126 = vld [vmem:[#allocation14 + $0x170] sm:$0xf]
    %v2127 = vld [vmem:[#allocation14 + $0x174] sm:$0xf]
    %v2128 = vld [vmem:[#allocation14 + $0x178] sm:$0xf]
    %v2129 = vld [vmem:[#allocation14 + $0x17c] sm:$0xf]
    %v2130 = vld [vmem:[#allocation14 + $0x180] sm:$0xf]
    %v2131 = vld [vmem:[#allocation14 + $0x184] sm:$0xf]
    %v2132 = vld [vmem:[#allocation14 + $0x188] sm:$0xf]
    %v2133 = vld [vmem:[#allocation14 + $0x18c] sm:$0xf]
    %v2134 = vld [vmem:[#allocation14 + $0x190] sm:$0xf]
    %v2135 = vld [vmem:[#allocation14 + $0x194] sm:$0xf]
    %v2136 = vld [vmem:[#allocation14 + $0x198] sm:$0xf]
    %v2137 = vld [vmem:[#allocation14 + $0x19c] sm:$0xf]
    %v2138 = vld [vmem:[#allocation14 + $0x1a0] sm:$0xf]
    %v2139 = vld [vmem:[#allocation14 + $0x1a4] sm:$0xf]
    %v2140 = vld [vmem:[#allocation14 + $0x1a8] sm:$0xf]
    %v2141 = vld [vmem:[#allocation14 + $0x1ac] sm:$0xf]
    %v2142 = vld [vmem:[#allocation14 + $0x1b0] sm:$0xf]
    %v2143 = vld [vmem:[#allocation14 + $0x1b4] sm:$0xf]
    %v2144 = vld [vmem:[#allocation14 + $0x1b8] sm:$0xf]
    %v2145 = vld [vmem:[#allocation14 + $0x1bc] sm:$0xf]
    %v2146 = vld [vmem:[#allocation14 + $0x1c0] sm:$0xf]
    %v2147 = vld [vmem:[#allocation14 + $0x1c4] sm:$0xf]
    %v2148 = vld [vmem:[#allocation14 + $0x1c8] sm:$0xf]
    %v2149 = vld [vmem:[#allocation14 + $0x1cc] sm:$0xf]
    %v2150 = vld [vmem:[#allocation14 + $0x1d0] sm:$0xf]
    %v2151 = vld [vmem:[#allocation14 + $0x1d4] sm:$0xf]
    %v2152 = vld [vmem:[#allocation14 + $0x1d8] sm:$0xf]
    %v2153 = vld [vmem:[#allocation14 + $0x1dc] sm:$0xf]
    %v2154 = vld [vmem:[#allocation14 + $0x1e0] sm:$0xf]
    %v2155 = vld [vmem:[#allocation14 + $0x1e4] sm:$0xf]
    %v2156 = vld [vmem:[#allocation14 + $0x1e8] sm:$0xf]
    %v2157 = vld [vmem:[#allocation14 + $0x1ec] sm:$0xf]
    %v2158 = vld [vmem:[#allocation14 + $0x1f0] sm:$0xf]
    %v2159 = vld [vmem:[#allocation14 + $0x1f4] sm:$0xf]
    %v2160 = vld [vmem:[#allocation14 + $0x1f8] sm:$0xf]
    %v2161 = vld [vmem:[#allocation14 + $0x1fc] sm:$0xf]
    %v2162 = vld [vmem:[%s10] sm:$0x1]
    %v2164 = vlaneseq
    %v2165 = vshrl.u32 %v2164, 7
    %v2166 = vsub.s32 0, %v2165
    %v2167 = vrot.slane %v2162, %v2166
    %v2297 = vunpack.c.l.b16 %v2034
    %v2298 = vunpack.c.l.b16 %v2035
    %v2299 = vunpack.c.l.b16 %v2036
    %v2300 = vunpack.c.l.b16 %v2037
    %v2301 = vunpack.c.l.b16 %v2038
    %v2302 = vunpack.c.l.b16 %v2039
    %v2303 = vunpack.c.l.b16 %v2040
    %v2304 = vunpack.c.l.b16 %v2041
    %v2305 = vunpack.c.l.b16 %v2042
    %v2306 = vunpack.c.l.b16 %v2043
    %v2307 = vunpack.c.l.b16 %v2044
    %v2308 = vunpack.c.l.b16 %v2045
    %v2309 = vunpack.c.l.b16 %v2046
    %v2310 = vunpack.c.l.b16 %v2047
    %v2311 = vunpack.c.l.b16 %v2048
    %v2312 = vunpack.c.l.b16 %v2049
    %v2313 = vunpack.c.l.b16 %v2050
    %v2314 = vunpack.c.l.b16 %v2051
    %v2315 = vunpack.c.l.b16 %v2052
    %v2316 = vunpack.c.l.b16 %v2053
    %v2317 = vunpack.c.l.b16 %v2054
    %v2318 = vunpack.c.l.b16 %v2055
    %v2319 = vunpack.c.l.b16 %v2056
    %v2320 = vunpack.c.l.b16 %v2057
    %v2321 = vunpack.c.l.b16 %v2058
    %v2322 = vunpack.c.l.b16 %v2059
    %v2323 = vunpack.c.l.b16 %v2060
    %v2324 = vunpack.c.l.b16 %v2061
    %v2325 = vunpack.c.l.b16 %v2062
    %v2326 = vunpack.c.l.b16 %v2063
    %v2327 = vunpack.c.l.b16 %v2064
    %v2328 = vunpack.c.l.b16 %v2065
    %v2329 = vunpack.c.l.b16 %v2066
    %v2330 = vunpack.c.l.b16 %v2067
    %v2331 = vunpack.c.l.b16 %v2068
    %v2332 = vunpack.c.l.b16 %v2069
    %v2333 = vunpack.c.l.b16 %v2070
    %v2334 = vunpack.c.l.b16 %v2071
    %v2335 = vunpack.c.l.b16 %v2072
    %v2336 = vunpack.c.l.b16 %v2073
    %v2337 = vunpack.c.l.b16 %v2074
    %v2338 = vunpack.c.l.b16 %v2075
    %v2339 = vunpack.c.l.b16 %v2076
    %v2340 = vunpack.c.l.b16 %v2077
    %v2341 = vunpack.c.l.b16 %v2078
    %v2342 = vunpack.c.l.b16 %v2079
    %v2343 = vunpack.c.l.b16 %v2080
    %v2344 = vunpack.c.l.b16 %v2081
    %v2345 = vunpack.c.l.b16 %v2082
    %v2346 = vunpack.c.l.b16 %v2083
    %v2347 = vunpack.c.l.b16 %v2084
    %v2348 = vunpack.c.l.b16 %v2085
    %v2349 = vunpack.c.l.b16 %v2086
    %v2350 = vunpack.c.l.b16 %v2087
    %v2351 = vunpack.c.l.b16 %v2088
    %v2352 = vunpack.c.l.b16 %v2089
    %v2353 = vunpack.c.l.b16 %v2090
    %v2354 = vunpack.c.l.b16 %v2091
    %v2355 = vunpack.c.l.b16 %v2092
    %v2356 = vunpack.c.l.b16 %v2093
    %v2357 = vunpack.c.l.b16 %v2094
    %v2358 = vunpack.c.l.b16 %v2095
    %v2359 = vunpack.c.l.b16 %v2096
    %v2360 = vunpack.c.l.b16 %v2097
    %v2361 = vunpack.c.l.b16 %v2098
    %v2362 = vunpack.c.l.b16 %v2099
    %v2363 = vunpack.c.l.b16 %v2100
    %v2364 = vunpack.c.l.b16 %v2101
    %v2365 = vunpack.c.l.b16 %v2102
    %v2366 = vunpack.c.l.b16 %v2103
    %v2367 = vunpack.c.l.b16 %v2104
    %v2368 = vunpack.c.l.b16 %v2105
    %v2369 = vunpack.c.l.b16 %v2106
    %v2370 = vunpack.c.l.b16 %v2107
    %v2371 = vunpack.c.l.b16 %v2108
    %v2372 = vunpack.c.l.b16 %v2109
    %v2373 = vunpack.c.l.b16 %v2110
    %v2374 = vunpack.c.l.b16 %v2111
    %v2375 = vunpack.c.l.b16 %v2112
    %v2376 = vunpack.c.l.b16 %v2113
    %v2377 = vunpack.c.l.b16 %v2114
    %v2378 = vunpack.c.l.b16 %v2115
    %v2379 = vunpack.c.l.b16 %v2116
    %v2380 = vunpack.c.l.b16 %v2117
    %v2381 = vunpack.c.l.b16 %v2118
    %v2382 = vunpack.c.l.b16 %v2119
    %v2383 = vunpack.c.l.b16 %v2120
    %v2384 = vunpack.c.l.b16 %v2121
    %v2385 = vunpack.c.l.b16 %v2122
    %v2386 = vunpack.c.l.b16 %v2123
    %v2387 = vunpack.c.l.b16 %v2124
    %v2388 = vunpack.c.l.b16 %v2125
    %v2389 = vunpack.c.l.b16 %v2126
    %v2390 = vunpack.c.l.b16 %v2127
    %v2391 = vunpack.c.l.b16 %v2128
    %v2392 = vunpack.c.l.b16 %v2129
    %v2393 = vunpack.c.l.b16 %v2130
    %v2394 = vunpack.c.l.b16 %v2131
    %v2395 = vunpack.c.l.b16 %v2132
    %v2396 = vunpack.c.l.b16 %v2133
    %v2397 = vunpack.c.l.b16 %v2134
    %v2398 = vunpack.c.l.b16 %v2135
    %v2399 = vunpack.c.l.b16 %v2136
    %v2400 = vunpack.c.l.b16 %v2137
    %v2401 = vunpack.c.l.b16 %v2138
    %v2402 = vunpack.c.l.b16 %v2139
    %v2403 = vunpack.c.l.b16 %v2140
    %v2404 = vunpack.c.l.b16 %v2141
    %v2405 = vunpack.c.l.b16 %v2142
    %v2406 = vunpack.c.l.b16 %v2143
    %v2407 = vunpack.c.l.b16 %v2144
    %v2408 = vunpack.c.l.b16 %v2145
    %v2409 = vunpack.c.l.b16 %v2146
    %v2410 = vunpack.c.l.b16 %v2147
    %v2411 = vunpack.c.l.b16 %v2148
    %v2412 = vunpack.c.l.b16 %v2149
    %v2413 = vunpack.c.l.b16 %v2150
    %v2414 = vunpack.c.l.b16 %v2151
    %v2415 = vunpack.c.l.b16 %v2152
    %v2416 = vunpack.c.l.b16 %v2153
    %v2417 = vunpack.c.l.b16 %v2154
    %v2418 = vunpack.c.l.b16 %v2155
    %v2419 = vunpack.c.l.b16 %v2156
    %v2420 = vunpack.c.l.b16 %v2157
    %v2421 = vunpack.c.l.b16 %v2158
    %v2422 = vunpack.c.l.b16 %v2159
    %v2423 = vunpack.c.l.b16 %v2160
    %v2424 = vunpack.c.l.b16 %v2161
    %v2425 = vpack.c.b16 %v2298, %v2297
    %v2426 = vpack.c.b16 %v2300, %v2299
    %v2427 = vpack.c.b16 %v2302, %v2301
    %v2428 = vpack.c.b16 %v2304, %v2303
    %v2429 = vpack.c.b16 %v2306, %v2305
    %v2430 = vpack.c.b16 %v2308, %v2307
    %v2431 = vpack.c.b16 %v2310, %v2309
    %v2432 = vpack.c.b16 %v2312, %v2311
    %v2433 = vpack.c.b16 %v2314, %v2313
    %v2434 = vpack.c.b16 %v2316, %v2315
    %v2435 = vpack.c.b16 %v2318, %v2317
    %v2436 = vpack.c.b16 %v2320, %v2319
    %v2437 = vpack.c.b16 %v2322, %v2321
    %v2438 = vpack.c.b16 %v2324, %v2323
    %v2439 = vpack.c.b16 %v2326, %v2325
    %v2440 = vpack.c.b16 %v2328, %v2327
    %v2441 = vpack.c.b16 %v2330, %v2329
    %v2442 = vpack.c.b16 %v2332, %v2331
    %v2443 = vpack.c.b16 %v2334, %v2333
    %v2444 = vpack.c.b16 %v2336, %v2335
    %v2445 = vpack.c.b16 %v2338, %v2337
    %v2446 = vpack.c.b16 %v2340, %v2339
    %v2447 = vpack.c.b16 %v2342, %v2341
    %v2448 = vpack.c.b16 %v2344, %v2343
    %v2449 = vpack.c.b16 %v2346, %v2345
    %v2450 = vpack.c.b16 %v2348, %v2347
    %v2451 = vpack.c.b16 %v2350, %v2349
    %v2452 = vpack.c.b16 %v2352, %v2351
    %v2453 = vpack.c.b16 %v2354, %v2353
    %v2454 = vpack.c.b16 %v2356, %v2355
    %v2455 = vpack.c.b16 %v2358, %v2357
    %v2456 = vpack.c.b16 %v2360, %v2359
    %v2457 = vpack.c.b16 %v2362, %v2361
    %v2458 = vpack.c.b16 %v2364, %v2363
    %v2459 = vpack.c.b16 %v2366, %v2365
    %v2460 = vpack.c.b16 %v2368, %v2367
    %v2461 = vpack.c.b16 %v2370, %v2369
    %v2462 = vpack.c.b16 %v2372, %v2371
    %v2463 = vpack.c.b16 %v2374, %v2373
    %v2464 = vpack.c.b16 %v2376, %v2375
    %v2465 = vpack.c.b16 %v2378, %v2377
    %v2466 = vpack.c.b16 %v2380, %v2379
    %v2467 = vpack.c.b16 %v2382, %v2381
    %v2468 = vpack.c.b16 %v2384, %v2383
    %v2469 = vpack.c.b16 %v2386, %v2385
    %v2470 = vpack.c.b16 %v2388, %v2387
    %v2471 = vpack.c.b16 %v2390, %v2389
    %v2472 = vpack.c.b16 %v2392, %v2391
    %v2473 = vpack.c.b16 %v2394, %v2393
    %v2474 = vpack.c.b16 %v2396, %v2395
    %v2475 = vpack.c.b16 %v2398, %v2397
    %v2476 = vpack.c.b16 %v2400, %v2399
    %v2477 = vpack.c.b16 %v2402, %v2401
    %v2478 = vpack.c.b16 %v2404, %v2403
    %v2479 = vpack.c.b16 %v2406, %v2405
    %v2480 = vpack.c.b16 %v2408, %v2407
    %v2481 = vpack.c.b16 %v2410, %v2409
    %v2482 = vpack.c.b16 %v2412, %v2411
    %v2483 = vpack.c.b16 %v2414, %v2413
    %v2484 = vpack.c.b16 %v2416, %v2415
    %v2485 = vpack.c.b16 %v2418, %v2417
    %v2486 = vpack.c.b16 %v2420, %v2419
    %v2487 = vpack.c.b16 %v2422, %v2421
    %v2488 = vpack.c.b16 %v2424, %v2423
    %2553 = vmatprep.subr.bf16.mxu0 0
    %2554 = vmatpush1.bf16.msra.mxu0 %v2425
    %2555 = vmatprep.subr.bf16.mxu0 0
    %2556 = vmatpush1.bf16.msra.mxu0 %v2426
    %2557 = vmatprep.subr.bf16.mxu0 0
    %2558 = vmatpush1.bf16.msra.mxu0 %v2427
    %2559 = vmatprep.subr.bf16.mxu0 0
    %2560 = vmatpush1.bf16.msra.mxu0 %v2428
    %2561 = vmatprep.subr.bf16.mxu0 0
    %2562 = vmatpush1.bf16.msra.mxu0 %v2429
    %2563 = vmatprep.subr.bf16.mxu0 0
    %2564 = vmatpush1.bf16.msra.mxu0 %v2430
    %2565 = vmatprep.subr.bf16.mxu0 0
    %2566 = vmatpush1.bf16.msra.mxu0 %v2431
    %2567 = vmatprep.subr.bf16.mxu0 0
    %2568 = vmatpush1.bf16.msra.mxu0 %v2432
    %2569 = vmatprep.subr.bf16.mxu0 0
    %2570 = vmatpush1.bf16.msra.mxu0 %v2433
    %2571 = vmatprep.subr.bf16.mxu0 0
    %2572 = vmatpush1.bf16.msra.mxu0 %v2434
    %2573 = vmatprep.subr.bf16.mxu0 0
    %2574 = vmatpush1.bf16.msra.mxu0 %v2435
    %2575 = vmatprep.subr.bf16.mxu0 0
    %2576 = vmatpush1.bf16.msra.mxu0 %v2436
    %2577 = vmatprep.subr.bf16.mxu0 0
    %2578 = vmatpush1.bf16.msra.mxu0 %v2437
    %2579 = vmatprep.subr.bf16.mxu0 0
    %2580 = vmatpush1.bf16.msra.mxu0 %v2438
    %2581 = vmatprep.subr.bf16.mxu0 0
    %2582 = vmatpush1.bf16.msra.mxu0 %v2439
    %2583 = vmatprep.subr.bf16.mxu0 0
    %2584 = vmatpush1.bf16.msra.mxu0 %v2440
    %2585 = vmatprep.mubr.bf16.mxu0 %v2027
    %2586 = vmatmul.mubr.bf16.gmra.mrb[0].mxu0 %v2026
    %v2587 = vpop.f32.mrb[0].mxu0
    %v2588 = vadd.f32 %v2167, %v2587
    %v2589 = vpop.f32.mrb[0].mxu0
    %v2590 = vpop.f32.mrb[0].mxu0
    %v2591 = vpop.f32.mrb[0].mxu0
    %2592 = vdwg.mxu0
    %2593 = vmatprep.subr.bf16.mxu0 0
    %2594 = vmatpush1.bf16.msra.mxu0 %v2441
    %2595 = vmatprep.subr.bf16.mxu0 0
    %2596 = vmatpush1.bf16.msra.mxu0 %v2442
    %2597 = vmatprep.subr.bf16.mxu0 0
    %2598 = vmatpush1.bf16.msra.mxu0 %v2443
    %2599 = vmatprep.subr.bf16.mxu0 0
    %2600 = vmatpush1.bf16.msra.mxu0 %v2444
    %2601 = vmatprep.subr.bf16.mxu0 0
    %2602 = vmatpush1.bf16.msra.mxu0 %v2445
    %2603 = vmatprep.subr.bf16.mxu0 0
    %2604 = vmatpush1.bf16.msra.mxu0 %v2446
    %2605 = vmatprep.subr.bf16.mxu0 0
    %2606 = vmatpush1.bf16.msra.mxu0 %v2447
    %2607 = vmatprep.subr.bf16.mxu0 0
    %2608 = vmatpush1.bf16.msra.mxu0 %v2448
    %2609 = vmatprep.subr.bf16.mxu0 0
    %2610 = vmatpush1.bf16.msra.mxu0 %v2449
    %2611 = vmatprep.subr.bf16.mxu0 0
    %2612 = vmatpush1.bf16.msra.mxu0 %v2450
    %2613 = vmatprep.subr.bf16.mxu0 0
    %2614 = vmatpush1.bf16.msra.mxu0 %v2451
    %2615 = vmatprep.subr.bf16.mxu0 0
    %2616 = vmatpush1.bf16.msra.mxu0 %v2452
    %2617 = vmatprep.subr.bf16.mxu0 0
    %2618 = vmatpush1.bf16.msra.mxu0 %v2453
    %2619 = vmatprep.subr.bf16.mxu0 0
    %2620 = vmatpush1.bf16.msra.mxu0 %v2454
    %2621 = vmatprep.subr.bf16.mxu0 0
    %2622 = vmatpush1.bf16.msra.mxu0 %v2455
    %2623 = vmatprep.subr.bf16.mxu0 0
    %2624 = vmatpush1.bf16.msra.mxu0 %v2456
    %2625 = vmatprep.mubr.bf16.mxu0 %v2029
    %2626 = vmatmul.mubr.bf16.gmra.mrb[0].mxu0 %v2028
    %v2627 = vpop.f32.mrb[0].mxu0
    %v2628 = vadd.f32 %v2588, %v2627
    %v2629 = vpop.f32.mrb[0].mxu0
    %v2630 = vpop.f32.mrb[0].mxu0
    %v2631 = vpop.f32.mrb[0].mxu0
    %2632 = vdwg.mxu0
    %2633 = vmatprep.subr.bf16.mxu0 0
    %2634 = vmatpush1.bf16.msra.mxu0 %v2457
    %2635 = vmatprep.subr.bf16.mxu0 0
    %2636 = vmatpush1.bf16.msra.mxu0 %v2458
    %2637 = vmatprep.subr.bf16.mxu0 0
    %2638 = vmatpush1.bf16.msra.mxu0 %v2459
    %2639 = vmatprep.subr.bf16.mxu0 0
    %2640 = vmatpush1.bf16.msra.mxu0 %v2460
    %2641 = vmatprep.subr.bf16.mxu0 0
    %2642 = vmatpush1.bf16.msra.mxu0 %v2461
    %2643 = vmatprep.subr.bf16.mxu0 0
    %2644 = vmatpush1.bf16.msra.mxu0 %v2462
    %2645 = vmatprep.subr.bf16.mxu0 0
    %2646 = vmatpush1.bf16.msra.mxu0 %v2463
    %2647 = vmatprep.subr.bf16.mxu0 0
    %2648 = vmatpush1.bf16.msra.mxu0 %v2464
    %2649 = vmatprep.subr.bf16.mxu0 0
    %2650 = vmatpush1.bf16.msra.mxu0 %v2465
    %2651 = vmatprep.subr.bf16.mxu0 0
    %2652 = vmatpush1.bf16.msra.mxu0 %v2466
    %2653 = vmatprep.subr.bf16.mxu0 0
    %2654 = vmatpush1.bf16.msra.mxu0 %v2467
    %2655 = vmatprep.subr.bf16.mxu0 0
    %2656 = vmatpush1.bf16.msra.mxu0 %v2468
    %2657 = vmatprep.subr.bf16.mxu0 0
    %2658 = vmatpush1.bf16.msra.mxu0 %v2469
    %2659 = vmatprep.subr.bf16.mxu0 0
    %2660 = vmatpush1.bf16.msra.mxu0 %v2470
    %2661 = vmatprep.subr.bf16.mxu0 0
    %2662 = vmatpush1.bf16.msra.mxu0 %v2471
    %2663 = vmatprep.subr.bf16.mxu0 0
    %2664 = vmatpush1.bf16.msra.mxu0 %v2472
    %2665 = vmatprep.mubr.bf16.mxu0 %v2031
    %2666 = vmatmul.mubr.bf16.gmra.mrb[0].mxu0 %v2030
    %v2667 = vpop.f32.mrb[0].mxu0
    %v2668 = vadd.f32 %v2628, %v2667
    %v2669 = vpop.f32.mrb[0].mxu0
    %v2670 = vpop.f32.mrb[0].mxu0
    %v2671 = vpop.f32.mrb[0].mxu0
    %2672 = vdwg.mxu0
    %2673 = vmatprep.subr.bf16.mxu0 0
    %2674 = vmatpush1.bf16.msra.mxu0 %v2473
    %2675 = vmatprep.subr.bf16.mxu0 0
    %2676 = vmatpush1.bf16.msra.mxu0 %v2474
    %2677 = vmatprep.subr.bf16.mxu0 0
    %2678 = vmatpush1.bf16.msra.mxu0 %v2475
    %2679 = vmatprep.subr.bf16.mxu0 0
    %2680 = vmatpush1.bf16.msra.mxu0 %v2476
    %2681 = vmatprep.subr.bf16.mxu0 0
    %2682 = vmatpush1.bf16.msra.mxu0 %v2477
    %2683 = vmatprep.subr.bf16.mxu0 0
    %2684 = vmatpush1.bf16.msra.mxu0 %v2478
    %2685 = vmatprep.subr.bf16.mxu0 0
    %2686 = vmatpush1.bf16.msra.mxu0 %v2479
    %2687 = vmatprep.subr.bf16.mxu0 0
    %2688 = vmatpush1.bf16.msra.mxu0 %v2480
    %2689 = vmatprep.subr.bf16.mxu0 0
    %2690 = vmatpush1.bf16.msra.mxu0 %v2481
    %2691 = vmatprep.subr.bf16.mxu0 0
    %2692 = vmatpush1.bf16.msra.mxu0 %v2482
    %2693 = vmatprep.subr.bf16.mxu0 0
    %2694 = vmatpush1.bf16.msra.mxu0 %v2483
    %2695 = vmatprep.subr.bf16.mxu0 0
    %2696 = vmatpush1.bf16.msra.mxu0 %v2484
    %2697 = vmatprep.subr.bf16.mxu0 0
    %2698 = vmatpush1.bf16.msra.mxu0 %v2485
    %2699 = vmatprep.subr.bf16.mxu0 0
    %2700 = vmatpush1.bf16.msra.mxu0 %v2486
    %2701 = vmatprep.subr.bf16.mxu0 0
    %2702 = vmatpush1.bf16.msra.mxu0 %v2487
    %2703 = vmatprep.subr.bf16.mxu0 0
    %2704 = vmatpush1.bf16.msra.mxu0 %v2488
    %2705 = vmatprep.mubr.bf16.mxu0 %v2033
    %2706 = vmatmul.mubr.bf16.gmra.mrb[0].mxu0 %v2032
    %v2707 = vpop.f32.mrb[0].mxu0
    %v2708 = vadd.f32 %v2668, %v2707
    %v2709 = vpop.f32.mrb[0].mxu0
    %v2710 = vpop.f32.mrb[0].mxu0
    %v2711 = vpop.f32.mrb[0].mxu0
    %2712 = vdwg.mxu0
    %2713 = vst [vmem:[#allocation15] sm:$0xff] %v2708
    // Predicated region
    $region74: #{tpu_custom_call.1} parent=1 // pred_check
      _
    $region75: #{tpu_custom_call.1} parent=1 // pred_check_branch
      %2715 = sbr.rel (0) target = $region77
    $region76: #{tpu_custom_call.1} parent=1 // pred_region
      %s2717 = ssub.s32 128, 128
      %2718 = vsyncadd [#allocation5], %s2717
      %s2720 = sshll.u32 [#allocation15], 4
      %s2721 = int_to_ptr.vmem [resolvable:$true] %s2720
      %2723 = dma.vmem_to_hbm [thread:$0]  %s2721, 128, %s11, [#allocation5]
    $region77: #{tpu_custom_call.1} parent=1 // pred_fallthru
      _
    // Predicated region
    $region78: #{tpu_custom_call.1} parent=1 // pred_check
      _
    $region79: #{tpu_custom_call.1} parent=1 // pred_check_branch
      %2725 = sbr.rel (0) target = $region81
    $region80: #{tpu_custom_call.1} parent=1 // pred_region
      %2726 = dma.done [#allocation5], 128
    $region81: #{tpu_custom_call.1} parent=1 // pred_fallthru
      _
    %2727 = vsyncpa [#allocation4], 1
    %2728 = vsyncpa [#allocation7], 1
    %2729 = vsyncpa [#allocation10], 1
    %2730 = vsyncpa [#allocation13], 1
    %2731 = vsyncpa [#allocation5], 1

</llo_original>
